<compile_context>
chip_gen: v7x
topology: tpu7x:2x2x1
jax: 0.10.0
libtpu: 0.0.40
codegen_flags: <defaults>
</compile_context>

<pallas_src>
import functools
import math

import numpy as np
import jax
import jax.numpy as jnp
from jax.experimental import pallas as pl
from jax.experimental.pallas import tpu as pltpu

W1 = 0.3
W2 = 0.01
EPS = 1e-8


def _round_up(x, m):
    return (x + m - 1) // m * m


def _make_taps(dilations):
    """(dy, dx) offsets of the dilated 8-neighbourhoods, PyTorch kernel order."""
    taps = []
    for d in dilations:
        for dy in (-d, 0, d):
            for dx in ((-d, d) if dy == 0 else (-d, 0, d)):
                taps.append((dy, dx))
    return tuple(taps)


def _pos_softmax(taps):
    """softmax over K of the constant positional affinity; order matches `taps`."""
    pos = np.array([math.hypot(dy, dx) for dy, dx in taps], np.float32)
    std = pos.std(ddof=1)
    a = -((pos / (std + EPS) / W1) ** 2)
    a = a - a.max()
    e = np.exp(a)
    return (e / e.sum()).astype(np.float32)


@functools.lru_cache(maxsize=None)
def _roll_sign():
    """Probe pltpu.roll once: +1 if it matches jnp.roll, -1 if opposite,
    0 -> use the (slower but correct) jnp.roll fallback."""
    shp = (2, 8, 128)
    base = np.arange(np.prod(shp), dtype=np.float32).reshape(shp)

    def probe(x_ref, o_ref):
        o_ref[...] = pltpu.roll(pltpu.roll(x_ref[...], 1, 2), 1, 1)

    try:
        r = np.asarray(
            pl.pallas_call(probe, out_shape=jax.ShapeDtypeStruct(shp, jnp.float32))(
                jnp.asarray(base)))
    except Exception:
        print("PAR: pltpu.roll probe failed; falling back to jnp.roll shifts "
              "(correct but slower).")
        return 0
    if np.array_equal(r, np.roll(np.roll(base, 1, axis=2), 1, axis=1)):
        return 1
    if np.array_equal(r, np.roll(np.roll(base, -1, axis=2), -1, axis=1)):
        return -1
    print("PAR: pltpu.roll convention not recognised; falling back to jnp.roll "
          "(correct but slower).")
    return 0


@functools.lru_cache(maxsize=None)
def _vmem_budget_bytes():
    """~3/4 of per-core VMEM (≈96 MiB on 128 MiB v5e/v6e, ≈48 MiB on 64 MiB v7x);
    conservative 48 MiB fallback when the capacity query is unavailable."""
    try:
        cap = int(getattr(pltpu.get_tpu_info(), "vmem_capacity_bytes"))
        if cap <= 0:
            raise ValueError("bad vmem capacity")
    except Exception:
        cap = 64 * 2 ** 20
    return (cap * 3) // 4


def _par_kernel(imgs_ref, masks_ref, out_ref, aff_ref, *opt_scratch, taps,
                pos_w2, num_iter, h, w, roll_sign, use_stack):
    c, hp, wp = imgs_ref.shape
    cm = masks_ref.shape[0]
    K = len(taps)
    stack_ref = opt_scratch[0] if use_stack else None

    # ---- replicate-shift machinery ------------------------------------------
    row_idx = jax.lax.broadcasted_iota(jnp.int32, (hp, wp), 0)
    col_idx = jax.lax.broadcasted_iota(jnp.int32, (hp, wp), 1)
    edge2d = {
        (1, 1): row_idx >= (h - 1), (1, -1): row_idx < 1,
        (2, 1): col_idx >= (w - 1), (2, -1): col_idx < 1,
    }
    # Hoisted per-channel-count broadcasts: JAX does not CSE broadcast_in_dim,
    # so leaving the (hp,wp)->(nchan,hp,wp) broadcast inside jnp.where would
    # re-emit it on every one of the ~(2 + num_iter) * 20 unit steps.
    edge = {n: {key: jnp.broadcast_to(m2, (n, hp, wp)) for key, m2 in edge2d.items()}
            for n in {c, cm}}

    def step1(x, s, axis):
        # y[i] = x[clamp(i + s, 0, n_true - 1)] along `axis`, s in {-1, +1}.
        n = x.shape[axis]
        if roll_sign == 0:
            rolled = jnp.roll(x, -s, axis=axis)                 # fallback
        else:
            rolled = pltpu.roll(x, (-s * roll_sign) % n, axis)  # XLU rotate
        return jnp.where(edge[x.shape[0]][(axis, s)], x, rolled)

    by_dy = {}
    for k, (dy, dx) in enumerate(taps):
        by_dy.setdefault(dy, []).append((k, dx))

    def col_group(xr, items):
        # Chain column shifts per sign so |dx|=2 reuses the |dx|=1 intermediate.
        for k, dx in items:
            if dx == 0:
                yield k, xr
        for sgn in (-1, 1):
            chain = sorted(((k, dx) for k, dx in items if dx * sgn > 0),
                           key=lambda t: abs(t[1]))
            cur, off = xr, 0
            for k, dx in chain:
                while abs(off) < abs(dx):
                    cur = step1(cur, sgn, 2)
                    off += sgn
                yield k, cur

    def taps_of(x):
        """Stream (k, replicate-shifted x) over all K taps; row/column unit
        steps are chained across dilations (20 steps instead of 24 for (1,2))."""
        if 0 in by_dy:
            yield from col_group(x, by_dy[0])
        for sgn in (-1, 1):
            cur, off = x, 0
            for dy in sorted((d for d in by_dy if d * sgn > 0), key=abs):
                while abs(off) < abs(dy):
                    cur = step1(cur, sgn, 1)
                    off += sgn
                yield from col_group(cur, by_dy[dy])

    # ---- fused mean/variance pass (single image tap-stream) -----------------
    imgs = imgs_ref[...].astype(jnp.float32)                    # (c, hp, wp)
    s1 = None
    s2 = None
    for k, nb in taps_of(imgs):
        d = nb - imgs
        if use_stack:
            stack_ref[k] = d        # cache (nb - center); affinity pass re-reads it
        s1 = d if s1 is None else s1 + d
        s2 = d * d if s2 is None else s2 + d * d
    # Unbiased variance from center-shifted sums (cancellation-safe):
    #   var = (s2 - s1^2/K) / (K-1); clamp tiny negative fp residue.
    var = (jnp.maximum(s2 - s1 * s1 * jnp.float32(1.0 / K), jnp.float32(0.0))
           * jnp.float32(1.0 / (K - 1)))
    # 1/(std+eps)^2 == 1/(var + 2*eps*std + eps^2) ~= 1/(var + eps^2) (rel ~1e-8);
    # exact reciprocal kept (approx=True ~1e-3 would break the 1e-4 ref match).
    # Also folds 1/w1^2 and the channel mean.
    scale = pl.reciprocal(var + jnp.float32(EPS * EPS)) * jnp.float32(1.0 / (W1 * W1 * c))

    # ---- per-tap, channel-reduced affinity -> (K, hp, wp) scratch -----------
    if use_stack:
        for k in range(K):
            d = stack_ref[k]
            aff_ref[k] = -jnp.sum(d * d * scale, axis=0)
    else:
        for k, nb in taps_of(imgs):
            d = nb - imgs
            aff_ref[k] = -jnp.sum(d * d * scale, axis=0)

    # ---- softmax over taps, fully streamed (peak temps ~2 slabs, not ~3K) ---
    mx = aff_ref[0]
    for k in range(1, K):
        mx = jnp.maximum(mx, aff_ref[k])
    tot = None
    for k in range(K):
        e = jnp.exp(aff_ref[k] - mx)
        tot = e if tot is None else tot + e
    lse = mx + jnp.log(tot)
    # Recomputing exp in the write-back rides the otherwise-idle EUP slot and
    # avoids a second full (K, hp, wp) store pass; w2*softmax(pos_aff) is a
    # folded compile-time constant per tap.
    for k in range(K):
        aff_ref[k] = jnp.exp(aff_ref[k] - lse) + jnp.float32(pos_w2[k])

    # ---- iterative mask propagation, streamed over taps ---------------------
    m = masks_ref[...].astype(jnp.float32)                      # (cm, hp, wp)
    for _ in range(num_iter):
        acc = None
        for k, nb in taps_of(m):
            t = nb * aff_ref[k]
            acc = t if acc is None else acc + t
        m = acc
    out_ref[...] = m.astype(out_ref.dtype)


def par_forward(imgs, masks, dilations=(1, 2), num_iter=2):
    b, c, h, w = imgs.shape
    bm, cm, hm, wm = masks.shape
    assert (b, h, w) == (bm, hm, wm)

    taps = _make_taps(dilations)
    K = len(taps)
    pos_w2 = tuple(float(W2 * v) for v in _pos_softmax(taps))

    # Replicate-pad H to a multiple of 8 (sublanes) and W to a multiple of 128
    # (lanes); the kernel clamps neighbour shifts at the true (h, w) edge, so
    # padded rows/cols never influence valid outputs; they are sliced off.
    hp = _round_up(h, 8)
    wp = _round_up(w, 128)
    if (hp, wp) != (h, w):
        pad = ((0, 0), (0, 0), (0, hp - h), (0, wp - w))
        imgs_p = jnp.pad(imgs, pad, mode="edge")
        masks_p = jnp.pad(masks, pad, mode="edge")
    else:
        imgs_p, masks_p = imgs, masks

    slab = 4 * hp * wp
    budget = _vmem_budget_bytes()

    # Double-buffered in/out blocks + (K, hp, wp) affinity scratch + streamed
    # temporaries (sums, shift-chain caches, edge masks, softmax slabs).
    base = slab * (2 * (c + cm) + 2 * cm + K + 8 * max(c, cm) + 6)
    stack_bytes = slab * K * c
    # Cache the K shifted (nb - center) slabs only when they comfortably fit:
    # trades the affinity pass's XLU rotates for plain VMEM reads.
    use_stack = (base + stack_bytes) * 5 // 4 <= budget
    est = base + (stack_bytes if use_stack else 0)
    vmem_limit = int(min(budget, max(16 * 2 ** 20, (est * 5) // 4)))

    kernel = functools.partial(
        _par_kernel, taps=taps, pos_w2=pos_w2, num_iter=num_iter,
        h=h, w=w, roll_sign=_roll_sign(), use_stack=use_stack)

    scratch = [pltpu.VMEM((K, hp, wp), jnp.float32)]
    if use_stack:
        scratch.append(pltpu.VMEM((K, c, hp, wp), jnp.float32))

    out_p = pl.pallas_call(
        kernel,
        out_shape=jax.ShapeDtypeStruct((b, cm, hp, wp), masks.dtype),
        grid=(b,),
        in_specs=[
            pl.BlockSpec((pl.Squeezed(), c, hp, wp), lambda i: (i, 0, 0, 0)),
            pl.BlockSpec((pl.Squeezed(), cm, hp, wp), lambda i: (i, 0, 0, 0)),
        ],
        out_specs=pl.BlockSpec((pl.Squeezed(), cm, hp, wp), lambda i: (i, 0, 0, 0)),
        scratch_shapes=scratch,
        compiler_params=pltpu.CompilerParams(
            dimension_semantics=("parallel",),
            vmem_limit_bytes=vmem_limit,
        ),
    )(imgs_p, masks_p)
    return out_p[:, :, :h, :w]


# ---------------- pure-JAX reference (for correctness check) ----------------
def _neighbors_ref(x, taps):
    h, w = x.shape[-2], x.shape[-1]
    dmax = max(max(abs(dy), abs(dx)) for dy, dx in taps)
    xp = jnp.pad(x, ((0, 0), (0, 0), (dmax, dmax), (dmax, dmax)), mode="edge")
    outs = [xp[:, :, dmax + dy: dmax + dy + h, dmax + dx: dmax + dx + w]
            for dy, dx in taps]
    return jnp.stack(outs, axis=2)                              # (b, c, K, h, w)


def par_forward_ref(imgs, masks, dilations=(1, 2), num_iter=2):
    taps = _make_taps(dilations)
    nbr = _neighbors_ref(imgs, taps)
    diff = jnp.abs(nbr - imgs[:, :, None])
    std = jnp.std(nbr, axis=2, keepdims=True, ddof=1)
    aff = -((diff / (std + EPS) / W1) ** 2)
    aff = jnp.mean(aff, axis=1, keepdims=True)                  # (b, 1, K, h, w)
    pos = jnp.asarray(_pos_softmax(taps))
    aff = jax.nn.softmax(aff, axis=2) + W2 * pos[None, None, :, None, None]
    m = masks
    for _ in range(num_iter):
        m = jnp.sum(_neighbors_ref(m, taps) * aff, axis=2)
    return m


if __name__ == "__main__":
    key = jax.random.PRNGKey(0)
    k1, k2 = jax.random.split(key)
    b, c, cm, h, w = 2, 3, 4, 16, 16          # imgs: RGB-like; masks: 4 "classes"
    dilations = (1, 2)                        # K = 16 dilated neighbours
    num_iter = 2

    imgs = jax.random.normal(k1, (b, c, h, w), jnp.float32)
    masks = jax.nn.softmax(jax.random.normal(k2, (b, cm, h, w), jnp.float32), axis=1)

    out = jax.block_until_ready(par_forward(imgs, masks, dilations, num_iter))
    ref = par_forward_ref(imgs, masks, dilations, num_iter)

    assert out.shape == (b, cm, h, w)
    err = float(np.max(np.abs(np.asarray(out) - np.asarray(ref))))
    assert np.allclose(np.asarray(out), np.asarray(ref), atol=1e-4, rtol=1e-4), err
    print("KERNEL_OK")
</pallas_src>

<mosaic_0001>
module attributes {stable_mosaic.version = 11 : i64} {
  func.func @probe(%arg0: memref<2x8x128xf32, #tpu.memory_space<vmem>>, %arg1: memref<2x8x128xf32, #tpu.memory_space<vmem>>) attributes {dimension_semantics = [], scalar_prefetch = 0 : i64, scratch_operands = 0 : i64, tpu.core_type = #tpu.core_type<tc>} {
    %c0 = arith.constant 0 : index
    %c0_0 = arith.constant 0 : index
    %c0_1 = arith.constant 0 : index
    %0 = vector.load %arg0[%c0, %c0_0, %c0_1] : memref<2x8x128xf32, #tpu.memory_space<vmem>>, vector<2x8x128xf32>
    %c1_i32 = arith.constant 1 : i32
    %1 = tpu.dynamic_rotate %0 by %c1_i32 dim 2 : vector<2x8x128xf32>, i32 -> vector<2x8x128xf32>
    %c1_i32_2 = arith.constant 1 : i32
    %2 = tpu.dynamic_rotate %1 by %c1_i32_2 dim 1 : vector<2x8x128xf32>, i32 -> vector<2x8x128xf32>
    %c0_3 = arith.constant 0 : index
    %c0_4 = arith.constant 0 : index
    %c0_5 = arith.constant 0 : index
    %3 = vector.load %arg1[%c0_3, %c0_4, %c0_5] : memref<2x8x128xf32, #tpu.memory_space<vmem>>, vector<2x8x128xf32>
    tpu.vector_store %arg1[%c0_3, %c0_4, %c0_5], %2 {strides = array<i32>} : memref<2x8x128xf32, #tpu.memory_space<vmem>>, vector<2x8x128xf32>,
    return
  }
}

module attributes {stable_mosaic.version = 11 : i64} {
  func.func @_par_kernel(%arg0: i32, %arg1: memref<1x3x16x128xf32, #tpu.memory_space<vmem>>, %arg2: memref<1x4x16x128xf32, #tpu.memory_space<vmem>>, %arg3: memref<1x4x16x128xf32, #tpu.memory_space<vmem>>, %arg4: memref<16x16x128xf32, #tpu.memory_space<vmem>>, %arg5: memref<16x3x16x128xf32, #tpu.memory_space<vmem>>) attributes {dimension_semantics = [#tpu.dimension_semantics<parallel>], iteration_bounds = array<i64: 2>, scalar_prefetch = 0 : i64, scratch_operands = 2 : i64, tpu.core_type = #tpu.core_type<tc>, window_params = [{transform_indices = @transform_0, window_bounds = array<i64: 1, 3, 16, 128>}, {transform_indices = @transform_1, window_bounds = array<i64: 1, 4, 16, 128>}, {transform_indices = @transform_2, window_bounds = array<i64: 1, 4, 16, 128>}]} {
    %0 = tpu.iota {dimensions = array<i32: 0>} : vector<16x128xi32>
    %1 = tpu.iota {dimensions = array<i32: 1>} : vector<16x128xi32>
    %c15_i32 = arith.constant 15 : i32
    %2 = vector.broadcast %c15_i32 : i32 to vector<16x128xi32>
    %3 = arith.cmpi sge, %0, %2 : vector<16x128xi32>
    %c1_i32 = arith.constant 1 : i32
    %4 = vector.broadcast %c1_i32 : i32 to vector<16x128xi32>
    %5 = arith.cmpi slt, %0, %4 : vector<16x128xi32>
    %c15_i32_0 = arith.constant 15 : i32
    %6 = vector.broadcast %c15_i32_0 : i32 to vector<16x128xi32>
    %7 = arith.cmpi sge, %1, %6 : vector<16x128xi32>
    %c1_i32_1 = arith.constant 1 : i32
    %8 = vector.broadcast %c1_i32_1 : i32 to vector<16x128xi32>
    %9 = arith.cmpi slt, %1, %8 : vector<16x128xi32>
    %10 = vector.shape_cast %3 : vector<16x128xi1> to vector<1x16x128xi1>
    %11 = vector.broadcast %10 : vector<1x16x128xi1> to vector<3x16x128xi1>
    %12 = vector.shape_cast %5 : vector<16x128xi1> to vector<1x16x128xi1>
    %13 = vector.broadcast %12 : vector<1x16x128xi1> to vector<3x16x128xi1>
    %14 = vector.shape_cast %7 : vector<16x128xi1> to vector<1x16x128xi1>
    %15 = vector.broadcast %14 : vector<1x16x128xi1> to vector<3x16x128xi1>
    %16 = vector.shape_cast %9 : vector<16x128xi1> to vector<1x16x128xi1>
    %17 = vector.broadcast %16 : vector<1x16x128xi1> to vector<3x16x128xi1>
    %18 = vector.shape_cast %3 : vector<16x128xi1> to vector<1x16x128xi1>
    %19 = vector.broadcast %18 : vector<1x16x128xi1> to vector<4x16x128xi1>
    %20 = vector.shape_cast %5 : vector<16x128xi1> to vector<1x16x128xi1>
    %21 = vector.broadcast %20 : vector<1x16x128xi1> to vector<4x16x128xi1>
    %22 = vector.shape_cast %7 : vector<16x128xi1> to vector<1x16x128xi1>
    %23 = vector.broadcast %22 : vector<1x16x128xi1> to vector<4x16x128xi1>
    %24 = vector.shape_cast %9 : vector<16x128xi1> to vector<1x16x128xi1>
    %25 = vector.broadcast %24 : vector<1x16x128xi1> to vector<4x16x128xi1>
    %c0 = arith.constant 0 : index
    %c0_2 = arith.constant 0 : index
    %c0_3 = arith.constant 0 : index
    %c0_4 = arith.constant 0 : index
    %26 = vector.load %arg1[%c0, %c0_2, %c0_3, %c0_4] : memref<1x3x16x128xf32, #tpu.memory_space<vmem>>, vector<1x3x16x128xf32>
    %27 = vector.shape_cast %26 : vector<1x3x16x128xf32> to vector<3x16x128xf32>
    %28 = vector.extract_strided_slice %27 {offsets = [0, 0, 127], sizes = [3, 16, 1], strides = [1, 1, 1]} : vector<3x16x128xf32> to vector<3x16x1xf32>
    %29 = vector.extract_strided_slice %27 {offsets = [0, 0, 0], sizes = [3, 16, 127], strides = [1, 1, 1]} : vector<3x16x128xf32> to vector<3x16x127xf32>
    %30 = tpu.concatenate %28, %29 in 2 : vector<3x16x1xf32>, vector<3x16x127xf32> -> vector<3x16x128xf32>
    %31 = arith.select %17, %27, %30 : vector<3x16x128xi1>, vector<3x16x128xf32>
    %32 = arith.subf %31, %27 : vector<3x16x128xf32>
    %c3 = arith.constant 3 : index
    %c0_5 = arith.constant 0 : index
    %c0_6 = arith.constant 0 : index
    %c0_7 = arith.constant 0 : index
    %33 = vector.load %arg5[%c3, %c0_5, %c0_6, %c0_7] : memref<16x3x16x128xf32, #tpu.memory_space<vmem>>, vector<1x3x16x128xf32>
    %34 = vector.shape_cast %33 : vector<1x3x16x128xf32> to vector<3x16x128xf32>
    %35 = vector.shape_cast %32 : vector<3x16x128xf32> to vector<1x3x16x128xf32>
    tpu.vector_store %arg5[%c3, %c0_5, %c0_6, %c0_7], %35 {strides = array<i32>} : memref<16x3x16x128xf32, #tpu.memory_space<vmem>>, vector<1x3x16x128xf32>,
    %36 = arith.mulf %32, %32 : vector<3x16x128xf32>
    %37 = vector.extract_strided_slice %31 {offsets = [0, 0, 127], sizes = [3, 16, 1], strides = [1, 1, 1]} : vector<3x16x128xf32> to vector<3x16x1xf32>
    %38 = vector.extract_strided_slice %31 {offsets = [0, 0, 0], sizes = [3, 16, 127], strides = [1, 1, 1]} : vector<3x16x128xf32> to vector<3x16x127xf32>
    %39 = tpu.concatenate %37, %38 in 2 : vector<3x16x1xf32>, vector<3x16x127xf32> -> vector<3x16x128xf32>
    %40 = arith.select %17, %31, %39 : vector<3x16x128xi1>, vector<3x16x128xf32>
    %41 = arith.subf %40, %27 : vector<3x16x128xf32>
    %c11 = arith.constant 11 : index
    %c0_8 = arith.constant 0 : index
    %c0_9 = arith.constant 0 : index
    %c0_10 = arith.constant 0 : index
    %42 = vector.load %arg5[%c11, %c0_8, %c0_9, %c0_10] : memref<16x3x16x128xf32, #tpu.memory_space<vmem>>, vector<1x3x16x128xf32>
    %43 = vector.shape_cast %42 : vector<1x3x16x128xf32> to vector<3x16x128xf32>
    %44 = vector.shape_cast %41 : vector<3x16x128xf32> to vector<1x3x16x128xf32>
    tpu.vector_store %arg5[%c11, %c0_8, %c0_9, %c0_10], %44 {strides = array<i32>} : memref<16x3x16x128xf32, #tpu.memory_space<vmem>>, vector<1x3x16x128xf32>,
    %45 = arith.addf %32, %41 : vector<3x16x128xf32>
    %46 = arith.mulf %41, %41 : vector<3x16x128xf32>
    %47 = arith.addf %36, %46 : vector<3x16x128xf32>
    %48 = vector.extract_strided_slice %27 {offsets = [0, 0, 1], sizes = [3, 16, 127], strides = [1, 1, 1]} : vector<3x16x128xf32> to vector<3x16x127xf32>
    %49 = vector.extract_strided_slice %27 {offsets = [0, 0, 0], sizes = [3, 16, 1], strides = [1, 1, 1]} : vector<3x16x128xf32> to vector<3x16x1xf32>
    %50 = tpu.concatenate %48, %49 in 2 : vector<3x16x127xf32>, vector<3x16x1xf32> -> vector<3x16x128xf32>
    %51 = arith.select %15, %27, %50 : vector<3x16x128xi1>, vector<3x16x128xf32>
    %52 = arith.subf %51, %27 : vector<3x16x128xf32>
    %c4 = arith.constant 4 : index
    %c0_11 = arith.constant 0 : index
    %c0_12 = arith.constant 0 : index
    %c0_13 = arith.constant 0 : index
    %53 = vector.load %arg5[%c4, %c0_11, %c0_12, %c0_13] : memref<16x3x16x128xf32, #tpu.memory_space<vmem>>, vector<1x3x16x128xf32>
    %54 = vector.shape_cast %53 : vector<1x3x16x128xf32> to vector<3x16x128xf32>
    %55 = vector.shape_cast %52 : vector<3x16x128xf32> to vector<1x3x16x128xf32>
    tpu.vector_store %arg5[%c4, %c0_11, %c0_12, %c0_13], %55 {strides = array<i32>} : memref<16x3x16x128xf32, #tpu.memory_space<vmem>>, vector<1x3x16x128xf32>,
    %56 = arith.addf %45, %52 : vector<3x16x128xf32>
    %57 = arith.mulf %52, %52 : vector<3x16x128xf32>
    %58 = arith.addf %47, %57 : vector<3x16x128xf32>
    %59 = vector.extract_strided_slice %51 {offsets = [0, 0, 1], sizes = [3, 16, 127], strides = [1, 1, 1]} : vector<3x16x128xf32> to vector<3x16x127xf32>
    %60 = vector.extract_strided_slice %51 {offsets = [0, 0, 0], sizes = [3, 16, 1], strides = [1, 1, 1]} : vector<3x16x128xf32> to vector<3x16x1xf32>
    %61 = tpu.concatenate %59, %60 in 2 : vector<3x16x127xf32>, vector<3x16x1xf32> -> vector<3x16x128xf32>
    %62 = arith.select %15, %51, %61 : vector<3x16x128xi1>, vector<3x16x128xf32>
    %63 = arith.subf %62, %27 : vector<3x16x128xf32>
    %c12 = arith.constant 12 : index
    %c0_14 = arith.constant 0 : index
    %c0_15 = arith.constant 0 : index
    %c0_16 = arith.constant 0 : index
    %64 = vector.load %arg5[%c12, %c0_14, %c0_15, %c0_16] : memref<16x3x16x128xf32, #tpu.memory_space<vmem>>, vector<1x3x16x128xf32>
    %65 = vector.shape_cast %64 : vector<1x3x16x128xf32> to vector<3x16x128xf32>
    %66 = vector.shape_cast %63 : vector<3x16x128xf32> to vector<1x3x16x128xf32>
    tpu.vector_store %arg5[%c12, %c0_14, %c0_15, %c0_16], %66 {strides = array<i32>} : memref<16x3x16x128xf32, #tpu.memory_space<vmem>>, vector<1x3x16x128xf32>,
    %67 = arith.addf %56, %63 : vector<3x16x128xf32>
    %68 = arith.mulf %63, %63 : vector<3x16x128xf32>
    %69 = arith.addf %58, %68 : vector<3x16x128xf32>
    %70 = vector.extract_strided_slice %27 {offsets = [0, 15, 0], sizes = [3, 1, 128], strides = [1, 1, 1]} : vector<3x16x128xf32> to vector<3x1x128xf32>
    %71 = vector.extract_strided_slice %27 {offsets = [0, 0, 0], sizes = [3, 15, 128], strides = [1, 1, 1]} : vector<3x16x128xf32> to vector<3x15x128xf32>
    %72 = tpu.concatenate %70, %71 in 1 : vector<3x1x128xf32>, vector<3x15x128xf32> -> vector<3x16x128xf32>
    %73 = arith.select %13, %27, %72 : vector<3x16x128xi1>, vector<3x16x128xf32>
    %74 = arith.subf %73, %27 : vector<3x16x128xf32>
    %c1 = arith.constant 1 : index
    %c0_17 = arith.constant 0 : index
    %c0_18 = arith.constant 0 : index
    %c0_19 = arith.constant 0 : index
    %75 = vector.load %arg5[%c1, %c0_17, %c0_18, %c0_19] : memref<16x3x16x128xf32, #tpu.memory_space<vmem>>, vector<1x3x16x128xf32>
    %76 = vector.shape_cast %75 : vector<1x3x16x128xf32> to vector<3x16x128xf32>
    %77 = vector.shape_cast %74 : vector<3x16x128xf32> to vector<1x3x16x128xf32>
    tpu.vector_store %arg5[%c1, %c0_17, %c0_18, %c0_19], %77 {strides = array<i32>} : memref<16x3x16x128xf32, #tpu.memory_space<vmem>>, vector<1x3x16x128xf32>,
    %78 = arith.addf %67, %74 : vector<3x16x128xf32>
    %79 = arith.mulf %74, %74 : vector<3x16x128xf32>
    %80 = arith.addf %69, %79 : vector<3x16x128xf32>
    %81 = vector.extract_strided_slice %73 {offsets = [0, 0, 127], sizes = [3, 16, 1], strides = [1, 1, 1]} : vector<3x16x128xf32> to vector<3x16x1xf32>
    %82 = vector.extract_strided_slice %73 {offsets = [0, 0, 0], sizes = [3, 16, 127], strides = [1, 1, 1]} : vector<3x16x128xf32> to vector<3x16x127xf32>
    %83 = tpu.concatenate %81, %82 in 2 : vector<3x16x1xf32>, vector<3x16x127xf32> -> vector<3x16x128xf32>
    %84 = arith.select %17, %73, %83 : vector<3x16x128xi1>, vector<3x16x128xf32>
    %85 = arith.subf %84, %27 : vector<3x16x128xf32>
    %c0_20 = arith.constant 0 : index
    %c0_21 = arith.constant 0 : index
    %c0_22 = arith.constant 0 : index
    %c0_23 = arith.constant 0 : index
    %86 = vector.load %arg5[%c0_20, %c0_21, %c0_22, %c0_23] : memref<16x3x16x128xf32, #tpu.memory_space<vmem>>, vector<1x3x16x128xf32>
    %87 = vector.shape_cast %86 : vector<1x3x16x128xf32> to vector<3x16x128xf32>
    %88 = vector.shape_cast %85 : vector<3x16x128xf32> to vector<1x3x16x128xf32>
    tpu.vector_store %arg5[%c0_20, %c0_21, %c0_22, %c0_23], %88 {strides = array<i32>} : memref<16x3x16x128xf32, #tpu.memory_space<vmem>>, vector<1x3x16x128xf32>,
    %89 = arith.addf %78, %85 : vector<3x16x128xf32>
    %90 = arith.mulf %85, %85 : vector<3x16x128xf32>
    %91 = arith.addf %80, %90 : vector<3x16x128xf32>
    %92 = vector.extract_strided_slice %73 {offsets = [0, 0, 1], sizes = [3, 16, 127], strides = [1, 1, 1]} : vector<3x16x128xf32> to vector<3x16x127xf32>
    %93 = vector.extract_strided_slice %73 {offsets = [0, 0, 0], sizes = [3, 16, 1], strides = [1, 1, 1]} : vector<3x16x128xf32> to vector<3x16x1xf32>
    %94 = tpu.concatenate %92, %93 in 2 : vector<3x16x127xf32>, vector<3x16x1xf32> -> vector<3x16x128xf32>
    %95 = arith.select %15, %73, %94 : vector<3x16x128xi1>, vector<3x16x128xf32>
    %96 = arith.subf %95, %27 : vector<3x16x128xf32>
    %c2 = arith.constant 2 : index
    %c0_24 = arith.constant 0 : index
    %c0_25 = arith.constant 0 : index
    %c0_26 = arith.constant 0 : index
    %97 = vector.load %arg5[%c2, %c0_24, %c0_25, %c0_26] : memref<16x3x16x128xf32, #tpu.memory_space<vmem>>, vector<1x3x16x128xf32>
    %98 = vector.shape_cast %97 : vector<1x3x16x128xf32> to vector<3x16x128xf32>
    %99 = vector.shape_cast %96 : vector<3x16x128xf32> to vector<1x3x16x128xf32>
    tpu.vector_store %arg5[%c2, %c0_24, %c0_25, %c0_26], %99 {strides = array<i32>} : memref<16x3x16x128xf32, #tpu.memory_space<vmem>>, vector<1x3x16x128xf32>,
    %100 = arith.addf %89, %96 : vector<3x16x128xf32>
    %101 = arith.mulf %96, %96 : vector<3x16x128xf32>
    %102 = arith.addf %91, %101 : vector<3x16x128xf32>
    %103 = vector.extract_strided_slice %73 {offsets = [0, 15, 0], sizes = [3, 1, 128], strides = [1, 1, 1]} : vector<3x16x128xf32> to vector<3x1x128xf32>
    %104 = vector.extract_strided_slice %73 {offsets = [0, 0, 0], sizes = [3, 15, 128], strides = [1, 1, 1]} : vector<3x16x128xf32> to vector<3x15x128xf32>
    %105 = tpu.concatenate %103, %104 in 1 : vector<3x1x128xf32>, vector<3x15x128xf32> -> vector<3x16x128xf32>
    %106 = arith.select %13, %73, %105 : vector<3x16x128xi1>, vector<3x16x128xf32>
    %107 = arith.subf %106, %27 : vector<3x16x128xf32>
    %c9 = arith.constant 9 : index
    %c0_27 = arith.constant 0 : index
    %c0_28 = arith.constant 0 : index
    %c0_29 = arith.constant 0 : index
    %108 = vector.load %arg5[%c9, %c0_27, %c0_28, %c0_29] : memref<16x3x16x128xf32, #tpu.memory_space<vmem>>, vector<1x3x16x128xf32>
    %109 = vector.shape_cast %108 : vector<1x3x16x128xf32> to vector<3x16x128xf32>
    %110 = vector.shape_cast %107 : vector<3x16x128xf32> to vector<1x3x16x128xf32>
    tpu.vector_store %arg5[%c9, %c0_27, %c0_28, %c0_29], %110 {strides = array<i32>} : memref<16x3x16x128xf32, #tpu.memory_space<vmem>>, vector<1x3x16x128xf32>,
    %111 = arith.addf %100, %107 : vector<3x16x128xf32>
    %112 = arith.mulf %107, %107 : vector<3x16x128xf32>
    %113 = arith.addf %102, %112 : vector<3x16x128xf32>
    %114 = vector.extract_strided_slice %106 {offsets = [0, 0, 127], sizes = [3, 16, 1], strides = [1, 1, 1]} : vector<3x16x128xf32> to vector<3x16x1xf32>
    %115 = vector.extract_strided_slice %106 {offsets = [0, 0, 0], sizes = [3, 16, 127], strides = [1, 1, 1]} : vector<3x16x128xf32> to vector<3x16x127xf32>
    %116 = tpu.concatenate %114, %115 in 2 : vector<3x16x1xf32>, vector<3x16x127xf32> -> vector<3x16x128xf32>
    %117 = arith.select %17, %106, %116 : vector<3x16x128xi1>, vector<3x16x128xf32>
    %118 = vector.extract_strided_slice %117 {offsets = [0, 0, 127], sizes = [3, 16, 1], strides = [1, 1, 1]} : vector<3x16x128xf32> to vector<3x16x1xf32>
    %119 = vector.extract_strided_slice %117 {offsets = [0, 0, 0], sizes = [3, 16, 127], strides = [1, 1, 1]} : vector<3x16x128xf32> to vector<3x16x127xf32>
    %120 = tpu.concatenate %118, %119 in 2 : vector<3x16x1xf32>, vector<3x16x127xf32> -> vector<3x16x128xf32>
    %121 = arith.select %17, %117, %120 : vector<3x16x128xi1>, vector<3x16x128xf32>
    %122 = arith.subf %121, %27 : vector<3x16x128xf32>
    %c8 = arith.constant 8 : index
    %c0_30 = arith.constant 0 : index
    %c0_31 = arith.constant 0 : index
    %c0_32 = arith.constant 0 : index
    %123 = vector.load %arg5[%c8, %c0_30, %c0_31, %c0_32] : memref<16x3x16x128xf32, #tpu.memory_space<vmem>>, vector<1x3x16x128xf32>
    %124 = vector.shape_cast %123 : vector<1x3x16x128xf32> to vector<3x16x128xf32>
    %125 = vector.shape_cast %122 : vector<3x16x128xf32> to vector<1x3x16x128xf32>
    tpu.vector_store %arg5[%c8, %c0_30, %c0_31, %c0_32], %125 {strides = array<i32>} : memref<16x3x16x128xf32, #tpu.memory_space<vmem>>, vector<1x3x16x128xf32>,
    %126 = arith.addf %111, %122 : vector<3x16x128xf32>
    %127 = arith.mulf %122, %122 : vector<3x16x128xf32>
    %128 = arith.addf %113, %127 : vector<3x16x128xf32>
    %129 = vector.extract_strided_slice %106 {offsets = [0, 0, 1], sizes = [3, 16, 127], strides = [1, 1, 1]} : vector<3x16x128xf32> to vector<3x16x127xf32>
    %130 = vector.extract_strided_slice %106 {offsets = [0, 0, 0], sizes = [3, 16, 1], strides = [1, 1, 1]} : vector<3x16x128xf32> to vector<3x16x1xf32>
    %131 = tpu.concatenate %129, %130 in 2 : vector<3x16x127xf32>, vector<3x16x1xf32> -> vector<3x16x128xf32>
    %132 = arith.select %15, %106, %131 : vector<3x16x128xi1>, vector<3x16x128xf32>
    %133 = vector.extract_strided_slice %132 {offsets = [0, 0, 1], sizes = [3, 16, 127], strides = [1, 1, 1]} : vector<3x16x128xf32> to vector<3x16x127xf32>
    %134 = vector.extract_strided_slice %132 {offsets = [0, 0, 0], sizes = [3, 16, 1], strides = [1, 1, 1]} : vector<3x16x128xf32> to vector<3x16x1xf32>
    %135 = tpu.concatenate %133, %134 in 2 : vector<3x16x127xf32>, vector<3x16x1xf32> -> vector<3x16x128xf32>
    %136 = arith.select %15, %132, %135 : vector<3x16x128xi1>, vector<3x16x128xf32>
    %137 = arith.subf %136, %27 : vector<3x16x128xf32>
    %c10 = arith.constant 10 : index
    %c0_33 = arith.constant 0 : index
    %c0_34 = arith.constant 0 : index
    %c0_35 = arith.constant 0 : index
    %138 = vector.load %arg5[%c10, %c0_33, %c0_34, %c0_35] : memref<16x3x16x128xf32, #tpu.memory_space<vmem>>, vector<1x3x16x128xf32>
    %139 = vector.shape_cast %138 : vector<1x3x16x128xf32> to vector<3x16x128xf32>
    %140 = vector.shape_cast %137 : vector<3x16x128xf32> to vector<1x3x16x128xf32>
    tpu.vector_store %arg5[%c10, %c0_33, %c0_34, %c0_35], %140 {strides = array<i32>} : memref<16x3x16x128xf32, #tpu.memory_space<vmem>>, vector<1x3x16x128xf32>,
    %141 = arith.addf %126, %137 : vector<3x16x128xf32>
    %142 = arith.mulf %137, %137 : vector<3x16x128xf32>
    %143 = arith.addf %128, %142 : vector<3x16x128xf32>
    %144 = vector.extract_strided_slice %27 {offsets = [0, 1, 0], sizes = [3, 15, 128], strides = [1, 1, 1]} : vector<3x16x128xf32> to vector<3x15x128xf32>
    %145 = vector.extract_strided_slice %27 {offsets = [0, 0, 0], sizes = [3, 1, 128], strides = [1, 1, 1]} : vector<3x16x128xf32> to vector<3x1x128xf32>
    %146 = tpu.concatenate %144, %145 in 1 : vector<3x15x128xf32>, vector<3x1x128xf32> -> vector<3x16x128xf32>
    %147 = arith.select %11, %27, %146 : vector<3x16x128xi1>, vector<3x16x128xf32>
    %148 = arith.subf %147, %27 : vector<3x16x128xf32>
    %c6 = arith.constant 6 : index
    %c0_36 = arith.constant 0 : index
    %c0_37 = arith.constant 0 : index
    %c0_38 = arith.constant 0 : index
    %149 = vector.load %arg5[%c6, %c0_36, %c0_37, %c0_38] : memref<16x3x16x128xf32, #tpu.memory_space<vmem>>, vector<1x3x16x128xf32>
    %150 = vector.shape_cast %149 : vector<1x3x16x128xf32> to vector<3x16x128xf32>
    %151 = vector.shape_cast %148 : vector<3x16x128xf32> to vector<1x3x16x128xf32>
    tpu.vector_store %arg5[%c6, %c0_36, %c0_37, %c0_38], %151 {strides = array<i32>} : memref<16x3x16x128xf32, #tpu.memory_space<vmem>>, vector<1x3x16x128xf32>,
    %152 = arith.addf %141, %148 : vector<3x16x128xf32>
    %153 = arith.mulf %148, %148 : vector<3x16x128xf32>
    %154 = arith.addf %143, %153 : vector<3x16x128xf32>
    %155 = vector.extract_strided_slice %147 {offsets = [0, 0, 127], sizes = [3, 16, 1], strides = [1, 1, 1]} : vector<3x16x128xf32> to vector<3x16x1xf32>
    %156 = vector.extract_strided_slice %147 {offsets = [0, 0, 0], sizes = [3, 16, 127], strides = [1, 1, 1]} : vector<3x16x128xf32> to vector<3x16x127xf32>
    %157 = tpu.concatenate %155, %156 in 2 : vector<3x16x1xf32>, vector<3x16x127xf32> -> vector<3x16x128xf32>
    %158 = arith.select %17, %147, %157 : vector<3x16x128xi1>, vector<3x16x128xf32>
    %159 = arith.subf %158, %27 : vector<3x16x128xf32>
    %c5 = arith.constant 5 : index
    %c0_39 = arith.constant 0 : index
    %c0_40 = arith.constant 0 : index
    %c0_41 = arith.constant 0 : index
    %160 = vector.load %arg5[%c5, %c0_39, %c0_40, %c0_41] : memref<16x3x16x128xf32, #tpu.memory_space<vmem>>, vector<1x3x16x128xf32>
    %161 = vector.shape_cast %160 : vector<1x3x16x128xf32> to vector<3x16x128xf32>
    %162 = vector.shape_cast %159 : vector<3x16x128xf32> to vector<1x3x16x128xf32>
    tpu.vector_store %arg5[%c5, %c0_39, %c0_40, %c0_41], %162 {strides = array<i32>} : memref<16x3x16x128xf32, #tpu.memory_space<vmem>>, vector<1x3x16x128xf32>,
    %163 = arith.addf %152, %159 : vector<3x16x128xf32>
    %164 = arith.mulf %159, %159 : vector<3x16x128xf32>
    %165 = arith.addf %154, %164 : vector<3x16x128xf32>
    %166 = vector.extract_strided_slice %147 {offsets = [0, 0, 1], sizes = [3, 16, 127], strides = [1, 1, 1]} : vector<3x16x128xf32> to vector<3x16x127xf32>
    %167 = vector.extract_strided_slice %147 {offsets = [0, 0, 0], sizes = [3, 16, 1], strides = [1, 1, 1]} : vector<3x16x128xf32> to vector<3x16x1xf32>
    %168 = tpu.concatenate %166, %167 in 2 : vector<3x16x127xf32>, vector<3x16x1xf32> -> vector<3x16x128xf32>
    %169 = arith.select %15, %147, %168 : vector<3x16x128xi1>, vector<3x16x128xf32>
    %170 = arith.subf %169, %27 : vector<3x16x128xf32>
    %c7 = arith.constant 7 : index
    %c0_42 = arith.constant 0 : index
    %c0_43 = arith.constant 0 : index
    %c0_44 = arith.constant 0 : index
    %171 = vector.load %arg5[%c7, %c0_42, %c0_43, %c0_44] : memref<16x3x16x128xf32, #tpu.memory_space<vmem>>, vector<1x3x16x128xf32>
    %172 = vector.shape_cast %171 : vector<1x3x16x128xf32> to vector<3x16x128xf32>
    %173 = vector.shape_cast %170 : vector<3x16x128xf32> to vector<1x3x16x128xf32>
    tpu.vector_store %arg5[%c7, %c0_42, %c0_43, %c0_44], %173 {strides = array<i32>} : memref<16x3x16x128xf32, #tpu.memory_space<vmem>>, vector<1x3x16x128xf32>,
    %174 = arith.addf %163, %170 : vector<3x16x128xf32>
    %175 = arith.mulf %170, %170 : vector<3x16x128xf32>
    %176 = arith.addf %165, %175 : vector<3x16x128xf32>
    %177 = vector.extract_strided_slice %147 {offsets = [0, 1, 0], sizes = [3, 15, 128], strides = [1, 1, 1]} : vector<3x16x128xf32> to vector<3x15x128xf32>
    %178 = vector.extract_strided_slice %147 {offsets = [0, 0, 0], sizes = [3, 1, 128], strides = [1, 1, 1]} : vector<3x16x128xf32> to vector<3x1x128xf32>
    %179 = tpu.concatenate %177, %178 in 1 : vector<3x15x128xf32>, vector<3x1x128xf32> -> vector<3x16x128xf32>
    %180 = arith.select %11, %147, %179 : vector<3x16x128xi1>, vector<3x16x128xf32>
    %181 = arith.subf %180, %27 : vector<3x16x128xf32>
    %c14 = arith.constant 14 : index
    %c0_45 = arith.constant 0 : index
    %c0_46 = arith.constant 0 : index
    %c0_47 = arith.constant 0 : index
    %182 = vector.load %arg5[%c14, %c0_45, %c0_46, %c0_47] : memref<16x3x16x128xf32, #tpu.memory_space<vmem>>, vector<1x3x16x128xf32>
    %183 = vector.shape_cast %182 : vector<1x3x16x128xf32> to vector<3x16x128xf32>
    %184 = vector.shape_cast %181 : vector<3x16x128xf32> to vector<1x3x16x128xf32>
    tpu.vector_store %arg5[%c14, %c0_45, %c0_46, %c0_47], %184 {strides = array<i32>} : memref<16x3x16x128xf32, #tpu.memory_space<vmem>>, vector<1x3x16x128xf32>,
    %185 = arith.addf %174, %181 : vector<3x16x128xf32>
    %186 = arith.mulf %181, %181 : vector<3x16x128xf32>
    %187 = arith.addf %176, %186 : vector<3x16x128xf32>
    %188 = vector.extract_strided_slice %180 {offsets = [0, 0, 127], sizes = [3, 16, 1], strides = [1, 1, 1]} : vector<3x16x128xf32> to vector<3x16x1xf32>
    %189 = vector.extract_strided_slice %180 {offsets = [0, 0, 0], sizes = [3, 16, 127], strides = [1, 1, 1]} : vector<3x16x128xf32> to vector<3x16x127xf32>
    %190 = tpu.concatenate %188, %189 in 2 : vector<3x16x1xf32>, vector<3x16x127xf32> -> vector<3x16x128xf32>
    %191 = arith.select %17, %180, %190 : vector<3x16x128xi1>, vector<3x16x128xf32>
    %192 = vector.extract_strided_slice %191 {offsets = [0, 0, 127], sizes = [3, 16, 1], strides = [1, 1, 1]} : vector<3x16x128xf32> to vector<3x16x1xf32>
    %193 = vector.extract_strided_slice %191 {offsets = [0, 0, 0], sizes = [3, 16, 127], strides = [1, 1, 1]} : vector<3x16x128xf32> to vector<3x16x127xf32>
    %194 = tpu.concatenate %192, %193 in 2 : vector<3x16x1xf32>, vector<3x16x127xf32> -> vector<3x16x128xf32>
    %195 = arith.select %17, %191, %194 : vector<3x16x128xi1>, vector<3x16x128xf32>
    %196 = arith.subf %195, %27 : vector<3x16x128xf32>
    %c13 = arith.constant 13 : index
    %c0_48 = arith.constant 0 : index
    %c0_49 = arith.constant 0 : index
    %c0_50 = arith.constant 0 : index
    %197 = vector.load %arg5[%c13, %c0_48, %c0_49, %c0_50] : memref<16x3x16x128xf32, #tpu.memory_space<vmem>>, vector<1x3x16x128xf32>
    %198 = vector.shape_cast %197 : vector<1x3x16x128xf32> to vector<3x16x128xf32>
    %199 = vector.shape_cast %196 : vector<3x16x128xf32> to vector<1x3x16x128xf32>
    tpu.vector_store %arg5[%c13, %c0_48, %c0_49, %c0_50], %199 {strides = array<i32>} : memref<16x3x16x128xf32, #tpu.memory_space<vmem>>, vector<1x3x16x128xf32>,
    %200 = arith.addf %185, %196 : vector<3x16x128xf32>
    %201 = arith.mulf %196, %196 : vector<3x16x128xf32>
    %202 = arith.addf %187, %201 : vector<3x16x128xf32>
    %203 = vector.extract_strided_slice %180 {offsets = [0, 0, 1], sizes = [3, 16, 127], strides = [1, 1, 1]} : vector<3x16x128xf32> to vector<3x16x127xf32>
    %204 = vector.extract_strided_slice %180 {offsets = [0, 0, 0], sizes = [3, 16, 1], strides = [1, 1, 1]} : vector<3x16x128xf32> to vector<3x16x1xf32>
    %205 = tpu.concatenate %203, %204 in 2 : vector<3x16x127xf32>, vector<3x16x1xf32> -> vector<3x16x128xf32>
    %206 = arith.select %15, %180, %205 : vector<3x16x128xi1>, vector<3x16x128xf32>
    %207 = vector.extract_strided_slice %206 {offsets = [0, 0, 1], sizes = [3, 16, 127], strides = [1, 1, 1]} : vector<3x16x128xf32> to vector<3x16x127xf32>
    %208 = vector.extract_strided_slice %206 {offsets = [0, 0, 0], sizes = [3, 16, 1], strides = [1, 1, 1]} : vector<3x16x128xf32> to vector<3x16x1xf32>
    %209 = tpu.concatenate %207, %208 in 2 : vector<3x16x127xf32>, vector<3x16x1xf32> -> vector<3x16x128xf32>
    %210 = arith.select %15, %206, %209 : vector<3x16x128xi1>, vector<3x16x128xf32>
    %211 = arith.subf %210, %27 : vector<3x16x128xf32>
    %c15 = arith.constant 15 : index
    %c0_51 = arith.constant 0 : index
    %c0_52 = arith.constant 0 : index
    %c0_53 = arith.constant 0 : index
    %212 = vector.load %arg5[%c15, %c0_51, %c0_52, %c0_53] : memref<16x3x16x128xf32, #tpu.memory_space<vmem>>, vector<1x3x16x128xf32>
    %213 = vector.shape_cast %212 : vector<1x3x16x128xf32> to vector<3x16x128xf32>
    %214 = vector.shape_cast %211 : vector<3x16x128xf32> to vector<1x3x16x128xf32>
    tpu.vector_store %arg5[%c15, %c0_51, %c0_52, %c0_53], %214 {strides = array<i32>} : memref<16x3x16x128xf32, #tpu.memory_space<vmem>>, vector<1x3x16x128xf32>,
    %215 = arith.addf %200, %211 : vector<3x16x128xf32>
    %216 = arith.mulf %211, %211 : vector<3x16x128xf32>
    %217 = arith.addf %202, %216 : vector<3x16x128xf32>
    %218 = arith.mulf %215, %215 : vector<3x16x128xf32>
    %cst = arith.constant 6.250000e-02 : f32
    %219 = vector.broadcast %cst : f32 to vector<3x16x128xf32>
    %220 = arith.mulf %218, %219 : vector<3x16x128xf32>
    %221 = arith.subf %217, %220 : vector<3x16x128xf32>
    %cst_54 = arith.constant 0.000000e+00 : f32
    %222 = vector.broadcast %cst_54 : f32 to vector<3x16x128xf32>
    %223 = arith.maximumf %221, %222 : vector<3x16x128xf32>
    %cst_55 = arith.constant 0.0666666701 : f32
    %224 = vector.broadcast %cst_55 : f32 to vector<3x16x128xf32>
    %225 = arith.mulf %223, %224 : vector<3x16x128xf32>
    %cst_56 = arith.constant 1.000000e-16 : f32
    %226 = vector.broadcast %cst_56 : f32 to vector<3x16x128xf32>
    %227 = arith.addf %225, %226 : vector<3x16x128xf32>
    %228 = tpu.reciprocal %227 : vector<3x16x128xf32> -> vector<3x16x128xf32>
    %cst_57 = arith.constant 3.70370364 : f32
    %229 = vector.broadcast %cst_57 : f32 to vector<3x16x128xf32>
    %230 = arith.mulf %228, %229 : vector<3x16x128xf32>
    %c0_58 = arith.constant 0 : index
    %c0_59 = arith.constant 0 : index
    %c0_60 = arith.constant 0 : index
    %c0_61 = arith.constant 0 : index
    %231 = vector.load %arg5[%c0_58, %c0_59, %c0_60, %c0_61] : memref<16x3x16x128xf32, #tpu.memory_space<vmem>>, vector<1x3x16x128xf32>
    %232 = vector.shape_cast %231 : vector<1x3x16x128xf32> to vector<3x16x128xf32>
    %233 = arith.mulf %232, %232 : vector<3x16x128xf32>
    %234 = arith.mulf %233, %230 : vector<3x16x128xf32>
    %cst_62 = arith.constant dense<0.000000e+00> : vector<16x128xf32>
    %235 = vector.multi_reduction <add>, %234, %cst_62 [0] : vector<3x16x128xf32> to vector<16x128xf32>
    %cst_63 = arith.constant 0.000000e+00 : f32
    %236 = vector.broadcast %cst_63 : f32 to vector<16x128xf32>
    %237 = arith.subf %236, %235 : vector<16x128xf32>
    %c0_64 = arith.constant 0 : index
    %c0_65 = arith.constant 0 : index
    %c0_66 = arith.constant 0 : index
    %238 = vector.load %arg4[%c0_64, %c0_65, %c0_66] : memref<16x16x128xf32, #tpu.memory_space<vmem>>, vector<1x16x128xf32>
    %239 = vector.shape_cast %238 : vector<1x16x128xf32> to vector<16x128xf32>
    %240 = vector.shape_cast %237 : vector<16x128xf32> to vector<1x16x128xf32>
    tpu.vector_store %arg4[%c0_64, %c0_65, %c0_66], %240 {strides = array<i32>} : memref<16x16x128xf32, #tpu.memory_space<vmem>>, vector<1x16x128xf32>,
    %c1_67 = arith.constant 1 : index
    %c0_68 = arith.constant 0 : index
    %c0_69 = arith.constant 0 : index
    %c0_70 = arith.constant 0 : index
    %241 = vector.load %arg5[%c1_67, %c0_68, %c0_69, %c0_70] : memref<16x3x16x128xf32, #tpu.memory_space<vmem>>, vector<1x3x16x128xf32>
    %242 = vector.shape_cast %241 : vector<1x3x16x128xf32> to vector<3x16x128xf32>
    %243 = arith.mulf %242, %242 : vector<3x16x128xf32>
    %244 = arith.mulf %243, %230 : vector<3x16x128xf32>
    %cst_71 = arith.constant dense<0.000000e+00> : vector<16x128xf32>
    %245 = vector.multi_reduction <add>, %244, %cst_71 [0] : vector<3x16x128xf32> to vector<16x128xf32>
    %cst_72 = arith.constant 0.000000e+00 : f32
    %246 = vector.broadcast %cst_72 : f32 to vector<16x128xf32>
    %247 = arith.subf %246, %245 : vector<16x128xf32>
    %c1_73 = arith.constant 1 : index
    %c0_74 = arith.constant 0 : index
    %c0_75 = arith.constant 0 : index
    %248 = vector.load %arg4[%c1_73, %c0_74, %c0_75] : memref<16x16x128xf32, #tpu.memory_space<vmem>>, vector<1x16x128xf32>
    %249 = vector.shape_cast %248 : vector<1x16x128xf32> to vector<16x128xf32>
    %250 = vector.shape_cast %247 : vector<16x128xf32> to vector<1x16x128xf32>
    tpu.vector_store %arg4[%c1_73, %c0_74, %c0_75], %250 {strides = array<i32>} : memref<16x16x128xf32, #tpu.memory_space<vmem>>, vector<1x16x128xf32>,
    %c2_76 = arith.constant 2 : index
    %c0_77 = arith.constant 0 : index
    %c0_78 = arith.constant 0 : index
    %c0_79 = arith.constant 0 : index
    %251 = vector.load %arg5[%c2_76, %c0_77, %c0_78, %c0_79] : memref<16x3x16x128xf32, #tpu.memory_space<vmem>>, vector<1x3x16x128xf32>
    %252 = vector.shape_cast %251 : vector<1x3x16x128xf32> to vector<3x16x128xf32>
    %253 = arith.mulf %252, %252 : vector<3x16x128xf32>
    %254 = arith.mulf %253, %230 : vector<3x16x128xf32>
    %cst_80 = arith.constant dense<0.000000e+00> : vector<16x128xf32>
    %255 = vector.multi_reduction <add>, %254, %cst_80 [0] : vector<3x16x128xf32> to vector<16x128xf32>
    %cst_81 = arith.constant 0.000000e+00 : f32
    %256 = vector.broadcast %cst_81 : f32 to vector<16x128xf32>
    %257 = arith.subf %256, %255 : vector<16x128xf32>
    %c2_82 = arith.constant 2 : index
    %c0_83 = arith.constant 0 : index
    %c0_84 = arith.constant 0 : index
    %258 = vector.load %arg4[%c2_82, %c0_83, %c0_84] : memref<16x16x128xf32, #tpu.memory_space<vmem>>, vector<1x16x128xf32>
    %259 = vector.shape_cast %258 : vector<1x16x128xf32> to vector<16x128xf32>
    %260 = vector.shape_cast %257 : vector<16x128xf32> to vector<1x16x128xf32>
    tpu.vector_store %arg4[%c2_82, %c0_83, %c0_84], %260 {strides = array<i32>} : memref<16x16x128xf32, #tpu.memory_space<vmem>>, vector<1x16x128xf32>,
    %c3_85 = arith.constant 3 : index
    %c0_86 = arith.constant 0 : index
    %c0_87 = arith.constant 0 : index
    %c0_88 = arith.constant 0 : index
    %261 = vector.load %arg5[%c3_85, %c0_86, %c0_87, %c0_88] : memref<16x3x16x128xf32, #tpu.memory_space<vmem>>, vector<1x3x16x128xf32>
    %262 = vector.shape_cast %261 : vector<1x3x16x128xf32> to vector<3x16x128xf32>
    %263 = arith.mulf %262, %262 : vector<3x16x128xf32>
    %264 = arith.mulf %263, %230 : vector<3x16x128xf32>
    %cst_89 = arith.constant dense<0.000000e+00> : vector<16x128xf32>
    %265 = vector.multi_reduction <add>, %264, %cst_89 [0] : vector<3x16x128xf32> to vector<16x128xf32>
    %cst_90 = arith.constant 0.000000e+00 : f32
    %266 = vector.broadcast %cst_90 : f32 to vector<16x128xf32>
    %267 = arith.subf %266, %265 : vector<16x128xf32>
    %c3_91 = arith.constant 3 : index
    %c0_92 = arith.constant 0 : index
    %c0_93 = arith.constant 0 : index
    %268 = vector.load %arg4[%c3_91, %c0_92, %c0_93] : memref<16x16x128xf32, #tpu.memory_space<vmem>>, vector<1x16x128xf32>
    %269 = vector.shape_cast %268 : vector<1x16x128xf32> to vector<16x128xf32>
    %270 = vector.shape_cast %267 : vector<16x128xf32> to vector<1x16x128xf32>
    tpu.vector_store %arg4[%c3_91, %c0_92, %c0_93], %270 {strides = array<i32>} : memref<16x16x128xf32, #tpu.memory_space<vmem>>, vector<1x16x128xf32>,
    %c4_94 = arith.constant 4 : index
    %c0_95 = arith.constant 0 : index
    %c0_96 = arith.constant 0 : index
    %c0_97 = arith.constant 0 : index
    %271 = vector.load %arg5[%c4_94, %c0_95, %c0_96, %c0_97] : memref<16x3x16x128xf32, #tpu.memory_space<vmem>>, vector<1x3x16x128xf32>
    %272 = vector.shape_cast %271 : vector<1x3x16x128xf32> to vector<3x16x128xf32>
    %273 = arith.mulf %272, %272 : vector<3x16x128xf32>
    %274 = arith.mulf %273, %230 : vector<3x16x128xf32>
    %cst_98 = arith.constant dense<0.000000e+00> : vector<16x128xf32>
    %275 = vector.multi_reduction <add>, %274, %cst_98 [0] : vector<3x16x128xf32> to vector<16x128xf32>
    %cst_99 = arith.constant 0.000000e+00 : f32
    %276 = vector.broadcast %cst_99 : f32 to vector<16x128xf32>
    %277 = arith.subf %276, %275 : vector<16x128xf32>
    %c4_100 = arith.constant 4 : index
    %c0_101 = arith.constant 0 : index
    %c0_102 = arith.constant 0 : index
    %278 = vector.load %arg4[%c4_100, %c0_101, %c0_102] : memref<16x16x128xf32, #tpu.memory_space<vmem>>, vector<1x16x128xf32>
    %279 = vector.shape_cast %278 : vector<1x16x128xf32> to vector<16x128xf32>
    %280 = vector.shape_cast %277 : vector<16x128xf32> to vector<1x16x128xf32>
    tpu.vector_store %arg4[%c4_100, %c0_101, %c0_102], %280 {strides = array<i32>} : memref<16x16x128xf32, #tpu.memory_space<vmem>>, vector<1x16x128xf32>,
    %c5_103 = arith.constant 5 : index
    %c0_104 = arith.constant 0 : index
    %c0_105 = arith.constant 0 : index
    %c0_106 = arith.constant 0 : index
    %281 = vector.load %arg5[%c5_103, %c0_104, %c0_105, %c0_106] : memref<16x3x16x128xf32, #tpu.memory_space<vmem>>, vector<1x3x16x128xf32>
    %282 = vector.shape_cast %281 : vector<1x3x16x128xf32> to vector<3x16x128xf32>
    %283 = arith.mulf %282, %282 : vector<3x16x128xf32>
    %284 = arith.mulf %283, %230 : vector<3x16x128xf32>
    %cst_107 = arith.constant dense<0.000000e+00> : vector<16x128xf32>
    %285 = vector.multi_reduction <add>, %284, %cst_107 [0] : vector<3x16x128xf32> to vector<16x128xf32>
    %cst_108 = arith.constant 0.000000e+00 : f32
    %286 = vector.broadcast %cst_108 : f32 to vector<16x128xf32>
    %287 = arith.subf %286, %285 : vector<16x128xf32>
    %c5_109 = arith.constant 5 : index
    %c0_110 = arith.constant 0 : index
    %c0_111 = arith.constant 0 : index
    %288 = vector.load %arg4[%c5_109, %c0_110, %c0_111] : memref<16x16x128xf32, #tpu.memory_space<vmem>>, vector<1x16x128xf32>
    %289 = vector.shape_cast %288 : vector<1x16x128xf32> to vector<16x128xf32>
    %290 = vector.shape_cast %287 : vector<16x128xf32> to vector<1x16x128xf32>
    tpu.vector_store %arg4[%c5_109, %c0_110, %c0_111], %290 {strides = array<i32>} : memref<16x16x128xf32, #tpu.memory_space<vmem>>, vector<1x16x128xf32>,
    %c6_112 = arith.constant 6 : index
    %c0_113 = arith.constant 0 : index
    %c0_114 = arith.constant 0 : index
    %c0_115 = arith.constant 0 : index
    %291 = vector.load %arg5[%c6_112, %c0_113, %c0_114, %c0_115] : memref<16x3x16x128xf32, #tpu.memory_space<vmem>>, vector<1x3x16x128xf32>
    %292 = vector.shape_cast %291 : vector<1x3x16x128xf32> to vector<3x16x128xf32>
    %293 = arith.mulf %292, %292 : vector<3x16x128xf32>
    %294 = arith.mulf %293, %230 : vector<3x16x128xf32>
    %cst_116 = arith.constant dense<0.000000e+00> : vector<16x128xf32>
    %295 = vector.multi_reduction <add>, %294, %cst_116 [0] : vector<3x16x128xf32> to vector<16x128xf32>
    %cst_117 = arith.constant 0.000000e+00 : f32
    %296 = vector.broadcast %cst_117 : f32 to vector<16x128xf32>
    %297 = arith.subf %296, %295 : vector<16x128xf32>
    %c6_118 = arith.constant 6 : index
    %c0_119 = arith.constant 0 : index
    %c0_120 = arith.constant 0 : index
    %298 = vector.load %arg4[%c6_118, %c0_119, %c0_120] : memref<16x16x128xf32, #tpu.memory_space<vmem>>, vector<1x16x128xf32>
    %299 = vector.shape_cast %298 : vector<1x16x128xf32> to vector<16x128xf32>
    %300 = vector.shape_cast %297 : vector<16x128xf32> to vector<1x16x128xf32>
    tpu.vector_store %arg4[%c6_118, %c0_119, %c0_120], %300 {strides = array<i32>} : memref<16x16x128xf32, #tpu.memory_space<vmem>>, vector<1x16x128xf32>,
    %c7_121 = arith.constant 7 : index
    %c0_122 = arith.constant 0 : index
    %c0_123 = arith.constant 0 : index
    %c0_124 = arith.constant 0 : index
    %301 = vector.load %arg5[%c7_121, %c0_122, %c0_123, %c0_124] : memref<16x3x16x128xf32, #tpu.memory_space<vmem>>, vector<1x3x16x128xf32>
    %302 = vector.shape_cast %301 : vector<1x3x16x128xf32> to vector<3x16x128xf32>
    %303 = arith.mulf %302, %302 : vector<3x16x128xf32>
    %304 = arith.mulf %303, %230 : vector<3x16x128xf32>
    %cst_125 = arith.constant dense<0.000000e+00> : vector<16x128xf32>
    %305 = vector.multi_reduction <add>, %304, %cst_125 [0] : vector<3x16x128xf32> to vector<16x128xf32>
    %cst_126 = arith.constant 0.000000e+00 : f32
    %306 = vector.broadcast %cst_126 : f32 to vector<16x128xf32>
    %307 = arith.subf %306, %305 : vector<16x128xf32>
    %c7_127 = arith.constant 7 : index
    %c0_128 = arith.constant 0 : index
    %c0_129 = arith.constant 0 : index
    %308 = vector.load %arg4[%c7_127, %c0_128, %c0_129] : memref<16x16x128xf32, #tpu.memory_space<vmem>>, vector<1x16x128xf32>
    %309 = vector.shape_cast %308 : vector<1x16x128xf32> to vector<16x128xf32>
    %310 = vector.shape_cast %307 : vector<16x128xf32> to vector<1x16x128xf32>
    tpu.vector_store %arg4[%c7_127, %c0_128, %c0_129], %310 {strides = array<i32>} : memref<16x16x128xf32, #tpu.memory_space<vmem>>, vector<1x16x128xf32>,
    %c8_130 = arith.constant 8 : index
    %c0_131 = arith.constant 0 : index
    %c0_132 = arith.constant 0 : index
    %c0_133 = arith.constant 0 : index
    %311 = vector.load %arg5[%c8_130, %c0_131, %c0_132, %c0_133] : memref<16x3x16x128xf32, #tpu.memory_space<vmem>>, vector<1x3x16x128xf32>
    %312 = vector.shape_cast %311 : vector<1x3x16x128xf32> to vector<3x16x128xf32>
    %313 = arith.mulf %312, %312 : vector<3x16x128xf32>
    %314 = arith.mulf %313, %230 : vector<3x16x128xf32>
    %cst_134 = arith.constant dense<0.000000e+00> : vector<16x128xf32>
    %315 = vector.multi_reduction <add>, %314, %cst_134 [0] : vector<3x16x128xf32> to vector<16x128xf32>
    %cst_135 = arith.constant 0.000000e+00 : f32
    %316 = vector.broadcast %cst_135 : f32 to vector<16x128xf32>
    %317 = arith.subf %316, %315 : vector<16x128xf32>
    %c8_136 = arith.constant 8 : index
    %c0_137 = arith.constant 0 : index
    %c0_138 = arith.constant 0 : index
    %318 = vector.load %arg4[%c8_136, %c0_137, %c0_138] : memref<16x16x128xf32, #tpu.memory_space<vmem>>, vector<1x16x128xf32>
    %319 = vector.shape_cast %318 : vector<1x16x128xf32> to vector<16x128xf32>
    %320 = vector.shape_cast %317 : vector<16x128xf32> to vector<1x16x128xf32>
    tpu.vector_store %arg4[%c8_136, %c0_137, %c0_138], %320 {strides = array<i32>} : memref<16x16x128xf32, #tpu.memory_space<vmem>>, vector<1x16x128xf32>,
    %c9_139 = arith.constant 9 : index
    %c0_140 = arith.constant 0 : index
    %c0_141 = arith.constant 0 : index
    %c0_142 = arith.constant 0 : index
    %321 = vector.load %arg5[%c9_139, %c0_140, %c0_141, %c0_142] : memref<16x3x16x128xf32, #tpu.memory_space<vmem>>, vector<1x3x16x128xf32>
    %322 = vector.shape_cast %321 : vector<1x3x16x128xf32> to vector<3x16x128xf32>
    %323 = arith.mulf %322, %322 : vector<3x16x128xf32>
    %324 = arith.mulf %323, %230 : vector<3x16x128xf32>
    %cst_143 = arith.constant dense<0.000000e+00> : vector<16x128xf32>
    %325 = vector.multi_reduction <add>, %324, %cst_143 [0] : vector<3x16x128xf32> to vector<16x128xf32>
    %cst_144 = arith.constant 0.000000e+00 : f32
    %326 = vector.broadcast %cst_144 : f32 to vector<16x128xf32>
    %327 = arith.subf %326, %325 : vector<16x128xf32>
    %c9_145 = arith.constant 9 : index
    %c0_146 = arith.constant 0 : index
    %c0_147 = arith.constant 0 : index
    %328 = vector.load %arg4[%c9_145, %c0_146, %c0_147] : memref<16x16x128xf32, #tpu.memory_space<vmem>>, vector<1x16x128xf32>
    %329 = vector.shape_cast %328 : vector<1x16x128xf32> to vector<16x128xf32>
    %330 = vector.shape_cast %327 : vector<16x128xf32> to vector<1x16x128xf32>
    tpu.vector_store %arg4[%c9_145, %c0_146, %c0_147], %330 {strides = array<i32>} : memref<16x16x128xf32, #tpu.memory_space<vmem>>, vector<1x16x128xf32>,
    %c10_148 = arith.constant 10 : index
    %c0_149 = arith.constant 0 : index
    %c0_150 = arith.constant 0 : index
    %c0_151 = arith.constant 0 : index
    %331 = vector.load %arg5[%c10_148, %c0_149, %c0_150, %c0_151] : memref<16x3x16x128xf32, #tpu.memory_space<vmem>>, vector<1x3x16x128xf32>
    %332 = vector.shape_cast %331 : vector<1x3x16x128xf32> to vector<3x16x128xf32>
    %333 = arith.mulf %332, %332 : vector<3x16x128xf32>
    %334 = arith.mulf %333, %230 : vector<3x16x128xf32>
    %cst_152 = arith.constant dense<0.000000e+00> : vector<16x128xf32>
    %335 = vector.multi_reduction <add>, %334, %cst_152 [0] : vector<3x16x128xf32> to vector<16x128xf32>
    %cst_153 = arith.constant 0.000000e+00 : f32
    %336 = vector.broadcast %cst_153 : f32 to vector<16x128xf32>
    %337 = arith.subf %336, %335 : vector<16x128xf32>
    %c10_154 = arith.constant 10 : index
    %c0_155 = arith.constant 0 : index
    %c0_156 = arith.constant 0 : index
    %338 = vector.load %arg4[%c10_154, %c0_155, %c0_156] : memref<16x16x128xf32, #tpu.memory_space<vmem>>, vector<1x16x128xf32>
    %339 = vector.shape_cast %338 : vector<1x16x128xf32> to vector<16x128xf32>
    %340 = vector.shape_cast %337 : vector<16x128xf32> to vector<1x16x128xf32>
    tpu.vector_store %arg4[%c10_154, %c0_155, %c0_156], %340 {strides = array<i32>} : memref<16x16x128xf32, #tpu.memory_space<vmem>>, vector<1x16x128xf32>,
    %c11_157 = arith.constant 11 : index
    %c0_158 = arith.constant 0 : index
    %c0_159 = arith.constant 0 : index
    %c0_160 = arith.constant 0 : index
    %341 = vector.load %arg5[%c11_157, %c0_158, %c0_159, %c0_160] : memref<16x3x16x128xf32, #tpu.memory_space<vmem>>, vector<1x3x16x128xf32>
    %342 = vector.shape_cast %341 : vector<1x3x16x128xf32> to vector<3x16x128xf32>
    %343 = arith.mulf %342, %342 : vector<3x16x128xf32>
    %344 = arith.mulf %343, %230 : vector<3x16x128xf32>
    %cst_161 = arith.constant dense<0.000000e+00> : vector<16x128xf32>
    %345 = vector.multi_reduction <add>, %344, %cst_161 [0] : vector<3x16x128xf32> to vector<16x128xf32>
    %cst_162 = arith.constant 0.000000e+00 : f32
    %346 = vector.broadcast %cst_162 : f32 to vector<16x128xf32>
    %347 = arith.subf %346, %345 : vector<16x128xf32>
    %c11_163 = arith.constant 11 : index
    %c0_164 = arith.constant 0 : index
    %c0_165 = arith.constant 0 : index
    %348 = vector.load %arg4[%c11_163, %c0_164, %c0_165] : memref<16x16x128xf32, #tpu.memory_space<vmem>>, vector<1x16x128xf32>
    %349 = vector.shape_cast %348 : vector<1x16x128xf32> to vector<16x128xf32>
    %350 = vector.shape_cast %347 : vector<16x128xf32> to vector<1x16x128xf32>
    tpu.vector_store %arg4[%c11_163, %c0_164, %c0_165], %350 {strides = array<i32>} : memref<16x16x128xf32, #tpu.memory_space<vmem>>, vector<1x16x128xf32>,
    %c12_166 = arith.constant 12 : index
    %c0_167 = arith.constant 0 : index
    %c0_168 = arith.constant 0 : index
    %c0_169 = arith.constant 0 : index
    %351 = vector.load %arg5[%c12_166, %c0_167, %c0_168, %c0_169] : memref<16x3x16x128xf32, #tpu.memory_space<vmem>>, vector<1x3x16x128xf32>
    %352 = vector.shape_cast %351 : vector<1x3x16x128xf32> to vector<3x16x128xf32>
    %353 = arith.mulf %352, %352 : vector<3x16x128xf32>
    %354 = arith.mulf %353, %230 : vector<3x16x128xf32>
    %cst_170 = arith.constant dense<0.000000e+00> : vector<16x128xf32>
    %355 = vector.multi_reduction <add>, %354, %cst_170 [0] : vector<3x16x128xf32> to vector<16x128xf32>
    %cst_171 = arith.constant 0.000000e+00 : f32
    %356 = vector.broadcast %cst_171 : f32 to vector<16x128xf32>
    %357 = arith.subf %356, %355 : vector<16x128xf32>
    %c12_172 = arith.constant 12 : index
    %c0_173 = arith.constant 0 : index
    %c0_174 = arith.constant 0 : index
    %358 = vector.load %arg4[%c12_172, %c0_173, %c0_174] : memref<16x16x128xf32, #tpu.memory_space<vmem>>, vector<1x16x128xf32>
    %359 = vector.shape_cast %358 : vector<1x16x128xf32> to vector<16x128xf32>
    %360 = vector.shape_cast %357 : vector<16x128xf32> to vector<1x16x128xf32>
    tpu.vector_store %arg4[%c12_172, %c0_173, %c0_174], %360 {strides = array<i32>} : memref<16x16x128xf32, #tpu.memory_space<vmem>>, vector<1x16x128xf32>,
    %c13_175 = arith.constant 13 : index
    %c0_176 = arith.constant 0 : index
    %c0_177 = arith.constant 0 : index
    %c0_178 = arith.constant 0 : index
    %361 = vector.load %arg5[%c13_175, %c0_176, %c0_177, %c0_178] : memref<16x3x16x128xf32, #tpu.memory_space<vmem>>, vector<1x3x16x128xf32>
    %362 = vector.shape_cast %361 : vector<1x3x16x128xf32> to vector<3x16x128xf32>
    %363 = arith.mulf %362, %362 : vector<3x16x128xf32>
    %364 = arith.mulf %363, %230 : vector<3x16x128xf32>
    %cst_179 = arith.constant dense<0.000000e+00> : vector<16x128xf32>
    %365 = vector.multi_reduction <add>, %364, %cst_179 [0] : vector<3x16x128xf32> to vector<16x128xf32>
    %cst_180 = arith.constant 0.000000e+00 : f32
    %366 = vector.broadcast %cst_180 : f32 to vector<16x128xf32>
    %367 = arith.subf %366, %365 : vector<16x128xf32>
    %c13_181 = arith.constant 13 : index
    %c0_182 = arith.constant 0 : index
    %c0_183 = arith.constant 0 : index
    %368 = vector.load %arg4[%c13_181, %c0_182, %c0_183] : memref<16x16x128xf32, #tpu.memory_space<vmem>>, vector<1x16x128xf32>
    %369 = vector.shape_cast %368 : vector<1x16x128xf32> to vector<16x128xf32>
    %370 = vector.shape_cast %367 : vector<16x128xf32> to vector<1x16x128xf32>
    tpu.vector_store %arg4[%c13_181, %c0_182, %c0_183], %370 {strides = array<i32>} : memref<16x16x128xf32, #tpu.memory_space<vmem>>, vector<1x16x128xf32>,
    %c14_184 = arith.constant 14 : index
    %c0_185 = arith.constant 0 : index
    %c0_186 = arith.constant 0 : index
    %c0_187 = arith.constant 0 : index
    %371 = vector.load %arg5[%c14_184, %c0_185, %c0_186, %c0_187] : memref<16x3x16x128xf32, #tpu.memory_space<vmem>>, vector<1x3x16x128xf32>
    %372 = vector.shape_cast %371 : vector<1x3x16x128xf32> to vector<3x16x128xf32>
    %373 = arith.mulf %372, %372 : vector<3x16x128xf32>
    %374 = arith.mulf %373, %230 : vector<3x16x128xf32>
    %cst_188 = arith.constant dense<0.000000e+00> : vector<16x128xf32>
    %375 = vector.multi_reduction <add>, %374, %cst_188 [0] : vector<3x16x128xf32> to vector<16x128xf32>
    %cst_189 = arith.constant 0.000000e+00 : f32
    %376 = vector.broadcast %cst_189 : f32 to vector<16x128xf32>
    %377 = arith.subf %376, %375 : vector<16x128xf32>
    %c14_190 = arith.constant 14 : index
    %c0_191 = arith.constant 0 : index
    %c0_192 = arith.constant 0 : index
    %378 = vector.load %arg4[%c14_190, %c0_191, %c0_192] : memref<16x16x128xf32, #tpu.memory_space<vmem>>, vector<1x16x128xf32>
    %379 = vector.shape_cast %378 : vector<1x16x128xf32> to vector<16x128xf32>
    %380 = vector.shape_cast %377 : vector<16x128xf32> to vector<1x16x128xf32>
    tpu.vector_store %arg4[%c14_190, %c0_191, %c0_192], %380 {strides = array<i32>} : memref<16x16x128xf32, #tpu.memory_space<vmem>>, vector<1x16x128xf32>,
    %c15_193 = arith.constant 15 : index
    %c0_194 = arith.constant 0 : index
    %c0_195 = arith.constant 0 : index
    %c0_196 = arith.constant 0 : index
    %381 = vector.load %arg5[%c15_193, %c0_194, %c0_195, %c0_196] : memref<16x3x16x128xf32, #tpu.memory_space<vmem>>, vector<1x3x16x128xf32>
    %382 = vector.shape_cast %381 : vector<1x3x16x128xf32> to vector<3x16x128xf32>
    %383 = arith.mulf %382, %382 : vector<3x16x128xf32>
    %384 = arith.mulf %383, %230 : vector<3x16x128xf32>
    %cst_197 = arith.constant dense<0.000000e+00> : vector<16x128xf32>
    %385 = vector.multi_reduction <add>, %384, %cst_197 [0] : vector<3x16x128xf32> to vector<16x128xf32>
    %cst_198 = arith.constant 0.000000e+00 : f32
    %386 = vector.broadcast %cst_198 : f32 to vector<16x128xf32>
    %387 = arith.subf %386, %385 : vector<16x128xf32>
    %c15_199 = arith.constant 15 : index
    %c0_200 = arith.constant 0 : index
    %c0_201 = arith.constant 0 : index
    %388 = vector.load %arg4[%c15_199, %c0_200, %c0_201] : memref<16x16x128xf32, #tpu.memory_space<vmem>>, vector<1x16x128xf32>
    %389 = vector.shape_cast %388 : vector<1x16x128xf32> to vector<16x128xf32>
    %390 = vector.shape_cast %387 : vector<16x128xf32> to vector<1x16x128xf32>
    tpu.vector_store %arg4[%c15_199, %c0_200, %c0_201], %390 {strides = array<i32>} : memref<16x16x128xf32, #tpu.memory_space<vmem>>, vector<1x16x128xf32>,
    %c0_202 = arith.constant 0 : index
    %c0_203 = arith.constant 0 : index
    %c0_204 = arith.constant 0 : index
    %391 = vector.load %arg4[%c0_202, %c0_203, %c0_204] : memref<16x16x128xf32, #tpu.memory_space<vmem>>, vector<1x16x128xf32>
    %392 = vector.shape_cast %391 : vector<1x16x128xf32> to vector<16x128xf32>
    %c1_205 = arith.constant 1 : index
    %c0_206 = arith.constant 0 : index
    %c0_207 = arith.constant 0 : index
    %393 = vector.load %arg4[%c1_205, %c0_206, %c0_207] : memref<16x16x128xf32, #tpu.memory_space<vmem>>, vector<1x16x128xf32>
    %394 = vector.shape_cast %393 : vector<1x16x128xf32> to vector<16x128xf32>
    %395 = arith.maximumf %392, %394 : vector<16x128xf32>
    %c2_208 = arith.constant 2 : index
    %c0_209 = arith.constant 0 : index
    %c0_210 = arith.constant 0 : index
    %396 = vector.load %arg4[%c2_208, %c0_209, %c0_210] : memref<16x16x128xf32, #tpu.memory_space<vmem>>, vector<1x16x128xf32>
    %397 = vector.shape_cast %396 : vector<1x16x128xf32> to vector<16x128xf32>
    %398 = arith.maximumf %395, %397 : vector<16x128xf32>
    %c3_211 = arith.constant 3 : index
    %c0_212 = arith.constant 0 : index
    %c0_213 = arith.constant 0 : index
    %399 = vector.load %arg4[%c3_211, %c0_212, %c0_213] : memref<16x16x128xf32, #tpu.memory_space<vmem>>, vector<1x16x128xf32>
    %400 = vector.shape_cast %399 : vector<1x16x128xf32> to vector<16x128xf32>
    %401 = arith.maximumf %398, %400 : vector<16x128xf32>
    %c4_214 = arith.constant 4 : index
    %c0_215 = arith.constant 0 : index
    %c0_216 = arith.constant 0 : index
    %402 = vector.load %arg4[%c4_214, %c0_215, %c0_216] : memref<16x16x128xf32, #tpu.memory_space<vmem>>, vector<1x16x128xf32>
    %403 = vector.shape_cast %402 : vector<1x16x128xf32> to vector<16x128xf32>
    %404 = arith.maximumf %401, %403 : vector<16x128xf32>
    %c5_217 = arith.constant 5 : index
    %c0_218 = arith.constant 0 : index
    %c0_219 = arith.constant 0 : index
    %405 = vector.load %arg4[%c5_217, %c0_218, %c0_219] : memref<16x16x128xf32, #tpu.memory_space<vmem>>, vector<1x16x128xf32>
    %406 = vector.shape_cast %405 : vector<1x16x128xf32> to vector<16x128xf32>
    %407 = arith.maximumf %404, %406 : vector<16x128xf32>
    %c6_220 = arith.constant 6 : index
    %c0_221 = arith.constant 0 : index
    %c0_222 = arith.constant 0 : index
    %408 = vector.load %arg4[%c6_220, %c0_221, %c0_222] : memref<16x16x128xf32, #tpu.memory_space<vmem>>, vector<1x16x128xf32>
    %409 = vector.shape_cast %408 : vector<1x16x128xf32> to vector<16x128xf32>
    %410 = arith.maximumf %407, %409 : vector<16x128xf32>
    %c7_223 = arith.constant 7 : index
    %c0_224 = arith.constant 0 : index
    %c0_225 = arith.constant 0 : index
    %411 = vector.load %arg4[%c7_223, %c0_224, %c0_225] : memref<16x16x128xf32, #tpu.memory_space<vmem>>, vector<1x16x128xf32>
    %412 = vector.shape_cast %411 : vector<1x16x128xf32> to vector<16x128xf32>
    %413 = arith.maximumf %410, %412 : vector<16x128xf32>
    %c8_226 = arith.constant 8 : index
    %c0_227 = arith.constant 0 : index
    %c0_228 = arith.constant 0 : index
    %414 = vector.load %arg4[%c8_226, %c0_227, %c0_228] : memref<16x16x128xf32, #tpu.memory_space<vmem>>, vector<1x16x128xf32>
    %415 = vector.shape_cast %414 : vector<1x16x128xf32> to vector<16x128xf32>
    %416 = arith.maximumf %413, %415 : vector<16x128xf32>
    %c9_229 = arith.constant 9 : index
    %c0_230 = arith.constant 0 : index
    %c0_231 = arith.constant 0 : index
    %417 = vector.load %arg4[%c9_229, %c0_230, %c0_231] : memref<16x16x128xf32, #tpu.memory_space<vmem>>, vector<1x16x128xf32>
    %418 = vector.shape_cast %417 : vector<1x16x128xf32> to vector<16x128xf32>
    %419 = arith.maximumf %416, %418 : vector<16x128xf32>
    %c10_232 = arith.constant 10 : index
    %c0_233 = arith.constant 0 : index
    %c0_234 = arith.constant 0 : index
    %420 = vector.load %arg4[%c10_232, %c0_233, %c0_234] : memref<16x16x128xf32, #tpu.memory_space<vmem>>, vector<1x16x128xf32>
    %421 = vector.shape_cast %420 : vector<1x16x128xf32> to vector<16x128xf32>
    %422 = arith.maximumf %419, %421 : vector<16x128xf32>
    %c11_235 = arith.constant 11 : index
    %c0_236 = arith.constant 0 : index
    %c0_237 = arith.constant 0 : index
    %423 = vector.load %arg4[%c11_235, %c0_236, %c0_237] : memref<16x16x128xf32, #tpu.memory_space<vmem>>, vector<1x16x128xf32>
    %424 = vector.shape_cast %423 : vector<1x16x128xf32> to vector<16x128xf32>
    %425 = arith.maximumf %422, %424 : vector<16x128xf32>
    %c12_238 = arith.constant 12 : index
    %c0_239 = arith.constant 0 : index
    %c0_240 = arith.constant 0 : index
    %426 = vector.load %arg4[%c12_238, %c0_239, %c0_240] : memref<16x16x128xf32, #tpu.memory_space<vmem>>, vector<1x16x128xf32>
    %427 = vector.shape_cast %426 : vector<1x16x128xf32> to vector<16x128xf32>
    %428 = arith.maximumf %425, %427 : vector<16x128xf32>
    %c13_241 = arith.constant 13 : index
    %c0_242 = arith.constant 0 : index
    %c0_243 = arith.constant 0 : index
    %429 = vector.load %arg4[%c13_241, %c0_242, %c0_243] : memref<16x16x128xf32, #tpu.memory_space<vmem>>, vector<1x16x128xf32>
    %430 = vector.shape_cast %429 : vector<1x16x128xf32> to vector<16x128xf32>
    %431 = arith.maximumf %428, %430 : vector<16x128xf32>
    %c14_244 = arith.constant 14 : index
    %c0_245 = arith.constant 0 : index
    %c0_246 = arith.constant 0 : index
    %432 = vector.load %arg4[%c14_244, %c0_245, %c0_246] : memref<16x16x128xf32, #tpu.memory_space<vmem>>, vector<1x16x128xf32>
    %433 = vector.shape_cast %432 : vector<1x16x128xf32> to vector<16x128xf32>
    %434 = arith.maximumf %431, %433 : vector<16x128xf32>
    %c15_247 = arith.constant 15 : index
    %c0_248 = arith.constant 0 : index
    %c0_249 = arith.constant 0 : index
    %435 = vector.load %arg4[%c15_247, %c0_248, %c0_249] : memref<16x16x128xf32, #tpu.memory_space<vmem>>, vector<1x16x128xf32>
    %436 = vector.shape_cast %435 : vector<1x16x128xf32> to vector<16x128xf32>
    %437 = arith.maximumf %434, %436 : vector<16x128xf32>
    %c0_250 = arith.constant 0 : index
    %c0_251 = arith.constant 0 : index
    %c0_252 = arith.constant 0 : index
    %438 = vector.load %arg4[%c0_250, %c0_251, %c0_252] : memref<16x16x128xf32, #tpu.memory_space<vmem>>, vector<1x16x128xf32>
    %439 = vector.shape_cast %438 : vector<1x16x128xf32> to vector<16x128xf32>
    %440 = arith.subf %439, %437 : vector<16x128xf32>
    %441 = math.exp %440 : vector<16x128xf32>
    %c1_253 = arith.constant 1 : index
    %c0_254 = arith.constant 0 : index
    %c0_255 = arith.constant 0 : index
    %442 = vector.load %arg4[%c1_253, %c0_254, %c0_255] : memref<16x16x128xf32, #tpu.memory_space<vmem>>, vector<1x16x128xf32>
    %443 = vector.shape_cast %442 : vector<1x16x128xf32> to vector<16x128xf32>
    %444 = arith.subf %443, %437 : vector<16x128xf32>
    %445 = math.exp %444 : vector<16x128xf32>
    %446 = arith.addf %441, %445 : vector<16x128xf32>
    %c2_256 = arith.constant 2 : index
    %c0_257 = arith.constant 0 : index
    %c0_258 = arith.constant 0 : index
    %447 = vector.load %arg4[%c2_256, %c0_257, %c0_258] : memref<16x16x128xf32, #tpu.memory_space<vmem>>, vector<1x16x128xf32>
    %448 = vector.shape_cast %447 : vector<1x16x128xf32> to vector<16x128xf32>
    %449 = arith.subf %448, %437 : vector<16x128xf32>
    %450 = math.exp %449 : vector<16x128xf32>
    %451 = arith.addf %446, %450 : vector<16x128xf32>
    %c3_259 = arith.constant 3 : index
    %c0_260 = arith.constant 0 : index
    %c0_261 = arith.constant 0 : index
    %452 = vector.load %arg4[%c3_259, %c0_260, %c0_261] : memref<16x16x128xf32, #tpu.memory_space<vmem>>, vector<1x16x128xf32>
    %453 = vector.shape_cast %452 : vector<1x16x128xf32> to vector<16x128xf32>
    %454 = arith.subf %453, %437 : vector<16x128xf32>
    %455 = math.exp %454 : vector<16x128xf32>
    %456 = arith.addf %451, %455 : vector<16x128xf32>
    %c4_262 = arith.constant 4 : index
    %c0_263 = arith.constant 0 : index
    %c0_264 = arith.constant 0 : index
    %457 = vector.load %arg4[%c4_262, %c0_263, %c0_264] : memref<16x16x128xf32, #tpu.memory_space<vmem>>, vector<1x16x128xf32>
    %458 = vector.shape_cast %457 : vector<1x16x128xf32> to vector<16x128xf32>
    %459 = arith.subf %458, %437 : vector<16x128xf32>
    %460 = math.exp %459 : vector<16x128xf32>
    %461 = arith.addf %456, %460 : vector<16x128xf32>
    %c5_265 = arith.constant 5 : index
    %c0_266 = arith.constant 0 : index
    %c0_267 = arith.constant 0 : index
    %462 = vector.load %arg4[%c5_265, %c0_266, %c0_267] : memref<16x16x128xf32, #tpu.memory_space<vmem>>, vector<1x16x128xf32>
    %463 = vector.shape_cast %462 : vector<1x16x128xf32> to vector<16x128xf32>
    %464 = arith.subf %463, %437 : vector<16x128xf32>
    %465 = math.exp %464 : vector<16x128xf32>
    %466 = arith.addf %461, %465 : vector<16x128xf32>
    %c6_268 = arith.constant 6 : index
    %c0_269 = arith.constant 0 : index
    %c0_270 = arith.constant 0 : index
    %467 = vector.load %arg4[%c6_268, %c0_269, %c0_270] : memref<16x16x128xf32, #tpu.memory_space<vmem>>, vector<1x16x128xf32>
    %468 = vector.shape_cast %467 : vector<1x16x128xf32> to vector<16x128xf32>
    %469 = arith.subf %468, %437 : vector<16x128xf32>
    %470 = math.exp %469 : vector<16x128xf32>
    %471 = arith.addf %466, %470 : vector<16x128xf32>
    %c7_271 = arith.constant 7 : index
    %c0_272 = arith.constant 0 : index
    %c0_273 = arith.constant 0 : index
    %472 = vector.load %arg4[%c7_271, %c0_272, %c0_273] : memref<16x16x128xf32, #tpu.memory_space<vmem>>, vector<1x16x128xf32>
    %473 = vector.shape_cast %472 : vector<1x16x128xf32> to vector<16x128xf32>
    %474 = arith.subf %473, %437 : vector<16x128xf32>
    %475 = math.exp %474 : vector<16x128xf32>
    %476 = arith.addf %471, %475 : vector<16x128xf32>
    %c8_274 = arith.constant 8 : index
    %c0_275 = arith.constant 0 : index
    %c0_276 = arith.constant 0 : index
    %477 = vector.load %arg4[%c8_274, %c0_275, %c0_276] : memref<16x16x128xf32, #tpu.memory_space<vmem>>, vector<1x16x128xf32>
    %478 = vector.shape_cast %477 : vector<1x16x128xf32> to vector<16x128xf32>
    %479 = arith.subf %478, %437 : vector<16x128xf32>
    %480 = math.exp %479 : vector<16x128xf32>
    %481 = arith.addf %476, %480 : vector<16x128xf32>
    %c9_277 = arith.constant 9 : index
    %c0_278 = arith.constant 0 : index
    %c0_279 = arith.constant 0 : index
    %482 = vector.load %arg4[%c9_277, %c0_278, %c0_279] : memref<16x16x128xf32, #tpu.memory_space<vmem>>, vector<1x16x128xf32>
    %483 = vector.shape_cast %482 : vector<1x16x128xf32> to vector<16x128xf32>
    %484 = arith.subf %483, %437 : vector<16x128xf32>
    %485 = math.exp %484 : vector<16x128xf32>
    %486 = arith.addf %481, %485 : vector<16x128xf32>
    %c10_280 = arith.constant 10 : index
    %c0_281 = arith.constant 0 : index
    %c0_282 = arith.constant 0 : index
    %487 = vector.load %arg4[%c10_280, %c0_281, %c0_282] : memref<16x16x128xf32, #tpu.memory_space<vmem>>, vector<1x16x128xf32>
    %488 = vector.shape_cast %487 : vector<1x16x128xf32> to vector<16x128xf32>
    %489 = arith.subf %488, %437 : vector<16x128xf32>
    %490 = math.exp %489 : vector<16x128xf32>
    %491 = arith.addf %486, %490 : vector<16x128xf32>
    %c11_283 = arith.constant 11 : index
    %c0_284 = arith.constant 0 : index
    %c0_285 = arith.constant 0 : index
    %492 = vector.load %arg4[%c11_283, %c0_284, %c0_285] : memref<16x16x128xf32, #tpu.memory_space<vmem>>, vector<1x16x128xf32>
    %493 = vector.shape_cast %492 : vector<1x16x128xf32> to vector<16x128xf32>
    %494 = arith.subf %493, %437 : vector<16x128xf32>
    %495 = math.exp %494 : vector<16x128xf32>
    %496 = arith.addf %491, %495 : vector<16x128xf32>
    %c12_286 = arith.constant 12 : index
    %c0_287 = arith.constant 0 : index
    %c0_288 = arith.constant 0 : index
    %497 = vector.load %arg4[%c12_286, %c0_287, %c0_288] : memref<16x16x128xf32, #tpu.memory_space<vmem>>, vector<1x16x128xf32>
    %498 = vector.shape_cast %497 : vector<1x16x128xf32> to vector<16x128xf32>
    %499 = arith.subf %498, %437 : vector<16x128xf32>
    %500 = math.exp %499 : vector<16x128xf32>
    %501 = arith.addf %496, %500 : vector<16x128xf32>
    %c13_289 = arith.constant 13 : index
    %c0_290 = arith.constant 0 : index
    %c0_291 = arith.constant 0 : index
    %502 = vector.load %arg4[%c13_289, %c0_290, %c0_291] : memref<16x16x128xf32, #tpu.memory_space<vmem>>, vector<1x16x128xf32>
    %503 = vector.shape_cast %502 : vector<1x16x128xf32> to vector<16x128xf32>
    %504 = arith.subf %503, %437 : vector<16x128xf32>
    %505 = math.exp %504 : vector<16x128xf32>
    %506 = arith.addf %501, %505 : vector<16x128xf32>
    %c14_292 = arith.constant 14 : index
    %c0_293 = arith.constant 0 : index
    %c0_294 = arith.constant 0 : index
    %507 = vector.load %arg4[%c14_292, %c0_293, %c0_294] : memref<16x16x128xf32, #tpu.memory_space<vmem>>, vector<1x16x128xf32>
    %508 = vector.shape_cast %507 : vector<1x16x128xf32> to vector<16x128xf32>
    %509 = arith.subf %508, %437 : vector<16x128xf32>
    %510 = math.exp %509 : vector<16x128xf32>
    %511 = arith.addf %506, %510 : vector<16x128xf32>
    %c15_295 = arith.constant 15 : index
    %c0_296 = arith.constant 0 : index
    %c0_297 = arith.constant 0 : index
    %512 = vector.load %arg4[%c15_295, %c0_296, %c0_297] : memref<16x16x128xf32, #tpu.memory_space<vmem>>, vector<1x16x128xf32>
    %513 = vector.shape_cast %512 : vector<1x16x128xf32> to vector<16x128xf32>
    %514 = arith.subf %513, %437 : vector<16x128xf32>
    %515 = math.exp %514 : vector<16x128xf32>
    %516 = arith.addf %511, %515 : vector<16x128xf32>
    %517 = math.log %516 : vector<16x128xf32>
    %518 = arith.addf %437, %517 : vector<16x128xf32>
    %c0_298 = arith.constant 0 : index
    %c0_299 = arith.constant 0 : index
    %c0_300 = arith.constant 0 : index
    %519 = vector.load %arg4[%c0_298, %c0_299, %c0_300] : memref<16x16x128xf32, #tpu.memory_space<vmem>>, vector<1x16x128xf32>
    %520 = vector.shape_cast %519 : vector<1x16x128xf32> to vector<16x128xf32>
    %521 = arith.subf %520, %518 : vector<16x128xf32>
    %522 = math.exp %521 : vector<16x128xf32>
    %cst_301 = arith.constant 6.359744E-13 : f32
    %523 = vector.broadcast %cst_301 : f32 to vector<16x128xf32>
    %524 = arith.addf %522, %523 : vector<16x128xf32>
    %c0_302 = arith.constant 0 : index
    %c0_303 = arith.constant 0 : index
    %c0_304 = arith.constant 0 : index
    %525 = vector.load %arg4[%c0_302, %c0_303, %c0_304] : memref<16x16x128xf32, #tpu.memory_space<vmem>>, vector<1x16x128xf32>
    %526 = vector.shape_cast %525 : vector<1x16x128xf32> to vector<16x128xf32>
    %527 = vector.shape_cast %524 : vector<16x128xf32> to vector<1x16x128xf32>
    tpu.vector_store %arg4[%c0_302, %c0_303, %c0_304], %527 {strides = array<i32>} : memref<16x16x128xf32, #tpu.memory_space<vmem>>, vector<1x16x128xf32>,
    %c1_305 = arith.constant 1 : index
    %c0_306 = arith.constant 0 : index
    %c0_307 = arith.constant 0 : index
    %528 = vector.load %arg4[%c1_305, %c0_306, %c0_307] : memref<16x16x128xf32, #tpu.memory_space<vmem>>, vector<1x16x128xf32>
    %529 = vector.shape_cast %528 : vector<1x16x128xf32> to vector<16x128xf32>
    %530 = arith.subf %529, %518 : vector<16x128xf32>
    %531 = math.exp %530 : vector<16x128xf32>
    %cst_308 = arith.constant 2.500000e-03 : f32
    %532 = vector.broadcast %cst_308 : f32 to vector<16x128xf32>
    %533 = arith.addf %531, %532 : vector<16x128xf32>
    %c1_309 = arith.constant 1 : index
    %c0_310 = arith.constant 0 : index
    %c0_311 = arith.constant 0 : index
    %534 = vector.load %arg4[%c1_309, %c0_310, %c0_311] : memref<16x16x128xf32, #tpu.memory_space<vmem>>, vector<1x16x128xf32>
    %535 = vector.shape_cast %534 : vector<1x16x128xf32> to vector<16x128xf32>
    %536 = vector.shape_cast %533 : vector<16x128xf32> to vector<1x16x128xf32>
    tpu.vector_store %arg4[%c1_309, %c0_310, %c0_311], %536 {strides = array<i32>} : memref<16x16x128xf32, #tpu.memory_space<vmem>>, vector<1x16x128xf32>,
    %c2_312 = arith.constant 2 : index
    %c0_313 = arith.constant 0 : index
    %c0_314 = arith.constant 0 : index
    %537 = vector.load %arg4[%c2_312, %c0_313, %c0_314] : memref<16x16x128xf32, #tpu.memory_space<vmem>>, vector<1x16x128xf32>
    %538 = vector.shape_cast %537 : vector<1x16x128xf32> to vector<16x128xf32>
    %539 = arith.subf %538, %518 : vector<16x128xf32>
    %540 = math.exp %539 : vector<16x128xf32>
    %cst_315 = arith.constant 6.359744E-13 : f32
    %541 = vector.broadcast %cst_315 : f32 to vector<16x128xf32>
    %542 = arith.addf %540, %541 : vector<16x128xf32>
    %c2_316 = arith.constant 2 : index
    %c0_317 = arith.constant 0 : index
    %c0_318 = arith.constant 0 : index
    %543 = vector.load %arg4[%c2_316, %c0_317, %c0_318] : memref<16x16x128xf32, #tpu.memory_space<vmem>>, vector<1x16x128xf32>
    %544 = vector.shape_cast %543 : vector<1x16x128xf32> to vector<16x128xf32>
    %545 = vector.shape_cast %542 : vector<16x128xf32> to vector<1x16x128xf32>
    tpu.vector_store %arg4[%c2_316, %c0_317, %c0_318], %545 {strides = array<i32>} : memref<16x16x128xf32, #tpu.memory_space<vmem>>, vector<1x16x128xf32>,
    %c3_319 = arith.constant 3 : index
    %c0_320 = arith.constant 0 : index
    %c0_321 = arith.constant 0 : index
    %546 = vector.load %arg4[%c3_319, %c0_320, %c0_321] : memref<16x16x128xf32, #tpu.memory_space<vmem>>, vector<1x16x128xf32>
    %547 = vector.shape_cast %546 : vector<1x16x128xf32> to vector<16x128xf32>
    %548 = arith.subf %547, %518 : vector<16x128xf32>
    %549 = math.exp %548 : vector<16x128xf32>
    %cst_322 = arith.constant 2.500000e-03 : f32
    %550 = vector.broadcast %cst_322 : f32 to vector<16x128xf32>
    %551 = arith.addf %549, %550 : vector<16x128xf32>
    %c3_323 = arith.constant 3 : index
    %c0_324 = arith.constant 0 : index
    %c0_325 = arith.constant 0 : index
    %552 = vector.load %arg4[%c3_323, %c0_324, %c0_325] : memref<16x16x128xf32, #tpu.memory_space<vmem>>, vector<1x16x128xf32>
    %553 = vector.shape_cast %552 : vector<1x16x128xf32> to vector<16x128xf32>
    %554 = vector.shape_cast %551 : vector<16x128xf32> to vector<1x16x128xf32>
    tpu.vector_store %arg4[%c3_323, %c0_324, %c0_325], %554 {strides = array<i32>} : memref<16x16x128xf32, #tpu.memory_space<vmem>>, vector<1x16x128xf32>,
    %c4_326 = arith.constant 4 : index
    %c0_327 = arith.constant 0 : index
    %c0_328 = arith.constant 0 : index
    %555 = vector.load %arg4[%c4_326, %c0_327, %c0_328] : memref<16x16x128xf32, #tpu.memory_space<vmem>>, vector<1x16x128xf32>
    %556 = vector.shape_cast %555 : vector<1x16x128xf32> to vector<16x128xf32>
    %557 = arith.subf %556, %518 : vector<16x128xf32>
    %558 = math.exp %557 : vector<16x128xf32>
    %cst_329 = arith.constant 2.500000e-03 : f32
    %559 = vector.broadcast %cst_329 : f32 to vector<16x128xf32>
    %560 = arith.addf %558, %559 : vector<16x128xf32>
    %c4_330 = arith.constant 4 : index
    %c0_331 = arith.constant 0 : index
    %c0_332 = arith.constant 0 : index
    %561 = vector.load %arg4[%c4_330, %c0_331, %c0_332] : memref<16x16x128xf32, #tpu.memory_space<vmem>>, vector<1x16x128xf32>
    %562 = vector.shape_cast %561 : vector<1x16x128xf32> to vector<16x128xf32>
    %563 = vector.shape_cast %560 : vector<16x128xf32> to vector<1x16x128xf32>
    tpu.vector_store %arg4[%c4_330, %c0_331, %c0_332], %563 {strides = array<i32>} : memref<16x16x128xf32, #tpu.memory_space<vmem>>, vector<1x16x128xf32>,
    %c5_333 = arith.constant 5 : index
    %c0_334 = arith.constant 0 : index
    %c0_335 = arith.constant 0 : index
    %564 = vector.load %arg4[%c5_333, %c0_334, %c0_335] : memref<16x16x128xf32, #tpu.memory_space<vmem>>, vector<1x16x128xf32>
    %565 = vector.shape_cast %564 : vector<1x16x128xf32> to vector<16x128xf32>
    %566 = arith.subf %565, %518 : vector<16x128xf32>
    %567 = math.exp %566 : vector<16x128xf32>
    %cst_336 = arith.constant 6.359744E-13 : f32
    %568 = vector.broadcast %cst_336 : f32 to vector<16x128xf32>
    %569 = arith.addf %567, %568 : vector<16x128xf32>
    %c5_337 = arith.constant 5 : index
    %c0_338 = arith.constant 0 : index
    %c0_339 = arith.constant 0 : index
    %570 = vector.load %arg4[%c5_337, %c0_338, %c0_339] : memref<16x16x128xf32, #tpu.memory_space<vmem>>, vector<1x16x128xf32>
    %571 = vector.shape_cast %570 : vector<1x16x128xf32> to vector<16x128xf32>
    %572 = vector.shape_cast %569 : vector<16x128xf32> to vector<1x16x128xf32>
    tpu.vector_store %arg4[%c5_337, %c0_338, %c0_339], %572 {strides = array<i32>} : memref<16x16x128xf32, #tpu.memory_space<vmem>>, vector<1x16x128xf32>,
    %c6_340 = arith.constant 6 : index
    %c0_341 = arith.constant 0 : index
    %c0_342 = arith.constant 0 : index
    %573 = vector.load %arg4[%c6_340, %c0_341, %c0_342] : memref<16x16x128xf32, #tpu.memory_space<vmem>>, vector<1x16x128xf32>
    %574 = vector.shape_cast %573 : vector<1x16x128xf32> to vector<16x128xf32>
    %575 = arith.subf %574, %518 : vector<16x128xf32>
    %576 = math.exp %575 : vector<16x128xf32>
    %cst_343 = arith.constant 2.500000e-03 : f32
    %577 = vector.broadcast %cst_343 : f32 to vector<16x128xf32>
    %578 = arith.addf %576, %577 : vector<16x128xf32>
    %c6_344 = arith.constant 6 : index
    %c0_345 = arith.constant 0 : index
    %c0_346 = arith.constant 0 : index
    %579 = vector.load %arg4[%c6_344, %c0_345, %c0_346] : memref<16x16x128xf32, #tpu.memory_space<vmem>>, vector<1x16x128xf32>
    %580 = vector.shape_cast %579 : vector<1x16x128xf32> to vector<16x128xf32>
    %581 = vector.shape_cast %578 : vector<16x128xf32> to vector<1x16x128xf32>
    tpu.vector_store %arg4[%c6_344, %c0_345, %c0_346], %581 {strides = array<i32>} : memref<16x16x128xf32, #tpu.memory_space<vmem>>, vector<1x16x128xf32>,
    %c7_347 = arith.constant 7 : index
    %c0_348 = arith.constant 0 : index
    %c0_349 = arith.constant 0 : index
    %582 = vector.load %arg4[%c7_347, %c0_348, %c0_349] : memref<16x16x128xf32, #tpu.memory_space<vmem>>, vector<1x16x128xf32>
    %583 = vector.shape_cast %582 : vector<1x16x128xf32> to vector<16x128xf32>
    %584 = arith.subf %583, %518 : vector<16x128xf32>
    %585 = math.exp %584 : vector<16x128xf32>
    %cst_350 = arith.constant 6.359744E-13 : f32
    %586 = vector.broadcast %cst_350 : f32 to vector<16x128xf32>
    %587 = arith.addf %585, %586 : vector<16x128xf32>
    %c7_351 = arith.constant 7 : index
    %c0_352 = arith.constant 0 : index
    %c0_353 = arith.constant 0 : index
    %588 = vector.load %arg4[%c7_351, %c0_352, %c0_353] : memref<16x16x128xf32, #tpu.memory_space<vmem>>, vector<1x16x128xf32>
    %589 = vector.shape_cast %588 : vector<1x16x128xf32> to vector<16x128xf32>
    %590 = vector.shape_cast %587 : vector<16x128xf32> to vector<1x16x128xf32>
    tpu.vector_store %arg4[%c7_351, %c0_352, %c0_353], %590 {strides = array<i32>} : memref<16x16x128xf32, #tpu.memory_space<vmem>>, vector<1x16x128xf32>,
    %c8_354 = arith.constant 8 : index
    %c0_355 = arith.constant 0 : index
    %c0_356 = arith.constant 0 : index
    %591 = vector.load %arg4[%c8_354, %c0_355, %c0_356] : memref<16x16x128xf32, #tpu.memory_space<vmem>>, vector<1x16x128xf32>
    %592 = vector.shape_cast %591 : vector<1x16x128xf32> to vector<16x128xf32>
    %593 = arith.subf %592, %518 : vector<16x128xf32>
    %594 = math.exp %593 : vector<16x128xf32>
    %cst_357 = arith.constant 0.000000e+00 : f32
    %595 = vector.broadcast %cst_357 : f32 to vector<16x128xf32>
    %596 = arith.addf %594, %595 : vector<16x128xf32>
    %c8_358 = arith.constant 8 : index
    %c0_359 = arith.constant 0 : index
    %c0_360 = arith.constant 0 : index
    %597 = vector.load %arg4[%c8_358, %c0_359, %c0_360] : memref<16x16x128xf32, #tpu.memory_space<vmem>>, vector<1x16x128xf32>
    %598 = vector.shape_cast %597 : vector<1x16x128xf32> to vector<16x128xf32>
    %599 = vector.shape_cast %596 : vector<16x128xf32> to vector<1x16x128xf32>
    tpu.vector_store %arg4[%c8_358, %c0_359, %c0_360], %599 {strides = array<i32>} : memref<16x16x128xf32, #tpu.memory_space<vmem>>, vector<1x16x128xf32>,
    %c9_361 = arith.constant 9 : index
    %c0_362 = arith.constant 0 : index
    %c0_363 = arith.constant 0 : index
    %600 = vector.load %arg4[%c9_361, %c0_362, %c0_363] : memref<16x16x128xf32, #tpu.memory_space<vmem>>, vector<1x16x128xf32>
    %601 = vector.shape_cast %600 : vector<1x16x128xf32> to vector<16x128xf32>
    %602 = arith.subf %601, %518 : vector<16x128xf32>
    %603 = math.exp %602 : vector<16x128xf32>
    %cst_364 = arith.constant 4.11566169E-32 : f32
    %604 = vector.broadcast %cst_364 : f32 to vector<16x128xf32>
    %605 = arith.addf %603, %604 : vector<16x128xf32>
    %c9_365 = arith.constant 9 : index
    %c0_366 = arith.constant 0 : index
    %c0_367 = arith.constant 0 : index
    %606 = vector.load %arg4[%c9_365, %c0_366, %c0_367] : memref<16x16x128xf32, #tpu.memory_space<vmem>>, vector<1x16x128xf32>
    %607 = vector.shape_cast %606 : vector<1x16x128xf32> to vector<16x128xf32>
    %608 = vector.shape_cast %605 : vector<16x128xf32> to vector<1x16x128xf32>
    tpu.vector_store %arg4[%c9_365, %c0_366, %c0_367], %608 {strides = array<i32>} : memref<16x16x128xf32, #tpu.memory_space<vmem>>, vector<1x16x128xf32>,
    %c10_368 = arith.constant 10 : index
    %c0_369 = arith.constant 0 : index
    %c0_370 = arith.constant 0 : index
    %609 = vector.load %arg4[%c10_368, %c0_369, %c0_370] : memref<16x16x128xf32, #tpu.memory_space<vmem>>, vector<1x16x128xf32>
    %610 = vector.shape_cast %609 : vector<1x16x128xf32> to vector<16x128xf32>
    %611 = arith.subf %610, %518 : vector<16x128xf32>
    %612 = math.exp %611 : vector<16x128xf32>
    %cst_371 = arith.constant 0.000000e+00 : f32
    %613 = vector.broadcast %cst_371 : f32 to vector<16x128xf32>
    %614 = arith.addf %612, %613 : vector<16x128xf32>
    %c10_372 = arith.constant 10 : index
    %c0_373 = arith.constant 0 : index
    %c0_374 = arith.constant 0 : index
    %615 = vector.load %arg4[%c10_372, %c0_373, %c0_374] : memref<16x16x128xf32, #tpu.memory_space<vmem>>, vector<1x16x128xf32>
    %616 = vector.shape_cast %615 : vector<1x16x128xf32> to vector<16x128xf32>
    %617 = vector.shape_cast %614 : vector<16x128xf32> to vector<1x16x128xf32>
    tpu.vector_store %arg4[%c10_372, %c0_373, %c0_374], %617 {strides = array<i32>} : memref<16x16x128xf32, #tpu.memory_space<vmem>>, vector<1x16x128xf32>,
    %c11_375 = arith.constant 11 : index
    %c0_376 = arith.constant 0 : index
    %c0_377 = arith.constant 0 : index
    %618 = vector.load %arg4[%c11_375, %c0_376, %c0_377] : memref<16x16x128xf32, #tpu.memory_space<vmem>>, vector<1x16x128xf32>
    %619 = vector.shape_cast %618 : vector<1x16x128xf32> to vector<16x128xf32>
    %620 = arith.subf %619, %518 : vector<16x128xf32>
    %621 = math.exp %620 : vector<16x128xf32>
    %cst_378 = arith.constant 4.11566169E-32 : f32
    %622 = vector.broadcast %cst_378 : f32 to vector<16x128xf32>
    %623 = arith.addf %621, %622 : vector<16x128xf32>
    %c11_379 = arith.constant 11 : index
    %c0_380 = arith.constant 0 : index
    %c0_381 = arith.constant 0 : index
    %624 = vector.load %arg4[%c11_379, %c0_380, %c0_381] : memref<16x16x128xf32, #tpu.memory_space<vmem>>, vector<1x16x128xf32>
    %625 = vector.shape_cast %624 : vector<1x16x128xf32> to vector<16x128xf32>
    %626 = vector.shape_cast %623 : vector<16x128xf32> to vector<1x16x128xf32>
    tpu.vector_store %arg4[%c11_379, %c0_380, %c0_381], %626 {strides = array<i32>} : memref<16x16x128xf32, #tpu.memory_space<vmem>>, vector<1x16x128xf32>,
    %c12_382 = arith.constant 12 : index
    %c0_383 = arith.constant 0 : index
    %c0_384 = arith.constant 0 : index
    %627 = vector.load %arg4[%c12_382, %c0_383, %c0_384] : memref<16x16x128xf32, #tpu.memory_space<vmem>>, vector<1x16x128xf32>
    %628 = vector.shape_cast %627 : vector<1x16x128xf32> to vector<16x128xf32>
    %629 = arith.subf %628, %518 : vector<16x128xf32>
    %630 = math.exp %629 : vector<16x128xf32>
    %cst_385 = arith.constant 4.11566169E-32 : f32
    %631 = vector.broadcast %cst_385 : f32 to vector<16x128xf32>
    %632 = arith.addf %630, %631 : vector<16x128xf32>
    %c12_386 = arith.constant 12 : index
    %c0_387 = arith.constant 0 : index
    %c0_388 = arith.constant 0 : index
    %633 = vector.load %arg4[%c12_386, %c0_387, %c0_388] : memref<16x16x128xf32, #tpu.memory_space<vmem>>, vector<1x16x128xf32>
    %634 = vector.shape_cast %633 : vector<1x16x128xf32> to vector<16x128xf32>
    %635 = vector.shape_cast %632 : vector<16x128xf32> to vector<1x16x128xf32>
    tpu.vector_store %arg4[%c12_386, %c0_387, %c0_388], %635 {strides = array<i32>} : memref<16x16x128xf32, #tpu.memory_space<vmem>>, vector<1x16x128xf32>,
    %c13_389 = arith.constant 13 : index
    %c0_390 = arith.constant 0 : index
    %c0_391 = arith.constant 0 : index
    %636 = vector.load %arg4[%c13_389, %c0_390, %c0_391] : memref<16x16x128xf32, #tpu.memory_space<vmem>>, vector<1x16x128xf32>
    %637 = vector.shape_cast %636 : vector<1x16x128xf32> to vector<16x128xf32>
    %638 = arith.subf %637, %518 : vector<16x128xf32>
    %639 = math.exp %638 : vector<16x128xf32>
    %cst_392 = arith.constant 0.000000e+00 : f32
    %640 = vector.broadcast %cst_392 : f32 to vector<16x128xf32>
    %641 = arith.addf %639, %640 : vector<16x128xf32>
    %c13_393 = arith.constant 13 : index
    %c0_394 = arith.constant 0 : index
    %c0_395 = arith.constant 0 : index
    %642 = vector.load %arg4[%c13_393, %c0_394, %c0_395] : memref<16x16x128xf32, #tpu.memory_space<vmem>>, vector<1x16x128xf32>
    %643 = vector.shape_cast %642 : vector<1x16x128xf32> to vector<16x128xf32>
    %644 = vector.shape_cast %641 : vector<16x128xf32> to vector<1x16x128xf32>
    tpu.vector_store %arg4[%c13_393, %c0_394, %c0_395], %644 {strides = array<i32>} : memref<16x16x128xf32, #tpu.memory_space<vmem>>, vector<1x16x128xf32>,
    %c14_396 = arith.constant 14 : index
    %c0_397 = arith.constant 0 : index
    %c0_398 = arith.constant 0 : index
    %645 = vector.load %arg4[%c14_396, %c0_397, %c0_398] : memref<16x16x128xf32, #tpu.memory_space<vmem>>, vector<1x16x128xf32>
    %646 = vector.shape_cast %645 : vector<1x16x128xf32> to vector<16x128xf32>
    %647 = arith.subf %646, %518 : vector<16x128xf32>
    %648 = math.exp %647 : vector<16x128xf32>
    %cst_399 = arith.constant 4.11566169E-32 : f32
    %649 = vector.broadcast %cst_399 : f32 to vector<16x128xf32>
    %650 = arith.addf %648, %649 : vector<16x128xf32>
    %c14_400 = arith.constant 14 : index
    %c0_401 = arith.constant 0 : index
    %c0_402 = arith.constant 0 : index
    %651 = vector.load %arg4[%c14_400, %c0_401, %c0_402] : memref<16x16x128xf32, #tpu.memory_space<vmem>>, vector<1x16x128xf32>
    %652 = vector.shape_cast %651 : vector<1x16x128xf32> to vector<16x128xf32>
    %653 = vector.shape_cast %650 : vector<16x128xf32> to vector<1x16x128xf32>
    tpu.vector_store %arg4[%c14_400, %c0_401, %c0_402], %653 {strides = array<i32>} : memref<16x16x128xf32, #tpu.memory_space<vmem>>, vector<1x16x128xf32>,
    %c15_403 = arith.constant 15 : index
    %c0_404 = arith.constant 0 : index
    %c0_405 = arith.constant 0 : index
    %654 = vector.load %arg4[%c15_403, %c0_404, %c0_405] : memref<16x16x128xf32, #tpu.memory_space<vmem>>, vector<1x16x128xf32>
    %655 = vector.shape_cast %654 : vector<1x16x128xf32> to vector<16x128xf32>
    %656 = arith.subf %655, %518 : vector<16x128xf32>
    %657 = math.exp %656 : vector<16x128xf32>
    %cst_406 = arith.constant 0.000000e+00 : f32
    %658 = vector.broadcast %cst_406 : f32 to vector<16x128xf32>
    %659 = arith.addf %657, %658 : vector<16x128xf32>
    %c15_407 = arith.constant 15 : index
    %c0_408 = arith.constant 0 : index
    %c0_409 = arith.constant 0 : index
    %660 = vector.load %arg4[%c15_407, %c0_408, %c0_409] : memref<16x16x128xf32, #tpu.memory_space<vmem>>, vector<1x16x128xf32>
    %661 = vector.shape_cast %660 : vector<1x16x128xf32> to vector<16x128xf32>
    %662 = vector.shape_cast %659 : vector<16x128xf32> to vector<1x16x128xf32>
    tpu.vector_store %arg4[%c15_407, %c0_408, %c0_409], %662 {strides = array<i32>} : memref<16x16x128xf32, #tpu.memory_space<vmem>>, vector<1x16x128xf32>,
    %c0_410 = arith.constant 0 : index
    %c0_411 = arith.constant 0 : index
    %c0_412 = arith.constant 0 : index
    %c0_413 = arith.constant 0 : index
    %663 = vector.load %arg2[%c0_410, %c0_411, %c0_412, %c0_413] : memref<1x4x16x128xf32, #tpu.memory_space<vmem>>, vector<1x4x16x128xf32>
    %664 = vector.shape_cast %663 : vector<1x4x16x128xf32> to vector<4x16x128xf32>
    %665 = vector.extract_strided_slice %664 {offsets = [0, 0, 127], sizes = [4, 16, 1], strides = [1, 1, 1]} : vector<4x16x128xf32> to vector<4x16x1xf32>
    %666 = vector.extract_strided_slice %664 {offsets = [0, 0, 0], sizes = [4, 16, 127], strides = [1, 1, 1]} : vector<4x16x128xf32> to vector<4x16x127xf32>
    %667 = tpu.concatenate %665, %666 in 2 : vector<4x16x1xf32>, vector<4x16x127xf32> -> vector<4x16x128xf32>
    %668 = arith.select %25, %664, %667 : vector<4x16x128xi1>, vector<4x16x128xf32>
    %c3_414 = arith.constant 3 : index
    %c0_415 = arith.constant 0 : index
    %c0_416 = arith.constant 0 : index
    %669 = vector.load %arg4[%c3_414, %c0_415, %c0_416] : memref<16x16x128xf32, #tpu.memory_space<vmem>>, vector<1x16x128xf32>
    %670 = vector.shape_cast %669 : vector<1x16x128xf32> to vector<16x128xf32>
    %671 = vector.shape_cast %670 : vector<16x128xf32> to vector<1x16x128xf32>
    %672 = vector.broadcast %671 : vector<1x16x128xf32> to vector<4x16x128xf32>
    %673 = arith.mulf %668, %672 : vector<4x16x128xf32>
    %674 = vector.extract_strided_slice %668 {offsets = [0, 0, 127], sizes = [4, 16, 1], strides = [1, 1, 1]} : vector<4x16x128xf32> to vector<4x16x1xf32>
    %675 = vector.extract_strided_slice %668 {offsets = [0, 0, 0], sizes = [4, 16, 127], strides = [1, 1, 1]} : vector<4x16x128xf32> to vector<4x16x127xf32>
    %676 = tpu.concatenate %674, %675 in 2 : vector<4x16x1xf32>, vector<4x16x127xf32> -> vector<4x16x128xf32>
    %677 = arith.select %25, %668, %676 : vector<4x16x128xi1>, vector<4x16x128xf32>
    %c11_417 = arith.constant 11 : index
    %c0_418 = arith.constant 0 : index
    %c0_419 = arith.constant 0 : index
    %678 = vector.load %arg4[%c11_417, %c0_418, %c0_419] : memref<16x16x128xf32, #tpu.memory_space<vmem>>, vector<1x16x128xf32>
    %679 = vector.shape_cast %678 : vector<1x16x128xf32> to vector<16x128xf32>
    %680 = vector.shape_cast %679 : vector<16x128xf32> to vector<1x16x128xf32>
    %681 = vector.broadcast %680 : vector<1x16x128xf32> to vector<4x16x128xf32>
    %682 = arith.mulf %677, %681 : vector<4x16x128xf32>
    %683 = arith.addf %673, %682 : vector<4x16x128xf32>
    %684 = vector.extract_strided_slice %664 {offsets = [0, 0, 1], sizes = [4, 16, 127], strides = [1, 1, 1]} : vector<4x16x128xf32> to vector<4x16x127xf32>
    %685 = vector.extract_strided_slice %664 {offsets = [0, 0, 0], sizes = [4, 16, 1], strides = [1, 1, 1]} : vector<4x16x128xf32> to vector<4x16x1xf32>
    %686 = tpu.concatenate %684, %685 in 2 : vector<4x16x127xf32>, vector<4x16x1xf32> -> vector<4x16x128xf32>
    %687 = arith.select %23, %664, %686 : vector<4x16x128xi1>, vector<4x16x128xf32>
    %c4_420 = arith.constant 4 : index
    %c0_421 = arith.constant 0 : index
    %c0_422 = arith.constant 0 : index
    %688 = vector.load %arg4[%c4_420, %c0_421, %c0_422] : memref<16x16x128xf32, #tpu.memory_space<vmem>>, vector<1x16x128xf32>
    %689 = vector.shape_cast %688 : vector<1x16x128xf32> to vector<16x128xf32>
    %690 = vector.shape_cast %689 : vector<16x128xf32> to vector<1x16x128xf32>
    %691 = vector.broadcast %690 : vector<1x16x128xf32> to vector<4x16x128xf32>
    %692 = arith.mulf %687, %691 : vector<4x16x128xf32>
    %693 = arith.addf %683, %692 : vector<4x16x128xf32>
    %694 = vector.extract_strided_slice %687 {offsets = [0, 0, 1], sizes = [4, 16, 127], strides = [1, 1, 1]} : vector<4x16x128xf32> to vector<4x16x127xf32>
    %695 = vector.extract_strided_slice %687 {offsets = [0, 0, 0], sizes = [4, 16, 1], strides = [1, 1, 1]} : vector<4x16x128xf32> to vector<4x16x1xf32>
    %696 = tpu.concatenate %694, %695 in 2 : vector<4x16x127xf32>, vector<4x16x1xf32> -> vector<4x16x128xf32>
    %697 = arith.select %23, %687, %696 : vector<4x16x128xi1>, vector<4x16x128xf32>
    %c12_423 = arith.constant 12 : index
    %c0_424 = arith.constant 0 : index
    %c0_425 = arith.constant 0 : index
    %698 = vector.load %arg4[%c12_423, %c0_424, %c0_425] : memref<16x16x128xf32, #tpu.memory_space<vmem>>, vector<1x16x128xf32>
    %699 = vector.shape_cast %698 : vector<1x16x128xf32> to vector<16x128xf32>
    %700 = vector.shape_cast %699 : vector<16x128xf32> to vector<1x16x128xf32>
    %701 = vector.broadcast %700 : vector<1x16x128xf32> to vector<4x16x128xf32>
    %702 = arith.mulf %697, %701 : vector<4x16x128xf32>
    %703 = arith.addf %693, %702 : vector<4x16x128xf32>
    %704 = vector.extract_strided_slice %664 {offsets = [0, 15, 0], sizes = [4, 1, 128], strides = [1, 1, 1]} : vector<4x16x128xf32> to vector<4x1x128xf32>
    %705 = vector.extract_strided_slice %664 {offsets = [0, 0, 0], sizes = [4, 15, 128], strides = [1, 1, 1]} : vector<4x16x128xf32> to vector<4x15x128xf32>
    %706 = tpu.concatenate %704, %705 in 1 : vector<4x1x128xf32>, vector<4x15x128xf32> -> vector<4x16x128xf32>
    %707 = arith.select %21, %664, %706 : vector<4x16x128xi1>, vector<4x16x128xf32>
    %c1_426 = arith.constant 1 : index
    %c0_427 = arith.constant 0 : index
    %c0_428 = arith.constant 0 : index
    %708 = vector.load %arg4[%c1_426, %c0_427, %c0_428] : memref<16x16x128xf32, #tpu.memory_space<vmem>>, vector<1x16x128xf32>
    %709 = vector.shape_cast %708 : vector<1x16x128xf32> to vector<16x128xf32>
    %710 = vector.shape_cast %709 : vector<16x128xf32> to vector<1x16x128xf32>
    %711 = vector.broadcast %710 : vector<1x16x128xf32> to vector<4x16x128xf32>
    %712 = arith.mulf %707, %711 : vector<4x16x128xf32>
    %713 = arith.addf %703, %712 : vector<4x16x128xf32>
    %714 = vector.extract_strided_slice %707 {offsets = [0, 0, 127], sizes = [4, 16, 1], strides = [1, 1, 1]} : vector<4x16x128xf32> to vector<4x16x1xf32>
    %715 = vector.extract_strided_slice %707 {offsets = [0, 0, 0], sizes = [4, 16, 127], strides = [1, 1, 1]} : vector<4x16x128xf32> to vector<4x16x127xf32>
    %716 = tpu.concatenate %714, %715 in 2 : vector<4x16x1xf32>, vector<4x16x127xf32> -> vector<4x16x128xf32>
    %717 = arith.select %25, %707, %716 : vector<4x16x128xi1>, vector<4x16x128xf32>
    %c0_429 = arith.constant 0 : index
    %c0_430 = arith.constant 0 : index
    %c0_431 = arith.constant 0 : index
    %718 = vector.load %arg4[%c0_429, %c0_430, %c0_431] : memref<16x16x128xf32, #tpu.memory_space<vmem>>, vector<1x16x128xf32>
    %719 = vector.shape_cast %718 : vector<1x16x128xf32> to vector<16x128xf32>
    %720 = vector.shape_cast %719 : vector<16x128xf32> to vector<1x16x128xf32>
    %721 = vector.broadcast %720 : vector<1x16x128xf32> to vector<4x16x128xf32>
    %722 = arith.mulf %717, %721 : vector<4x16x128xf32>
    %723 = arith.addf %713, %722 : vector<4x16x128xf32>
    %724 = vector.extract_strided_slice %707 {offsets = [0, 0, 1], sizes = [4, 16, 127], strides = [1, 1, 1]} : vector<4x16x128xf32> to vector<4x16x127xf32>
    %725 = vector.extract_strided_slice %707 {offsets = [0, 0, 0], sizes = [4, 16, 1], strides = [1, 1, 1]} : vector<4x16x128xf32> to vector<4x16x1xf32>
    %726 = tpu.concatenate %724, %725 in 2 : vector<4x16x127xf32>, vector<4x16x1xf32> -> vector<4x16x128xf32>
    %727 = arith.select %23, %707, %726 : vector<4x16x128xi1>, vector<4x16x128xf32>
    %c2_432 = arith.constant 2 : index
    %c0_433 = arith.constant 0 : index
    %c0_434 = arith.constant 0 : index
    %728 = vector.load %arg4[%c2_432, %c0_433, %c0_434] : memref<16x16x128xf32, #tpu.memory_space<vmem>>, vector<1x16x128xf32>
    %729 = vector.shape_cast %728 : vector<1x16x128xf32> to vector<16x128xf32>
    %730 = vector.shape_cast %729 : vector<16x128xf32> to vector<1x16x128xf32>
    %731 = vector.broadcast %730 : vector<1x16x128xf32> to vector<4x16x128xf32>
    %732 = arith.mulf %727, %731 : vector<4x16x128xf32>
    %733 = arith.addf %723, %732 : vector<4x16x128xf32>
    %734 = vector.extract_strided_slice %707 {offsets = [0, 15, 0], sizes = [4, 1, 128], strides = [1, 1, 1]} : vector<4x16x128xf32> to vector<4x1x128xf32>
    %735 = vector.extract_strided_slice %707 {offsets = [0, 0, 0], sizes = [4, 15, 128], strides = [1, 1, 1]} : vector<4x16x128xf32> to vector<4x15x128xf32>
    %736 = tpu.concatenate %734, %735 in 1 : vector<4x1x128xf32>, vector<4x15x128xf32> -> vector<4x16x128xf32>
    %737 = arith.select %21, %707, %736 : vector<4x16x128xi1>, vector<4x16x128xf32>
    %c9_435 = arith.constant 9 : index
    %c0_436 = arith.constant 0 : index
    %c0_437 = arith.constant 0 : index
    %738 = vector.load %arg4[%c9_435, %c0_436, %c0_437] : memref<16x16x128xf32, #tpu.memory_space<vmem>>, vector<1x16x128xf32>
    %739 = vector.shape_cast %738 : vector<1x16x128xf32> to vector<16x128xf32>
    %740 = vector.shape_cast %739 : vector<16x128xf32> to vector<1x16x128xf32>
    %741 = vector.broadcast %740 : vector<1x16x128xf32> to vector<4x16x128xf32>
    %742 = arith.mulf %737, %741 : vector<4x16x128xf32>
    %743 = arith.addf %733, %742 : vector<4x16x128xf32>
    %744 = vector.extract_strided_slice %737 {offsets = [0, 0, 127], sizes = [4, 16, 1], strides = [1, 1, 1]} : vector<4x16x128xf32> to vector<4x16x1xf32>
    %745 = vector.extract_strided_slice %737 {offsets = [0, 0, 0], sizes = [4, 16, 127], strides = [1, 1, 1]} : vector<4x16x128xf32> to vector<4x16x127xf32>
    %746 = tpu.concatenate %744, %745 in 2 : vector<4x16x1xf32>, vector<4x16x127xf32> -> vector<4x16x128xf32>
    %747 = arith.select %25, %737, %746 : vector<4x16x128xi1>, vector<4x16x128xf32>
    %748 = vector.extract_strided_slice %747 {offsets = [0, 0, 127], sizes = [4, 16, 1], strides = [1, 1, 1]} : vector<4x16x128xf32> to vector<4x16x1xf32>
    %749 = vector.extract_strided_slice %747 {offsets = [0, 0, 0], sizes = [4, 16, 127], strides = [1, 1, 1]} : vector<4x16x128xf32> to vector<4x16x127xf32>
    %750 = tpu.concatenate %748, %749 in 2 : vector<4x16x1xf32>, vector<4x16x127xf32> -> vector<4x16x128xf32>
    %751 = arith.select %25, %747, %750 : vector<4x16x128xi1>, vector<4x16x128xf32>
    %c8_438 = arith.constant 8 : index
    %c0_439 = arith.constant 0 : index
    %c0_440 = arith.constant 0 : index
    %752 = vector.load %arg4[%c8_438, %c0_439, %c0_440] : memref<16x16x128xf32, #tpu.memory_space<vmem>>, vector<1x16x128xf32>
    %753 = vector.shape_cast %752 : vector<1x16x128xf32> to vector<16x128xf32>
    %754 = vector.shape_cast %753 : vector<16x128xf32> to vector<1x16x128xf32>
    %755 = vector.broadcast %754 : vector<1x16x128xf32> to vector<4x16x128xf32>
    %756 = arith.mulf %751, %755 : vector<4x16x128xf32>
    %757 = arith.addf %743, %756 : vector<4x16x128xf32>
    %758 = vector.extract_strided_slice %737 {offsets = [0, 0, 1], sizes = [4, 16, 127], strides = [1, 1, 1]} : vector<4x16x128xf32> to vector<4x16x127xf32>
    %759 = vector.extract_strided_slice %737 {offsets = [0, 0, 0], sizes = [4, 16, 1], strides = [1, 1, 1]} : vector<4x16x128xf32> to vector<4x16x1xf32>
    %760 = tpu.concatenate %758, %759 in 2 : vector<4x16x127xf32>, vector<4x16x1xf32> -> vector<4x16x128xf32>
    %761 = arith.select %23, %737, %760 : vector<4x16x128xi1>, vector<4x16x128xf32>
    %762 = vector.extract_strided_slice %761 {offsets = [0, 0, 1], sizes = [4, 16, 127], strides = [1, 1, 1]} : vector<4x16x128xf32> to vector<4x16x127xf32>
    %763 = vector.extract_strided_slice %761 {offsets = [0, 0, 0], sizes = [4, 16, 1], strides = [1, 1, 1]} : vector<4x16x128xf32> to vector<4x16x1xf32>
    %764 = tpu.concatenate %762, %763 in 2 : vector<4x16x127xf32>, vector<4x16x1xf32> -> vector<4x16x128xf32>
    %765 = arith.select %23, %761, %764 : vector<4x16x128xi1>, vector<4x16x128xf32>
    %c10_441 = arith.constant 10 : index
    %c0_442 = arith.constant 0 : index
    %c0_443 = arith.constant 0 : index
    %766 = vector.load %arg4[%c10_441, %c0_442, %c0_443] : memref<16x16x128xf32, #tpu.memory_space<vmem>>, vector<1x16x128xf32>
    %767 = vector.shape_cast %766 : vector<1x16x128xf32> to vector<16x128xf32>
    %768 = vector.shape_cast %767 : vector<16x128xf32> to vector<1x16x128xf32>
    %769 = vector.broadcast %768 : vector<1x16x128xf32> to vector<4x16x128xf32>
    %770 = arith.mulf %765, %769 : vector<4x16x128xf32>
    %771 = arith.addf %757, %770 : vector<4x16x128xf32>
    %772 = vector.extract_strided_slice %664 {offsets = [0, 1, 0], sizes = [4, 15, 128], strides = [1, 1, 1]} : vector<4x16x128xf32> to vector<4x15x128xf32>
    %773 = vector.extract_strided_slice %664 {offsets = [0, 0, 0], sizes = [4, 1, 128], strides = [1, 1, 1]} : vector<4x16x128xf32> to vector<4x1x128xf32>
    %774 = tpu.concatenate %772, %773 in 1 : vector<4x15x128xf32>, vector<4x1x128xf32> -> vector<4x16x128xf32>
    %775 = arith.select %19, %664, %774 : vector<4x16x128xi1>, vector<4x16x128xf32>
    %c6_444 = arith.constant 6 : index
    %c0_445 = arith.constant 0 : index
    %c0_446 = arith.constant 0 : index
    %776 = vector.load %arg4[%c6_444, %c0_445, %c0_446] : memref<16x16x128xf32, #tpu.memory_space<vmem>>, vector<1x16x128xf32>
    %777 = vector.shape_cast %776 : vector<1x16x128xf32> to vector<16x128xf32>
    %778 = vector.shape_cast %777 : vector<16x128xf32> to vector<1x16x128xf32>
    %779 = vector.broadcast %778 : vector<1x16x128xf32> to vector<4x16x128xf32>
    %780 = arith.mulf %775, %779 : vector<4x16x128xf32>
    %781 = arith.addf %771, %780 : vector<4x16x128xf32>
    %782 = vector.extract_strided_slice %775 {offsets = [0, 0, 127], sizes = [4, 16, 1], strides = [1, 1, 1]} : vector<4x16x128xf32> to vector<4x16x1xf32>
    %783 = vector.extract_strided_slice %775 {offsets = [0, 0, 0], sizes = [4, 16, 127], strides = [1, 1, 1]} : vector<4x16x128xf32> to vector<4x16x127xf32>
    %784 = tpu.concatenate %782, %783 in 2 : vector<4x16x1xf32>, vector<4x16x127xf32> -> vector<4x16x128xf32>
    %785 = arith.select %25, %775, %784 : vector<4x16x128xi1>, vector<4x16x128xf32>
    %c5_447 = arith.constant 5 : index
    %c0_448 = arith.constant 0 : index
    %c0_449 = arith.constant 0 : index
    %786 = vector.load %arg4[%c5_447, %c0_448, %c0_449] : memref<16x16x128xf32, #tpu.memory_space<vmem>>, vector<1x16x128xf32>
    %787 = vector.shape_cast %786 : vector<1x16x128xf32> to vector<16x128xf32>
    %788 = vector.shape_cast %787 : vector<16x128xf32> to vector<1x16x128xf32>
    %789 = vector.broadcast %788 : vector<1x16x128xf32> to vector<4x16x128xf32>
    %790 = arith.mulf %785, %789 : vector<4x16x128xf32>
    %791 = arith.addf %781, %790 : vector<4x16x128xf32>
    %792 = vector.extract_strided_slice %775 {offsets = [0, 0, 1], sizes = [4, 16, 127], strides = [1, 1, 1]} : vector<4x16x128xf32> to vector<4x16x127xf32>
    %793 = vector.extract_strided_slice %775 {offsets = [0, 0, 0], sizes = [4, 16, 1], strides = [1, 1, 1]} : vector<4x16x128xf32> to vector<4x16x1xf32>
    %794 = tpu.concatenate %792, %793 in 2 : vector<4x16x127xf32>, vector<4x16x1xf32> -> vector<4x16x128xf32>
    %795 = arith.select %23, %775, %794 : vector<4x16x128xi1>, vector<4x16x128xf32>
    %c7_450 = arith.constant 7 : index
    %c0_451 = arith.constant 0 : index
    %c0_452 = arith.constant 0 : index
    %796 = vector.load %arg4[%c7_450, %c0_451, %c0_452] : memref<16x16x128xf32, #tpu.memory_space<vmem>>, vector<1x16x128xf32>
    %797 = vector.shape_cast %796 : vector<1x16x128xf32> to vector<16x128xf32>
    %798 = vector.shape_cast %797 : vector<16x128xf32> to vector<1x16x128xf32>
    %799 = vector.broadcast %798 : vector<1x16x128xf32> to vector<4x16x128xf32>
    %800 = arith.mulf %795, %799 : vector<4x16x128xf32>
    %801 = arith.addf %791, %800 : vector<4x16x128xf32>
    %802 = vector.extract_strided_slice %775 {offsets = [0, 1, 0], sizes = [4, 15, 128], strides = [1, 1, 1]} : vector<4x16x128xf32> to vector<4x15x128xf32>
    %803 = vector.extract_strided_slice %775 {offsets = [0, 0, 0], sizes = [4, 1, 128], strides = [1, 1, 1]} : vector<4x16x128xf32> to vector<4x1x128xf32>
    %804 = tpu.concatenate %802, %803 in 1 : vector<4x15x128xf32>, vector<4x1x128xf32> -> vector<4x16x128xf32>
    %805 = arith.select %19, %775, %804 : vector<4x16x128xi1>, vector<4x16x128xf32>
    %c14_453 = arith.constant 14 : index
    %c0_454 = arith.constant 0 : index
    %c0_455 = arith.constant 0 : index
    %806 = vector.load %arg4[%c14_453, %c0_454, %c0_455] : memref<16x16x128xf32, #tpu.memory_space<vmem>>, vector<1x16x128xf32>
    %807 = vector.shape_cast %806 : vector<1x16x128xf32> to vector<16x128xf32>
    %808 = vector.shape_cast %807 : vector<16x128xf32> to vector<1x16x128xf32>
    %809 = vector.broadcast %808 : vector<1x16x128xf32> to vector<4x16x128xf32>
    %810 = arith.mulf %805, %809 : vector<4x16x128xf32>
    %811 = arith.addf %801, %810 : vector<4x16x128xf32>
    %812 = vector.extract_strided_slice %805 {offsets = [0, 0, 127], sizes = [4, 16, 1], strides = [1, 1, 1]} : vector<4x16x128xf32> to vector<4x16x1xf32>
    %813 = vector.extract_strided_slice %805 {offsets = [0, 0, 0], sizes = [4, 16, 127], strides = [1, 1, 1]} : vector<4x16x128xf32> to vector<4x16x127xf32>
    %814 = tpu.concatenate %812, %813 in 2 : vector<4x16x1xf32>, vector<4x16x127xf32> -> vector<4x16x128xf32>
    %815 = arith.select %25, %805, %814 : vector<4x16x128xi1>, vector<4x16x128xf32>
    %816 = vector.extract_strided_slice %815 {offsets = [0, 0, 127], sizes = [4, 16, 1], strides = [1, 1, 1]} : vector<4x16x128xf32> to vector<4x16x1xf32>
    %817 = vector.extract_strided_slice %815 {offsets = [0, 0, 0], sizes = [4, 16, 127], strides = [1, 1, 1]} : vector<4x16x128xf32> to vector<4x16x127xf32>
    %818 = tpu.concatenate %816, %817 in 2 : vector<4x16x1xf32>, vector<4x16x127xf32> -> vector<4x16x128xf32>
    %819 = arith.select %25, %815, %818 : vector<4x16x128xi1>, vector<4x16x128xf32>
    %c13_456 = arith.constant 13 : index
    %c0_457 = arith.constant 0 : index
    %c0_458 = arith.constant 0 : index
    %820 = vector.load %arg4[%c13_456, %c0_457, %c0_458] : memref<16x16x128xf32, #tpu.memory_space<vmem>>, vector<1x16x128xf32>
    %821 = vector.shape_cast %820 : vector<1x16x128xf32> to vector<16x128xf32>
    %822 = vector.shape_cast %821 : vector<16x128xf32> to vector<1x16x128xf32>
    %823 = vector.broadcast %822 : vector<1x16x128xf32> to vector<4x16x128xf32>
    %824 = arith.mulf %819, %823 : vector<4x16x128xf32>
    %825 = arith.addf %811, %824 : vector<4x16x128xf32>
    %826 = vector.extract_strided_slice %805 {offsets = [0, 0, 1], sizes = [4, 16, 127], strides = [1, 1, 1]} : vector<4x16x128xf32> to vector<4x16x127xf32>
    %827 = vector.extract_strided_slice %805 {offsets = [0, 0, 0], sizes = [4, 16, 1], strides = [1, 1, 1]} : vector<4x16x128xf32> to vector<4x16x1xf32>
    %828 = tpu.concatenate %826, %827 in 2 : vector<4x16x127xf32>, vector<4x16x1xf32> -> vector<4x16x128xf32>
    %829 = arith.select %23, %805, %828 : vector<4x16x128xi1>, vector<4x16x128xf32>
    %830 = vector.extract_strided_slice %829 {offsets = [0, 0, 1], sizes = [4, 16, 127], strides = [1, 1, 1]} : vector<4x16x128xf32> to vector<4x16x127xf32>
    %831 = vector.extract_strided_slice %829 {offsets = [0, 0, 0], sizes = [4, 16, 1], strides = [1, 1, 1]} : vector<4x16x128xf32> to vector<4x16x1xf32>
    %832 = tpu.concatenate %830, %831 in 2 : vector<4x16x127xf32>, vector<4x16x1xf32> -> vector<4x16x128xf32>
    %833 = arith.select %23, %829, %832 : vector<4x16x128xi1>, vector<4x16x128xf32>
    %c15_459 = arith.constant 15 : index
    %c0_460 = arith.constant 0 : index
    %c0_461 = arith.constant 0 : index
    %834 = vector.load %arg4[%c15_459, %c0_460, %c0_461] : memref<16x16x128xf32, #tpu.memory_space<vmem>>, vector<1x16x128xf32>
    %835 = vector.shape_cast %834 : vector<1x16x128xf32> to vector<16x128xf32>
    %836 = vector.shape_cast %835 : vector<16x128xf32> to vector<1x16x128xf32>
    %837 = vector.broadcast %836 : vector<1x16x128xf32> to vector<4x16x128xf32>
    %838 = arith.mulf %833, %837 : vector<4x16x128xf32>
    %839 = arith.addf %825, %838 : vector<4x16x128xf32>
    %840 = vector.extract_strided_slice %839 {offsets = [0, 0, 127], sizes = [4, 16, 1], strides = [1, 1, 1]} : vector<4x16x128xf32> to vector<4x16x1xf32>
    %841 = vector.extract_strided_slice %839 {offsets = [0, 0, 0], sizes = [4, 16, 127], strides = [1, 1, 1]} : vector<4x16x128xf32> to vector<4x16x127xf32>
    %842 = tpu.concatenate %840, %841 in 2 : vector<4x16x1xf32>, vector<4x16x127xf32> -> vector<4x16x128xf32>
    %843 = arith.select %25, %839, %842 : vector<4x16x128xi1>, vector<4x16x128xf32>
    %c3_462 = arith.constant 3 : index
    %c0_463 = arith.constant 0 : index
    %c0_464 = arith.constant 0 : index
    %844 = vector.load %arg4[%c3_462, %c0_463, %c0_464] : memref<16x16x128xf32, #tpu.memory_space<vmem>>, vector<1x16x128xf32>
    %845 = vector.shape_cast %844 : vector<1x16x128xf32> to vector<16x128xf32>
    %846 = vector.shape_cast %845 : vector<16x128xf32> to vector<1x16x128xf32>
    %847 = vector.broadcast %846 : vector<1x16x128xf32> to vector<4x16x128xf32>
    %848 = arith.mulf %843, %847 : vector<4x16x128xf32>
    %849 = vector.extract_strided_slice %843 {offsets = [0, 0, 127], sizes = [4, 16, 1], strides = [1, 1, 1]} : vector<4x16x128xf32> to vector<4x16x1xf32>
    %850 = vector.extract_strided_slice %843 {offsets = [0, 0, 0], sizes = [4, 16, 127], strides = [1, 1, 1]} : vector<4x16x128xf32> to vector<4x16x127xf32>
    %851 = tpu.concatenate %849, %850 in 2 : vector<4x16x1xf32>, vector<4x16x127xf32> -> vector<4x16x128xf32>
    %852 = arith.select %25, %843, %851 : vector<4x16x128xi1>, vector<4x16x128xf32>
    %c11_465 = arith.constant 11 : index
    %c0_466 = arith.constant 0 : index
    %c0_467 = arith.constant 0 : index
    %853 = vector.load %arg4[%c11_465, %c0_466, %c0_467] : memref<16x16x128xf32, #tpu.memory_space<vmem>>, vector<1x16x128xf32>
    %854 = vector.shape_cast %853 : vector<1x16x128xf32> to vector<16x128xf32>
    %855 = vector.shape_cast %854 : vector<16x128xf32> to vector<1x16x128xf32>
    %856 = vector.broadcast %855 : vector<1x16x128xf32> to vector<4x16x128xf32>
    %857 = arith.mulf %852, %856 : vector<4x16x128xf32>
    %858 = arith.addf %848, %857 : vector<4x16x128xf32>
    %859 = vector.extract_strided_slice %839 {offsets = [0, 0, 1], sizes = [4, 16, 127], strides = [1, 1, 1]} : vector<4x16x128xf32> to vector<4x16x127xf32>
    %860 = vector.extract_strided_slice %839 {offsets = [0, 0, 0], sizes = [4, 16, 1], strides = [1, 1, 1]} : vector<4x16x128xf32> to vector<4x16x1xf32>
    %861 = tpu.concatenate %859, %860 in 2 : vector<4x16x127xf32>, vector<4x16x1xf32> -> vector<4x16x128xf32>
    %862 = arith.select %23, %839, %861 : vector<4x16x128xi1>, vector<4x16x128xf32>
    %c4_468 = arith.constant 4 : index
    %c0_469 = arith.constant 0 : index
    %c0_470 = arith.constant 0 : index
    %863 = vector.load %arg4[%c4_468, %c0_469, %c0_470] : memref<16x16x128xf32, #tpu.memory_space<vmem>>, vector<1x16x128xf32>
    %864 = vector.shape_cast %863 : vector<1x16x128xf32> to vector<16x128xf32>
    %865 = vector.shape_cast %864 : vector<16x128xf32> to vector<1x16x128xf32>
    %866 = vector.broadcast %865 : vector<1x16x128xf32> to vector<4x16x128xf32>
    %867 = arith.mulf %862, %866 : vector<4x16x128xf32>
    %868 = arith.addf %858, %867 : vector<4x16x128xf32>
    %869 = vector.extract_strided_slice %862 {offsets = [0, 0, 1], sizes = [4, 16, 127], strides = [1, 1, 1]} : vector<4x16x128xf32> to vector<4x16x127xf32>
    %870 = vector.extract_strided_slice %862 {offsets = [0, 0, 0], sizes = [4, 16, 1], strides = [1, 1, 1]} : vector<4x16x128xf32> to vector<4x16x1xf32>
    %871 = tpu.concatenate %869, %870 in 2 : vector<4x16x127xf32>, vector<4x16x1xf32> -> vector<4x16x128xf32>
    %872 = arith.select %23, %862, %871 : vector<4x16x128xi1>, vector<4x16x128xf32>
    %c12_471 = arith.constant 12 : index
    %c0_472 = arith.constant 0 : index
    %c0_473 = arith.constant 0 : index
    %873 = vector.load %arg4[%c12_471, %c0_472, %c0_473] : memref<16x16x128xf32, #tpu.memory_space<vmem>>, vector<1x16x128xf32>
    %874 = vector.shape_cast %873 : vector<1x16x128xf32> to vector<16x128xf32>
    %875 = vector.shape_cast %874 : vector<16x128xf32> to vector<1x16x128xf32>
    %876 = vector.broadcast %875 : vector<1x16x128xf32> to vector<4x16x128xf32>
    %877 = arith.mulf %872, %876 : vector<4x16x128xf32>
    %878 = arith.addf %868, %877 : vector<4x16x128xf32>
    %879 = vector.extract_strided_slice %839 {offsets = [0, 15, 0], sizes = [4, 1, 128], strides = [1, 1, 1]} : vector<4x16x128xf32> to vector<4x1x128xf32>
    %880 = vector.extract_strided_slice %839 {offsets = [0, 0, 0], sizes = [4, 15, 128], strides = [1, 1, 1]} : vector<4x16x128xf32> to vector<4x15x128xf32>
    %881 = tpu.concatenate %879, %880 in 1 : vector<4x1x128xf32>, vector<4x15x128xf32> -> vector<4x16x128xf32>
    %882 = arith.select %21, %839, %881 : vector<4x16x128xi1>, vector<4x16x128xf32>
    %c1_474 = arith.constant 1 : index
    %c0_475 = arith.constant 0 : index
    %c0_476 = arith.constant 0 : index
    %883 = vector.load %arg4[%c1_474, %c0_475, %c0_476] : memref<16x16x128xf32, #tpu.memory_space<vmem>>, vector<1x16x128xf32>
    %884 = vector.shape_cast %883 : vector<1x16x128xf32> to vector<16x128xf32>
    %885 = vector.shape_cast %884 : vector<16x128xf32> to vector<1x16x128xf32>
    %886 = vector.broadcast %885 : vector<1x16x128xf32> to vector<4x16x128xf32>
    %887 = arith.mulf %882, %886 : vector<4x16x128xf32>
    %888 = arith.addf %878, %887 : vector<4x16x128xf32>
    %889 = vector.extract_strided_slice %882 {offsets = [0, 0, 127], sizes = [4, 16, 1], strides = [1, 1, 1]} : vector<4x16x128xf32> to vector<4x16x1xf32>
    %890 = vector.extract_strided_slice %882 {offsets = [0, 0, 0], sizes = [4, 16, 127], strides = [1, 1, 1]} : vector<4x16x128xf32> to vector<4x16x127xf32>
    %891 = tpu.concatenate %889, %890 in 2 : vector<4x16x1xf32>, vector<4x16x127xf32> -> vector<4x16x128xf32>
    %892 = arith.select %25, %882, %891 : vector<4x16x128xi1>, vector<4x16x128xf32>
    %c0_477 = arith.constant 0 : index
    %c0_478 = arith.constant 0 : index
    %c0_479 = arith.constant 0 : index
    %893 = vector.load %arg4[%c0_477, %c0_478, %c0_479] : memref<16x16x128xf32, #tpu.memory_space<vmem>>, vector<1x16x128xf32>
    %894 = vector.shape_cast %893 : vector<1x16x128xf32> to vector<16x128xf32>
    %895 = vector.shape_cast %894 : vector<16x128xf32> to vector<1x16x128xf32>
    %896 = vector.broadcast %895 : vector<1x16x128xf32> to vector<4x16x128xf32>
    %897 = arith.mulf %892, %896 : vector<4x16x128xf32>
    %898 = arith.addf %888, %897 : vector<4x16x128xf32>
    %899 = vector.extract_strided_slice %882 {offsets = [0, 0, 1], sizes = [4, 16, 127], strides = [1, 1, 1]} : vector<4x16x128xf32> to vector<4x16x127xf32>
    %900 = vector.extract_strided_slice %882 {offsets = [0, 0, 0], sizes = [4, 16, 1], strides = [1, 1, 1]} : vector<4x16x128xf32> to vector<4x16x1xf32>
    %901 = tpu.concatenate %899, %900 in 2 : vector<4x16x127xf32>, vector<4x16x1xf32> -> vector<4x16x128xf32>
    %902 = arith.select %23, %882, %901 : vector<4x16x128xi1>, vector<4x16x128xf32>
    %c2_480 = arith.constant 2 : index
    %c0_481 = arith.constant 0 : index
    %c0_482 = arith.constant 0 : index
    %903 = vector.load %arg4[%c2_480, %c0_481, %c0_482] : memref<16x16x128xf32, #tpu.memory_space<vmem>>, vector<1x16x128xf32>
    %904 = vector.shape_cast %903 : vector<1x16x128xf32> to vector<16x128xf32>
    %905 = vector.shape_cast %904 : vector<16x128xf32> to vector<1x16x128xf32>
    %906 = vector.broadcast %905 : vector<1x16x128xf32> to vector<4x16x128xf32>
    %907 = arith.mulf %902, %906 : vector<4x16x128xf32>
    %908 = arith.addf %898, %907 : vector<4x16x128xf32>
    %909 = vector.extract_strided_slice %882 {offsets = [0, 15, 0], sizes = [4, 1, 128], strides = [1, 1, 1]} : vector<4x16x128xf32> to vector<4x1x128xf32>
    %910 = vector.extract_strided_slice %882 {offsets = [0, 0, 0], sizes = [4, 15, 128], strides = [1, 1, 1]} : vector<4x16x128xf32> to vector<4x15x128xf32>
    %911 = tpu.concatenate %909, %910 in 1 : vector<4x1x128xf32>, vector<4x15x128xf32> -> vector<4x16x128xf32>
    %912 = arith.select %21, %882, %911 : vector<4x16x128xi1>, vector<4x16x128xf32>
    %c9_483 = arith.constant 9 : index
    %c0_484 = arith.constant 0 : index
    %c0_485 = arith.constant 0 : index
    %913 = vector.load %arg4[%c9_483, %c0_484, %c0_485] : memref<16x16x128xf32, #tpu.memory_space<vmem>>, vector<1x16x128xf32>
    %914 = vector.shape_cast %913 : vector<1x16x128xf32> to vector<16x128xf32>
    %915 = vector.shape_cast %914 : vector<16x128xf32> to vector<1x16x128xf32>
    %916 = vector.broadcast %915 : vector<1x16x128xf32> to vector<4x16x128xf32>
    %917 = arith.mulf %912, %916 : vector<4x16x128xf32>
    %918 = arith.addf %908, %917 : vector<4x16x128xf32>
    %919 = vector.extract_strided_slice %912 {offsets = [0, 0, 127], sizes = [4, 16, 1], strides = [1, 1, 1]} : vector<4x16x128xf32> to vector<4x16x1xf32>
    %920 = vector.extract_strided_slice %912 {offsets = [0, 0, 0], sizes = [4, 16, 127], strides = [1, 1, 1]} : vector<4x16x128xf32> to vector<4x16x127xf32>
    %921 = tpu.concatenate %919, %920 in 2 : vector<4x16x1xf32>, vector<4x16x127xf32> -> vector<4x16x128xf32>
    %922 = arith.select %25, %912, %921 : vector<4x16x128xi1>, vector<4x16x128xf32>
    %923 = vector.extract_strided_slice %922 {offsets = [0, 0, 127], sizes = [4, 16, 1], strides = [1, 1, 1]} : vector<4x16x128xf32> to vector<4x16x1xf32>
    %924 = vector.extract_strided_slice %922 {offsets = [0, 0, 0], sizes = [4, 16, 127], strides = [1, 1, 1]} : vector<4x16x128xf32> to vector<4x16x127xf32>
    %925 = tpu.concatenate %923, %924 in 2 : vector<4x16x1xf32>, vector<4x16x127xf32> -> vector<4x16x128xf32>
    %926 = arith.select %25, %922, %925 : vector<4x16x128xi1>, vector<4x16x128xf32>
    %c8_486 = arith.constant 8 : index
    %c0_487 = arith.constant 0 : index
    %c0_488 = arith.constant 0 : index
    %927 = vector.load %arg4[%c8_486, %c0_487, %c0_488] : memref<16x16x128xf32, #tpu.memory_space<vmem>>, vector<1x16x128xf32>
    %928 = vector.shape_cast %927 : vector<1x16x128xf32> to vector<16x128xf32>
    %929 = vector.shape_cast %928 : vector<16x128xf32> to vector<1x16x128xf32>
    %930 = vector.broadcast %929 : vector<1x16x128xf32> to vector<4x16x128xf32>
    %931 = arith.mulf %926, %930 : vector<4x16x128xf32>
    %932 = arith.addf %918, %931 : vector<4x16x128xf32>
    %933 = vector.extract_strided_slice %912 {offsets = [0, 0, 1], sizes = [4, 16, 127], strides = [1, 1, 1]} : vector<4x16x128xf32> to vector<4x16x127xf32>
    %934 = vector.extract_strided_slice %912 {offsets = [0, 0, 0], sizes = [4, 16, 1], strides = [1, 1, 1]} : vector<4x16x128xf32> to vector<4x16x1xf32>
    %935 = tpu.concatenate %933, %934 in 2 : vector<4x16x127xf32>, vector<4x16x1xf32> -> vector<4x16x128xf32>
    %936 = arith.select %23, %912, %935 : vector<4x16x128xi1>, vector<4x16x128xf32>
    %937 = vector.extract_strided_slice %936 {offsets = [0, 0, 1], sizes = [4, 16, 127], strides = [1, 1, 1]} : vector<4x16x128xf32> to vector<4x16x127xf32>
    %938 = vector.extract_strided_slice %936 {offsets = [0, 0, 0], sizes = [4, 16, 1], strides = [1, 1, 1]} : vector<4x16x128xf32> to vector<4x16x1xf32>
    %939 = tpu.concatenate %937, %938 in 2 : vector<4x16x127xf32>, vector<4x16x1xf32> -> vector<4x16x128xf32>
    %940 = arith.select %23, %936, %939 : vector<4x16x128xi1>, vector<4x16x128xf32>
    %c10_489 = arith.constant 10 : index
    %c0_490 = arith.constant 0 : index
    %c0_491 = arith.constant 0 : index
    %941 = vector.load %arg4[%c10_489, %c0_490, %c0_491] : memref<16x16x128xf32, #tpu.memory_space<vmem>>, vector<1x16x128xf32>
    %942 = vector.shape_cast %941 : vector<1x16x128xf32> to vector<16x128xf32>
    %943 = vector.shape_cast %942 : vector<16x128xf32> to vector<1x16x128xf32>
    %944 = vector.broadcast %943 : vector<1x16x128xf32> to vector<4x16x128xf32>
    %945 = arith.mulf %940, %944 : vector<4x16x128xf32>
    %946 = arith.addf %932, %945 : vector<4x16x128xf32>
    %947 = vector.extract_strided_slice %839 {offsets = [0, 1, 0], sizes = [4, 15, 128], strides = [1, 1, 1]} : vector<4x16x128xf32> to vector<4x15x128xf32>
    %948 = vector.extract_strided_slice %839 {offsets = [0, 0, 0], sizes = [4, 1, 128], strides = [1, 1, 1]} : vector<4x16x128xf32> to vector<4x1x128xf32>
    %949 = tpu.concatenate %947, %948 in 1 : vector<4x15x128xf32>, vector<4x1x128xf32> -> vector<4x16x128xf32>
    %950 = arith.select %19, %839, %949 : vector<4x16x128xi1>, vector<4x16x128xf32>
    %c6_492 = arith.constant 6 : index
    %c0_493 = arith.constant 0 : index
    %c0_494 = arith.constant 0 : index
    %951 = vector.load %arg4[%c6_492, %c0_493, %c0_494] : memref<16x16x128xf32, #tpu.memory_space<vmem>>, vector<1x16x128xf32>
    %952 = vector.shape_cast %951 : vector<1x16x128xf32> to vector<16x128xf32>
    %953 = vector.shape_cast %952 : vector<16x128xf32> to vector<1x16x128xf32>
    %954 = vector.broadcast %953 : vector<1x16x128xf32> to vector<4x16x128xf32>
    %955 = arith.mulf %950, %954 : vector<4x16x128xf32>
    %956 = arith.addf %946, %955 : vector<4x16x128xf32>
    %957 = vector.extract_strided_slice %950 {offsets = [0, 0, 127], sizes = [4, 16, 1], strides = [1, 1, 1]} : vector<4x16x128xf32> to vector<4x16x1xf32>
    %958 = vector.extract_strided_slice %950 {offsets = [0, 0, 0], sizes = [4, 16, 127], strides = [1, 1, 1]} : vector<4x16x128xf32> to vector<4x16x127xf32>
    %959 = tpu.concatenate %957, %958 in 2 : vector<4x16x1xf32>, vector<4x16x127xf32> -> vector<4x16x128xf32>
    %960 = arith.select %25, %950, %959 : vector<4x16x128xi1>, vector<4x16x128xf32>
    %c5_495 = arith.constant 5 : index
    %c0_496 = arith.constant 0 : index
    %c0_497 = arith.constant 0 : index
    %961 = vector.load %arg4[%c5_495, %c0_496, %c0_497] : memref<16x16x128xf32, #tpu.memory_space<vmem>>, vector<1x16x128xf32>
    %962 = vector.shape_cast %961 : vector<1x16x128xf32> to vector<16x128xf32>
    %963 = vector.shape_cast %962 : vector<16x128xf32> to vector<1x16x128xf32>
    %964 = vector.broadcast %963 : vector<1x16x128xf32> to vector<4x16x128xf32>
    %965 = arith.mulf %960, %964 : vector<4x16x128xf32>
    %966 = arith.addf %956, %965 : vector<4x16x128xf32>
    %967 = vector.extract_strided_slice %950 {offsets = [0, 0, 1], sizes = [4, 16, 127], strides = [1, 1, 1]} : vector<4x16x128xf32> to vector<4x16x127xf32>
    %968 = vector.extract_strided_slice %950 {offsets = [0, 0, 0], sizes = [4, 16, 1], strides = [1, 1, 1]} : vector<4x16x128xf32> to vector<4x16x1xf32>
    %969 = tpu.concatenate %967, %968 in 2 : vector<4x16x127xf32>, vector<4x16x1xf32> -> vector<4x16x128xf32>
    %970 = arith.select %23, %950, %969 : vector<4x16x128xi1>, vector<4x16x128xf32>
    %c7_498 = arith.constant 7 : index
    %c0_499 = arith.constant 0 : index
    %c0_500 = arith.constant 0 : index
    %971 = vector.load %arg4[%c7_498, %c0_499, %c0_500] : memref<16x16x128xf32, #tpu.memory_space<vmem>>, vector<1x16x128xf32>
    %972 = vector.shape_cast %971 : vector<1x16x128xf32> to vector<16x128xf32>
    %973 = vector.shape_cast %972 : vector<16x128xf32> to vector<1x16x128xf32>
    %974 = vector.broadcast %973 : vector<1x16x128xf32> to vector<4x16x128xf32>
    %975 = arith.mulf %970, %974 : vector<4x16x128xf32>
    %976 = arith.addf %966, %975 : vector<4x16x128xf32>
    %977 = vector.extract_strided_slice %950 {offsets = [0, 1, 0], sizes = [4, 15, 128], strides = [1, 1, 1]} : vector<4x16x128xf32> to vector<4x15x128xf32>
    %978 = vector.extract_strided_slice %950 {offsets = [0, 0, 0], sizes = [4, 1, 128], strides = [1, 1, 1]} : vector<4x16x128xf32> to vector<4x1x128xf32>
    %979 = tpu.concatenate %977, %978 in 1 : vector<4x15x128xf32>, vector<4x1x128xf32> -> vector<4x16x128xf32>
    %980 = arith.select %19, %950, %979 : vector<4x16x128xi1>, vector<4x16x128xf32>
    %c14_501 = arith.constant 14 : index
    %c0_502 = arith.constant 0 : index
    %c0_503 = arith.constant 0 : index
    %981 = vector.load %arg4[%c14_501, %c0_502, %c0_503] : memref<16x16x128xf32, #tpu.memory_space<vmem>>, vector<1x16x128xf32>
    %982 = vector.shape_cast %981 : vector<1x16x128xf32> to vector<16x128xf32>
    %983 = vector.shape_cast %982 : vector<16x128xf32> to vector<1x16x128xf32>
    %984 = vector.broadcast %983 : vector<1x16x128xf32> to vector<4x16x128xf32>
    %985 = arith.mulf %980, %984 : vector<4x16x128xf32>
    %986 = arith.addf %976, %985 : vector<4x16x128xf32>
    %987 = vector.extract_strided_slice %980 {offsets = [0, 0, 127], sizes = [4, 16, 1], strides = [1, 1, 1]} : vector<4x16x128xf32> to vector<4x16x1xf32>
    %988 = vector.extract_strided_slice %980 {offsets = [0, 0, 0], sizes = [4, 16, 127], strides = [1, 1, 1]} : vector<4x16x128xf32> to vector<4x16x127xf32>
    %989 = tpu.concatenate %987, %988 in 2 : vector<4x16x1xf32>, vector<4x16x127xf32> -> vector<4x16x128xf32>
    %990 = arith.select %25, %980, %989 : vector<4x16x128xi1>, vector<4x16x128xf32>
    %991 = vector.extract_strided_slice %990 {offsets = [0, 0, 127], sizes = [4, 16, 1], strides = [1, 1, 1]} : vector<4x16x128xf32> to vector<4x16x1xf32>
    %992 = vector.extract_strided_slice %990 {offsets = [0, 0, 0], sizes = [4, 16, 127], strides = [1, 1, 1]} : vector<4x16x128xf32> to vector<4x16x127xf32>
    %993 = tpu.concatenate %991, %992 in 2 : vector<4x16x1xf32>, vector<4x16x127xf32> -> vector<4x16x128xf32>
    %994 = arith.select %25, %990, %993 : vector<4x16x128xi1>, vector<4x16x128xf32>
    %c13_504 = arith.constant 13 : index
    %c0_505 = arith.constant 0 : index
    %c0_506 = arith.constant 0 : index
    %995 = vector.load %arg4[%c13_504, %c0_505, %c0_506] : memref<16x16x128xf32, #tpu.memory_space<vmem>>, vector<1x16x128xf32>
    %996 = vector.shape_cast %995 : vector<1x16x128xf32> to vector<16x128xf32>
    %997 = vector.shape_cast %996 : vector<16x128xf32> to vector<1x16x128xf32>
    %998 = vector.broadcast %997 : vector<1x16x128xf32> to vector<4x16x128xf32>
    %999 = arith.mulf %994, %998 : vector<4x16x128xf32>
    %1000 = arith.addf %986, %999 : vector<4x16x128xf32>
    %1001 = vector.extract_strided_slice %980 {offsets = [0, 0, 1], sizes = [4, 16, 127], strides = [1, 1, 1]} : vector<4x16x128xf32> to vector<4x16x127xf32>
    %1002 = vector.extract_strided_slice %980 {offsets = [0, 0, 0], sizes = [4, 16, 1], strides = [1, 1, 1]} : vector<4x16x128xf32> to vector<4x16x1xf32>
    %1003 = tpu.concatenate %1001, %1002 in 2 : vector<4x16x127xf32>, vector<4x16x1xf32> -> vector<4x16x128xf32>
    %1004 = arith.select %23, %980, %1003 : vector<4x16x128xi1>, vector<4x16x128xf32>
    %1005 = vector.extract_strided_slice %1004 {offsets = [0, 0, 1], sizes = [4, 16, 127], strides = [1, 1, 1]} : vector<4x16x128xf32> to vector<4x16x127xf32>
    %1006 = vector.extract_strided_slice %1004 {offsets = [0, 0, 0], sizes = [4, 16, 1], strides = [1, 1, 1]} : vector<4x16x128xf32> to vector<4x16x1xf32>
    %1007 = tpu.concatenate %1005, %1006 in 2 : vector<4x16x127xf32>, vector<4x16x1xf32> -> vector<4x16x128xf32>
    %1008 = arith.select %23, %1004, %1007 : vector<4x16x128xi1>, vector<4x16x128xf32>
    %c15_507 = arith.constant 15 : index
    %c0_508 = arith.constant 0 : index
    %c0_509 = arith.constant 0 : index
    %1009 = vector.load %arg4[%c15_507, %c0_508, %c0_509] : memref<16x16x128xf32, #tpu.memory_space<vmem>>, vector<1x16x128xf32>
    %1010 = vector.shape_cast %1009 : vector<1x16x128xf32> to vector<16x128xf32>
    %1011 = vector.shape_cast %1010 : vector<16x128xf32> to vector<1x16x128xf32>
    %1012 = vector.broadcast %1011 : vector<1x16x128xf32> to vector<4x16x128xf32>
    %1013 = arith.mulf %1008, %1012 : vector<4x16x128xf32>
    %1014 = arith.addf %1000, %1013 : vector<4x16x128xf32>
    %c0_510 = arith.constant 0 : index
    %c0_511 = arith.constant 0 : index
    %c0_512 = arith.constant 0 : index
    %c0_513 = arith.constant 0 : index
    %1015 = vector.load %arg3[%c0_510, %c0_511, %c0_512, %c0_513] : memref<1x4x16x128xf32, #tpu.memory_space<vmem>>, vector<1x4x16x128xf32>
    %1016 = vector.shape_cast %1015 : vector<1x4x16x128xf32> to vector<4x16x128xf32>
    %1017 = vector.shape_cast %1014 : vector<4x16x128xf32> to vector<1x4x16x128xf32>
    tpu.vector_store %arg3[%c0_510, %c0_511, %c0_512, %c0_513], %1017 {strides = array<i32>} : memref<1x4x16x128xf32, #tpu.memory_space<vmem>>, vector<1x4x16x128xf32>,
    return
  }
  func.func @transform_0(%arg0: i32) -> (i32, i32, i32, i32) {
    %c0_i32 = arith.constant 0 : i32
    %c0_i32_0 = arith.constant 0 : i32
    %c0_i32_1 = arith.constant 0 : i32
    %c0_i32_2 = arith.constant 0 : i32
    return %arg0, %c0_i32, %c0_i32_0, %c0_i32_1 : i32, i32, i32, i32
  }
  func.func @transform_1(%arg0: i32) -> (i32, i32, i32, i32) {
    %c0_i32 = arith.constant 0 : i32
    %c0_i32_0 = arith.constant 0 : i32
    %c0_i32_1 = arith.constant 0 : i32
    %c0_i32_2 = arith.constant 0 : i32
    return %arg0, %c0_i32, %c0_i32_0, %c0_i32_1 : i32, i32, i32, i32
  }
  func.func @transform_2(%arg0: i32) -> (i32, i32, i32, i32) {
    %c0_i32 = arith.constant 0 : i32
    %c0_i32_0 = arith.constant 0 : i32
    %c0_i32_1 = arith.constant 0 : i32
    %c0_i32_2 = arith.constant 0 : i32
    return %arg0, %c0_i32, %c0_i32_0, %c0_i32_1 : i32, i32, i32, i32
  }
}

</mosaic_0001>

<llo_original>
// kernel: tpu_custom_call.1
$region0: #{tpu_custom_call.1}
  #allocation0 [shape = 'u32[]', space=smem, size = 0x4, offset = 0x4, fixed_abs, tag = 'smem constant byte address 0x4 - core index']
  #allocation1 [shape = 'u32[144,128]{1,0:T(1,128)}', space=vmem, size = 0x12000, scoped, tag = 'internal scratch']
  %s0 = inlined_call_operand.hbm [shape: f32[2,8,128], index: 0, kind: input, shape index: {}]
  %s1 = inlined_call_operand.hbm [shape: f32[2,8,128], index: 1, kind: output, shape index: {}]
  %s2 = sld [smem:[#allocation0]]
  $region18: #{tpu_custom_call.1} parent=0
    _
  %s4 = ssub.s32 1, %s2
  %s5 = scalar_select 0, %s4, %s2
  $region1: #{tpu_custom_call.1} parent=0
    #allocation2 [shape = 'u8[8192]{0}', space=vmem, size = 0x2000, scoped, tag = 'input window, operand 0, single buffered']
    #allocation3 [shape = 's32[1]{0}', space=sflag, size = 0x4, scoped, tag = 'scoped memory for tpu_custom_call.1']
    #allocation4 [shape = 's32[1]{0}', space=sflag, size = 0x4, scoped, tag = 'scoped memory for tpu_custom_call.1']
    #allocation5 [shape = 'u8[8192]{0}', space=vmem, size = 0x2000, scoped, tag = 'output window, operand 0, single buffered']
    %6 = vsyncpa [#allocation3], 0
    %7 = vsyncpa [#allocation4], 0
    // Predicated region
    $region2: #{tpu_custom_call.1} parent=1 // pred_check
      _
    $region3: #{tpu_custom_call.1} parent=1 // pred_check_branch
      %9 = sbr.rel (0) target = $region5
    $region4: #{tpu_custom_call.1} parent=1 // pred_region
      %s11 = ssub.s32 256, 256
      %12 = vsyncadd [#allocation3], %s11
      %s13 = sshll.u32 [#allocation2], 4
      %s14 = int_to_ptr.vmem [resolvable:$true] %s13
      %19 = dma.hbm_to_vmem [thread:$0]  %s0, 256, %s14, [#allocation3], 128, 128, 8
    $region5: #{tpu_custom_call.1} parent=1 // pred_fallthru
      _
    // Predicated region
    $region6: #{tpu_custom_call.1} parent=1 // pred_check
      _
    $region7: #{tpu_custom_call.1} parent=1 // pred_check_branch
      %21 = sbr.rel (0) target = $region9
    $region8: #{tpu_custom_call.1} parent=1 // pred_region
      %22 = dma.done [#allocation3], 256
    $region9: #{tpu_custom_call.1} parent=1 // pred_fallthru
      _
    %v23 = vld [vmem:[#allocation2] sm:$0xff]
    %v24 = vld [vmem:[#allocation2 + $0x8] sm:$0xff]
    %25 = vrot.lane.b32.xlu0 %v23, 1
    %v26 = vpop.permute.xlu0 %25
    %27 = vrot.lane.b32.xlu0 %v24, 1
    %v28 = vpop.permute.xlu0 %27
    %v29 = vrot.slane %v26, 7
    %v30 = vrot.slane %v28, 7
    %31 = vst [vmem:[#allocation5] sm:$0xff] %v29
    %32 = vst [vmem:[#allocation5 + $0x8] sm:$0xff] %v30
    // Predicated region
    $region10: #{tpu_custom_call.1} parent=1 // pred_check
      _
    $region11: #{tpu_custom_call.1} parent=1 // pred_check_branch
      %34 = sbr.rel (0) target = $region13
    $region12: #{tpu_custom_call.1} parent=1 // pred_region
      %s36 = ssub.s32 256, 256
      %37 = vsyncadd [#allocation4], %s36
      %s38 = sshll.u32 [#allocation5], 4
      %s39 = int_to_ptr.vmem [resolvable:$true] %s38
      %44 = dma.vmem_to_hbm [thread:$0]  %s39, 256, %s1, [#allocation4], 128, 128, 8
    $region13: #{tpu_custom_call.1} parent=1 // pred_fallthru
      _
    // Predicated region
    $region14: #{tpu_custom_call.1} parent=1 // pred_check
      _
    $region15: #{tpu_custom_call.1} parent=1 // pred_check_branch
      %46 = sbr.rel (0) target = $region17
    $region16: #{tpu_custom_call.1} parent=1 // pred_region
      %47 = dma.done [#allocation4], 256
    $region17: #{tpu_custom_call.1} parent=1 // pred_fallthru
      _
    %48 = vsyncpa [#allocation3], 1
    %49 = vsyncpa [#allocation4], 1

// kernel: tpu_custom_call.1
$region0: #{tpu_custom_call.1}
  #allocation0 [shape = 'u32[]', space=smem, size = 0x4, offset = 0x4, fixed_abs, tag = 'smem constant byte address 0x4 - core index']
  #allocation1 [shape = 'u32[144,128]{1,0:T(1,128)}', space=vmem, size = 0x12000, scoped, tag = 'internal scratch']
  #allocation2 [shape = 'f32[16,16,128]{2,1,0:T(8,128)}', space=vmem, size = 0x20000, scoped, tag = 'scratch operand']
  #allocation3 [shape = 'f32[16,3,16,128]{3,2,1,0:T(8,128)}', space=vmem, size = 0x60000, scoped, tag = 'scratch operand']
  %s0 = inlined_call_operand.hbm [shape: f32[2,3,16,128], index: 0, kind: input, shape index: {}]
  %s1 = inlined_call_operand.hbm [shape: f32[2,4,16,128], index: 1, kind: input, shape index: {}]
  %s2 = inlined_call_operand.hbm [shape: f32[2,4,16,128], index: 2, kind: output, shape index: {}]
  %s3 = sld [smem:[#allocation0]]
  $region49: #{tpu_custom_call.1} parent=0
    _
  %s5 = ssub.s32 1, %s3
  %s6 = scalar_select 0, %s5, %s3
  $region1: #{tpu_custom_call.1} parent=0
    #allocation4 [shape = 'u8[49152]{0}', space=vmem, size = 0xc000, scoped, tag = 'input window, operand 0']
    #allocation5 [shape = 's32[2]{0}', space=sflag, size = 0x8, scoped, tag = 'scoped memory for tpu_custom_call.1']
    #allocation6 [shape = 's32[2]{0}', space=sflag, size = 0x8, scoped, tag = 'scoped memory for tpu_custom_call.1']
    #allocation7 [shape = 'u8[65536]{0}', space=vmem, size = 0x10000, scoped, tag = 'input window, operand 1']
    #allocation8 [shape = 's32[2]{0}', space=sflag, size = 0x8, scoped, tag = 'scoped memory for tpu_custom_call.1']
    #allocation9 [shape = 'u8[65536]{0}', space=vmem, size = 0x10000, scoped, tag = 'output window, operand 0']
    %7 = vsyncpa [#allocation5], 0
    %s8 = scalar_lea.sflag [#allocation5], 1
    %9 = vsyncpa %s8, 0
    %10 = vsyncpa [#allocation8], 0
    %s11 = scalar_lea.sflag [#allocation8], 1
    %12 = vsyncpa %s11, 0
    %13 = vsyncpa [#allocation6], 0
    %s14 = scalar_lea.sflag [#allocation6], 1
    %15 = vsyncpa %s14, 0
    loop: start=0, step=1, limit=4
    $region2: #{tpu_custom_call.1} parent=1 // loop_pre_header
      _
    $region3: #{tpu_custom_call.1} parent=1 // loop_header
      %s17 = sphi 0, %s21
      %p18 = scmp.ge.s32.totalorder %s17, 4
      %s27 = sphi 0, %s29
      %s30 = sphi 0, %s27
      %s31 = sphi 0, %s30
      %s47 = sphi 0, %s31
      %s53 = sphi 0, %s55
      %s56 = sphi 0, %s53
      %s57 = sphi 0, %s56
      %s73 = sphi 0, %s57
      %s79 = sphi 0, %s81
      %s82 = sphi 0, %s79
      %s83 = sphi 0, %s82
      %s99 = sphi 0, %s83
    $region4: #{tpu_custom_call.1} parent=1 // loop_header_branch
      %20 = sbr.rel (%p18) target = $region8
    $region5: #{tpu_custom_call.1} parent=1 // loop_body
      %s22 = ssub.s32 %s17, 1
      %s23 = ssub.s32 %s17, 2
      %s24 = sadd.s32 %s17, 1
      %s25 = ssub.s32 %s17, %s24
      %p26 = scmp.eq.s32.totalorder %s25, 0
      %s28 = sadd.s32 %s27, 1
      %s29 = scalar_select %p26, %s27, %s28
      %p32 = pneg %p26
      %p33 = scmp.eq.s32.totalorder %s17, 1
      %p34 = por %p32, %p33
      %p35 = scmp.ne.s32.totalorder %s27, %s30
      %p36 = scmp.eq.s32.totalorder %s17, 0
      %p37 = por %p35, %p36
      %p38 = scmp.ne.s32.totalorder %s27, %s30
      %p39 = scmp.eq.s32.totalorder %s22, 1
      %p40 = por %p38, %p39
      %p41 = scmp.ne.s32.totalorder %s30, %s31
      %p42 = scmp.eq.s32.totalorder %s22, 0
      %p43 = por %p41, %p42
      %p44 = scmp.ne.s32.totalorder %s30, %s31
      %p45 = scmp.eq.s32.totalorder %s23, 1
      %p46 = por %p44, %p45
      %p48 = scmp.ne.s32.totalorder %s31, %s47
      %p49 = scmp.eq.s32.totalorder %s23, 0
      %p50 = por %p48, %p49
      %s51 = ssub.s32 %s17, %s24
      %p52 = scmp.eq.s32.totalorder %s51, 0
      %s54 = sadd.s32 %s53, 1
      %s55 = scalar_select %p52, %s53, %s54
      %p58 = pneg %p52
      %p59 = scmp.eq.s32.totalorder %s17, 1
      %p60 = por %p58, %p59
      %p61 = scmp.ne.s32.totalorder %s53, %s56
      %p62 = scmp.eq.s32.totalorder %s17, 0
      %p63 = por %p61, %p62
      %p64 = scmp.ne.s32.totalorder %s53, %s56
      %p65 = scmp.eq.s32.totalorder %s22, 1
      %p66 = por %p64, %p65
      %p67 = scmp.ne.s32.totalorder %s56, %s57
      %p68 = scmp.eq.s32.totalorder %s22, 0
      %p69 = por %p67, %p68
      %p70 = scmp.ne.s32.totalorder %s56, %s57
      %p71 = scmp.eq.s32.totalorder %s23, 1
      %p72 = por %p70, %p71
      %p74 = scmp.ne.s32.totalorder %s57, %s73
      %p75 = scmp.eq.s32.totalorder %s23, 0
      %p76 = por %p74, %p75
      %s77 = ssub.s32 %s17, %s24
      %p78 = scmp.eq.s32.totalorder %s77, 0
      %s80 = sadd.s32 %s79, 1
      %s81 = scalar_select %p78, %s79, %s80
      %p84 = pneg %p78
      %p85 = scmp.eq.s32.totalorder %s17, 1
      %p86 = por %p84, %p85
      %p87 = scmp.ne.s32.totalorder %s79, %s82
      %p88 = scmp.eq.s32.totalorder %s17, 0
      %p89 = por %p87, %p88
      %p90 = scmp.ne.s32.totalorder %s79, %s82
      %p91 = scmp.eq.s32.totalorder %s22, 1
      %p92 = por %p90, %p91
      %p93 = scmp.ne.s32.totalorder %s82, %s83
      %p94 = scmp.eq.s32.totalorder %s22, 0
      %p95 = por %p93, %p94
      %p96 = scmp.ne.s32.totalorder %s82, %s83
      %p97 = scmp.eq.s32.totalorder %s23, 1
      %p98 = por %p96, %p97
      %p100 = scmp.ne.s32.totalorder %s83, %s99
      %p101 = scmp.eq.s32.totalorder %s23, 0
      %p102 = por %p100, %p101
      %p103 = scmp.le.s32.totalorder 1, %s17
      %p104 = scmp.lt.s32.totalorder %s17, 3
      %p105 = pnand %p103, %p104
      %p106 = pneg %p105
      // Predicated region
      $region9: #{tpu_custom_call.1} parent=5 // pred_check
        _
      $region10: #{tpu_custom_call.1} parent=5 // pred_check_branch
        %108 = sbr.rel (%p105) target = $region12
      $region11: #{tpu_custom_call.1} parent=5 // pred_region
        %s109 = ssub.s32 %s17, 1
      $region12: #{tpu_custom_call.1} parent=5 // pred_fallthru
        _
      %p110 = scmp.lt.s32.totalorder %s17, 2
      // Predicated region
      $region13: #{tpu_custom_call.1} parent=5 // pred_check
        %p111 = pneg %p110
      $region14: #{tpu_custom_call.1} parent=5 // pred_check_branch
        %113 = sbr.rel (%p111) target = $region16
      $region15: #{tpu_custom_call.1} parent=5 // pred_region
        // Predicated region
        $region17: #{tpu_custom_call.1} parent=15 // pred_check
          %p114 = pneg %p37
        $region18: #{tpu_custom_call.1} parent=15 // pred_check_branch
          %116 = sbr.rel (%p114) target = $region20
        $region19: #{tpu_custom_call.1} parent=15 // pred_region
          %s117 = sand.u32 %s27, 1
          %s118 = scalar_lea.sflag [#allocation5], %s117
          %s119 = sand.u32 %s27, 1
          %s120 = smul.addr %s119, 48
          %s121 = scalar_lea.vmem [#allocation4], %s120
          %s123 = ssub.s32 768, 768
          %124 = vsyncadd %s118, %s123
          %s125 = smul.addr %s17, 6
          %s126 = smul.addr %s125, 128
          %s127 = scalar_lea.hbm %s0, %s126
          %s128 = sshll.u32 %s121, 4
          %s129 = int_to_ptr.vmem [resolvable:$true] %s128
          %134 = dma.hbm_to_vmem [thread:$0]  %s127, 768, %s129, %s118, 128, 128, 8
        $region20: #{tpu_custom_call.1} parent=15 // pred_fallthru
          _
        // Predicated region
        $region21: #{tpu_custom_call.1} parent=15 // pred_check
          %p135 = pneg %p63
        $region22: #{tpu_custom_call.1} parent=15 // pred_check_branch
          %137 = sbr.rel (%p135) target = $region24
        $region23: #{tpu_custom_call.1} parent=15 // pred_region
          %s138 = sand.u32 %s53, 1
          %s139 = scalar_lea.sflag [#allocation8], %s138
          %s140 = sand.u32 %s53, 1
          %s141 = smul.addr %s140, 64
          %s142 = scalar_lea.vmem [#allocation7], %s141
          %s144 = ssub.s32 1024, 1024
          %145 = vsyncadd %s139, %s144
          %s146 = smul.addr %s17, 8
          %s147 = smul.addr %s146, 128
          %s148 = scalar_lea.hbm %s1, %s147
          %s149 = sshll.u32 %s142, 4
          %s150 = int_to_ptr.vmem [resolvable:$true] %s149
          %155 = dma.hbm_to_vmem [thread:$0]  %s148, 1024, %s150, %s139, 128, 128, 8
        $region24: #{tpu_custom_call.1} parent=15 // pred_fallthru
          _
      $region16: #{tpu_custom_call.1} parent=5 // pred_fallthru
        _
      %p156 = scmp.le.s32.totalorder 1, %s17
      %p157 = scmp.lt.s32.totalorder %s17, 3
      %p158 = pnand %p156, %p157
      %p159 = pneg %p158
      // Predicated region
      $region25: #{tpu_custom_call.1} parent=5 // pred_check
        _
      $region26: #{tpu_custom_call.1} parent=5 // pred_check_branch
        %161 = sbr.rel (%p158) target = $region28
      $region27: #{tpu_custom_call.1} parent=5 // pred_region
        %s162 = ssub.s32 %s17, 1
        %s163 = sand.u32 %s30, 1
        %s164 = scalar_lea.sflag [#allocation5], %s163
        %s165 = sand.u32 %s30, 1
        %s166 = smul.addr %s165, 48
        %s167 = scalar_lea.vmem [#allocation4], %s166
        // Predicated region
        $region29: #{tpu_custom_call.1} parent=27 // pred_check
          %p168 = pneg %p43
        $region30: #{tpu_custom_call.1} parent=27 // pred_check_branch
          %170 = sbr.rel (%p168) target = $region32
        $region31: #{tpu_custom_call.1} parent=27 // pred_region
          %171 = dma.done %s164, 768
        $region32: #{tpu_custom_call.1} parent=27 // pred_fallthru
          _
        %s172 = sand.u32 %s56, 1
        %s173 = scalar_lea.sflag [#allocation8], %s172
        %s174 = sand.u32 %s56, 1
        %s175 = smul.addr %s174, 64
        %s176 = scalar_lea.vmem [#allocation7], %s175
        // Predicated region
        $region33: #{tpu_custom_call.1} parent=27 // pred_check
          %p177 = pneg %p69
        $region34: #{tpu_custom_call.1} parent=27 // pred_check_branch
          %179 = sbr.rel (%p177) target = $region36
        $region35: #{tpu_custom_call.1} parent=27 // pred_region
          %180 = dma.done %s173, 1024
        $region36: #{tpu_custom_call.1} parent=27 // pred_fallthru
          _
        %s181 = sand.u32 %s30, 1
        %s182 = scalar_lea.sflag [#allocation5], %s181
        %s183 = sand.u32 %s30, 1
        %s184 = smul.addr %s183, 48
        %s185 = scalar_lea.vmem [#allocation4], %s184
        %p186 = pneg %p43
        %p187 = pneg %p40
        %s188 = sand.u32 %s56, 1
        %s189 = scalar_lea.sflag [#allocation8], %s188
        %s190 = sand.u32 %s56, 1
        %s191 = smul.addr %s190, 64
        %s192 = scalar_lea.vmem [#allocation7], %s191
        %p193 = pneg %p69
        %p194 = pneg %p66
        %p195 = pneg %p95
        %p196 = pneg %p92
        %s197 = sand.u32 %s82, 1
        %s198 = scalar_lea.sflag [#allocation6], %s197
        %s199 = sand.u32 %s82, 1
        %s200 = smul.addr %s199, 64
        %s201 = scalar_lea.vmem [#allocation9], %s200
        %v202 = vlaneseq
        %v203 = vshrl.u32 %v202, 7
        %v204 = vadd.s32 %v203, 8
        %v205 = vlaneseq
        %v206 = vand.u32 %v205, 127
        %vm207 = vcmp.ge.s32.totalorder %v203, 15
        %vm208 = vcmp.ge.s32.totalorder %v204, 15
        %vm209 = vcmp.lt.s32.totalorder %v203, 1
        %vm210 = vcmp.lt.s32.totalorder %v204, 1
        %vm211 = vcmp.ge.s32.totalorder %v206, 15
        %vm212 = vcmp.lt.s32.totalorder %v206, 1
        %v213 = vsel %vm207, 1, 0
        %v214 = vsel %vm208, 1, 0
        %vm215 = vcmp.eq.s32.totalorder %v213, 1
        %vm216 = vcmp.eq.s32.totalorder %v214, 1
        %v217 = vsel %vm209, 1, 0
        %v218 = vsel %vm210, 1, 0
        %vm219 = vcmp.eq.s32.totalorder %v217, 1
        %vm220 = vcmp.eq.s32.totalorder %v218, 1
        %v221 = vsel %vm211, 1, 0
        %vm222 = vcmp.eq.s32.totalorder %v221, 1
        %v223 = vsel %vm212, 1, 0
        %vm224 = vcmp.eq.s32.totalorder %v223, 1
        %v225 = vld [vmem:[%s167] sm:$0xff]
        %v226 = vld [vmem:[%s167 + $0x8] sm:$0xff]
        %v227 = vld [vmem:[%s167 + $0x10] sm:$0xff]
        %v228 = vld [vmem:[%s167 + $0x18] sm:$0xff]
        %v229 = vld [vmem:[%s167 + $0x20] sm:$0xff]
        %v230 = vld [vmem:[%s167 + $0x28] sm:$0xff]
        %237 = vrot.lane.b32.xlu0 %v225, 1
        %v238 = vpop.permute.xlu0 %237
        %239 = vrot.lane.b32.xlu0 %v226, 1
        %v240 = vpop.permute.xlu0 %239
        %241 = vrot.lane.b32.xlu0 %v227, 1
        %v242 = vpop.permute.xlu0 %241
        %243 = vrot.lane.b32.xlu0 %v228, 1
        %v244 = vpop.permute.xlu0 %243
        %245 = vrot.lane.b32.xlu0 %v229, 1
        %v246 = vpop.permute.xlu0 %245
        %247 = vrot.lane.b32.xlu0 %v230, 1
        %v248 = vpop.permute.xlu0 %247
        %v255 = vsel %vm224, %v225, %v238
        %v256 = vsel %vm224, %v226, %v240
        %v257 = vsel %vm224, %v227, %v242
        %v258 = vsel %vm224, %v228, %v244
        %v259 = vsel %vm224, %v229, %v246
        %v260 = vsel %vm224, %v230, %v248
        %v261 = vsub.f32 %v255, %v225
        %v262 = vsub.f32 %v256, %v226
        %v263 = vsub.f32 %v257, %v227
        %v264 = vsub.f32 %v258, %v228
        %v265 = vsub.f32 %v259, %v229
        %v266 = vsub.f32 %v260, %v230
        %s267 = scalar_lea.vmem [#allocation3], 144
        %268 = vst [vmem:[%s267] sm:$0xff] %v261
        %269 = vst [vmem:[%s267 + $0x8] sm:$0xff] %v262
        %270 = vst [vmem:[%s267 + $0x10] sm:$0xff] %v263
        %271 = vst [vmem:[%s267 + $0x18] sm:$0xff] %v264
        %272 = vst [vmem:[%s267 + $0x20] sm:$0xff] %v265
        %273 = vst [vmem:[%s267 + $0x28] sm:$0xff] %v266
        %v274 = vmul.f32 %v261, %v261
        %v275 = vmul.f32 %v262, %v262
        %v276 = vmul.f32 %v263, %v263
        %v277 = vmul.f32 %v264, %v264
        %v278 = vmul.f32 %v265, %v265
        %v279 = vmul.f32 %v266, %v266
        %286 = vrot.lane.b32.xlu0 %v255, 1
        %v287 = vpop.permute.xlu0 %286
        %288 = vrot.lane.b32.xlu0 %v256, 1
        %v289 = vpop.permute.xlu0 %288
        %290 = vrot.lane.b32.xlu0 %v257, 1
        %v291 = vpop.permute.xlu0 %290
        %292 = vrot.lane.b32.xlu0 %v258, 1
        %v293 = vpop.permute.xlu0 %292
        %294 = vrot.lane.b32.xlu0 %v259, 1
        %v295 = vpop.permute.xlu0 %294
        %296 = vrot.lane.b32.xlu0 %v260, 1
        %v297 = vpop.permute.xlu0 %296
        %v304 = vsel %vm224, %v225, %v287
        %v305 = vsel %vm224, %v226, %v289
        %v306 = vsel %vm224, %v227, %v291
        %v307 = vsel %vm224, %v228, %v293
        %v308 = vsel %vm224, %v229, %v295
        %v309 = vsel %vm224, %v230, %v297
        %v310 = vsub.f32 %v304, %v225
        %v311 = vsub.f32 %v305, %v226
        %v312 = vsub.f32 %v306, %v227
        %v313 = vsub.f32 %v307, %v228
        %v314 = vsub.f32 %v308, %v229
        %v315 = vsub.f32 %v309, %v230
        %s316 = scalar_lea.vmem [#allocation3], 528
        %317 = vst [vmem:[%s316] sm:$0xff] %v310
        %318 = vst [vmem:[%s316 + $0x8] sm:$0xff] %v311
        %319 = vst [vmem:[%s316 + $0x10] sm:$0xff] %v312
        %320 = vst [vmem:[%s316 + $0x18] sm:$0xff] %v313
        %321 = vst [vmem:[%s316 + $0x20] sm:$0xff] %v314
        %322 = vst [vmem:[%s316 + $0x28] sm:$0xff] %v315
        %v323 = vadd.f32 %v261, %v310
        %v324 = vadd.f32 %v262, %v311
        %v325 = vadd.f32 %v263, %v312
        %v326 = vadd.f32 %v264, %v313
        %v327 = vadd.f32 %v265, %v314
        %v328 = vadd.f32 %v266, %v315
        %v329 = vmul.f32 %v310, %v310
        %v330 = vmul.f32 %v311, %v311
        %v331 = vmul.f32 %v312, %v312
        %v332 = vmul.f32 %v313, %v313
        %v333 = vmul.f32 %v314, %v314
        %v334 = vmul.f32 %v315, %v315
        %v335 = vadd.f32 %v274, %v329
        %v336 = vadd.f32 %v275, %v330
        %v337 = vadd.f32 %v276, %v331
        %v338 = vadd.f32 %v277, %v332
        %v339 = vadd.f32 %v278, %v333
        %v340 = vadd.f32 %v279, %v334
        %341 = vrot.lane.b32.xlu0 %v225, 127
        %v342 = vpop.permute.xlu0 %341
        %343 = vrot.lane.b32.xlu0 %v226, 127
        %v344 = vpop.permute.xlu0 %343
        %345 = vrot.lane.b32.xlu0 %v227, 127
        %v346 = vpop.permute.xlu0 %345
        %347 = vrot.lane.b32.xlu0 %v228, 127
        %v348 = vpop.permute.xlu0 %347
        %349 = vrot.lane.b32.xlu0 %v229, 127
        %v350 = vpop.permute.xlu0 %349
        %351 = vrot.lane.b32.xlu0 %v230, 127
        %v352 = vpop.permute.xlu0 %351
        %v359 = vsel %vm222, %v225, %v342
        %v360 = vsel %vm222, %v226, %v344
        %v361 = vsel %vm222, %v227, %v346
        %v362 = vsel %vm222, %v228, %v348
        %v363 = vsel %vm222, %v229, %v350
        %v364 = vsel %vm222, %v230, %v352
        %v365 = vsub.f32 %v359, %v225
        %v366 = vsub.f32 %v360, %v226
        %v367 = vsub.f32 %v361, %v227
        %v368 = vsub.f32 %v362, %v228
        %v369 = vsub.f32 %v363, %v229
        %v370 = vsub.f32 %v364, %v230
        %s371 = scalar_lea.vmem [#allocation3], 192
        %372 = vst [vmem:[%s371] sm:$0xff] %v365
        %373 = vst [vmem:[%s371 + $0x8] sm:$0xff] %v366
        %374 = vst [vmem:[%s371 + $0x10] sm:$0xff] %v367
        %375 = vst [vmem:[%s371 + $0x18] sm:$0xff] %v368
        %376 = vst [vmem:[%s371 + $0x20] sm:$0xff] %v369
        %377 = vst [vmem:[%s371 + $0x28] sm:$0xff] %v370
        %v378 = vadd.f32 %v323, %v365
        %v379 = vadd.f32 %v324, %v366
        %v380 = vadd.f32 %v325, %v367
        %v381 = vadd.f32 %v326, %v368
        %v382 = vadd.f32 %v327, %v369
        %v383 = vadd.f32 %v328, %v370
        %v384 = vmul.f32 %v365, %v365
        %v385 = vmul.f32 %v366, %v366
        %v386 = vmul.f32 %v367, %v367
        %v387 = vmul.f32 %v368, %v368
        %v388 = vmul.f32 %v369, %v369
        %v389 = vmul.f32 %v370, %v370
        %v390 = vadd.f32 %v335, %v384
        %v391 = vadd.f32 %v336, %v385
        %v392 = vadd.f32 %v337, %v386
        %v393 = vadd.f32 %v338, %v387
        %v394 = vadd.f32 %v339, %v388
        %v395 = vadd.f32 %v340, %v389
        %402 = vrot.lane.b32.xlu0 %v359, 127
        %v403 = vpop.permute.xlu0 %402
        %404 = vrot.lane.b32.xlu0 %v360, 127
        %v405 = vpop.permute.xlu0 %404
        %406 = vrot.lane.b32.xlu0 %v361, 127
        %v407 = vpop.permute.xlu0 %406
        %408 = vrot.lane.b32.xlu0 %v362, 127
        %v409 = vpop.permute.xlu0 %408
        %410 = vrot.lane.b32.xlu0 %v363, 127
        %v411 = vpop.permute.xlu0 %410
        %412 = vrot.lane.b32.xlu0 %v364, 127
        %v413 = vpop.permute.xlu0 %412
        %v420 = vsel %vm222, %v225, %v403
        %v421 = vsel %vm222, %v226, %v405
        %v422 = vsel %vm222, %v227, %v407
        %v423 = vsel %vm222, %v228, %v409
        %v424 = vsel %vm222, %v229, %v411
        %v425 = vsel %vm222, %v230, %v413
        %v426 = vsub.f32 %v420, %v225
        %v427 = vsub.f32 %v421, %v226
        %v428 = vsub.f32 %v422, %v227
        %v429 = vsub.f32 %v423, %v228
        %v430 = vsub.f32 %v424, %v229
        %v431 = vsub.f32 %v425, %v230
        %s432 = scalar_lea.vmem [#allocation3], 576
        %433 = vst [vmem:[%s432] sm:$0xff] %v426
        %434 = vst [vmem:[%s432 + $0x8] sm:$0xff] %v427
        %435 = vst [vmem:[%s432 + $0x10] sm:$0xff] %v428
        %436 = vst [vmem:[%s432 + $0x18] sm:$0xff] %v429
        %437 = vst [vmem:[%s432 + $0x20] sm:$0xff] %v430
        %438 = vst [vmem:[%s432 + $0x28] sm:$0xff] %v431
        %v439 = vadd.f32 %v378, %v426
        %v440 = vadd.f32 %v379, %v427
        %v441 = vadd.f32 %v380, %v428
        %v442 = vadd.f32 %v381, %v429
        %v443 = vadd.f32 %v382, %v430
        %v444 = vadd.f32 %v383, %v431
        %v445 = vmul.f32 %v426, %v426
        %v446 = vmul.f32 %v427, %v427
        %v447 = vmul.f32 %v428, %v428
        %v448 = vmul.f32 %v429, %v429
        %v449 = vmul.f32 %v430, %v430
        %v450 = vmul.f32 %v431, %v431
        %v451 = vadd.f32 %v390, %v445
        %v452 = vadd.f32 %v391, %v446
        %v453 = vadd.f32 %v392, %v447
        %v454 = vadd.f32 %v393, %v448
        %v455 = vadd.f32 %v394, %v449
        %v456 = vadd.f32 %v395, %v450
        %v457 = vrot.slane %v226, 7
        %v458 = vrot.slane %v228, 7
        %v459 = vrot.slane %v230, 7
        %vm463 = vcmask 1040384
        %v464 = vrot.slane %v225, 7
        %v465 = vsel %vm463, %v464, %v457
        %v466 = vrot.slane %v227, 7
        %v467 = vsel %vm463, %v466, %v458
        %v468 = vrot.slane %v229, 7
        %v469 = vsel %vm463, %v468, %v459
        %v476 = vsel %vm463, %v457, %v464
        %v477 = vsel %vm463, %v458, %v466
        %v478 = vsel %vm463, %v459, %v468
        %v479 = vsel %vm219, %v225, %v476
        %v480 = vsel %vm220, %v226, %v465
        %v481 = vsel %vm219, %v227, %v477
        %v482 = vsel %vm220, %v228, %v467
        %v483 = vsel %vm219, %v229, %v478
        %v484 = vsel %vm220, %v230, %v469
        %v485 = vsub.f32 %v479, %v225
        %v486 = vsub.f32 %v480, %v226
        %v487 = vsub.f32 %v481, %v227
        %v488 = vsub.f32 %v482, %v228
        %v489 = vsub.f32 %v483, %v229
        %v490 = vsub.f32 %v484, %v230
        %s491 = scalar_lea.vmem [#allocation3], 48
        %492 = vst [vmem:[%s491] sm:$0xff] %v485
        %493 = vst [vmem:[%s491 + $0x8] sm:$0xff] %v486
        %494 = vst [vmem:[%s491 + $0x10] sm:$0xff] %v487
        %495 = vst [vmem:[%s491 + $0x18] sm:$0xff] %v488
        %496 = vst [vmem:[%s491 + $0x20] sm:$0xff] %v489
        %497 = vst [vmem:[%s491 + $0x28] sm:$0xff] %v490
        %v498 = vadd.f32 %v439, %v485
        %v499 = vadd.f32 %v440, %v486
        %v500 = vadd.f32 %v441, %v487
        %v501 = vadd.f32 %v442, %v488
        %v502 = vadd.f32 %v443, %v489
        %v503 = vadd.f32 %v444, %v490
        %v504 = vmul.f32 %v485, %v485
        %v505 = vmul.f32 %v486, %v486
        %v506 = vmul.f32 %v487, %v487
        %v507 = vmul.f32 %v488, %v488
        %v508 = vmul.f32 %v489, %v489
        %v509 = vmul.f32 %v490, %v490
        %v510 = vadd.f32 %v451, %v504
        %v511 = vadd.f32 %v452, %v505
        %v512 = vadd.f32 %v453, %v506
        %v513 = vadd.f32 %v454, %v507
        %v514 = vadd.f32 %v455, %v508
        %v515 = vadd.f32 %v456, %v509
        %522 = vrot.lane.b32.xlu0 %v479, 1
        %v523 = vpop.permute.xlu0 %522
        %524 = vrot.lane.b32.xlu0 %v480, 1
        %v525 = vpop.permute.xlu0 %524
        %526 = vrot.lane.b32.xlu0 %v481, 1
        %v527 = vpop.permute.xlu0 %526
        %528 = vrot.lane.b32.xlu0 %v482, 1
        %v529 = vpop.permute.xlu0 %528
        %530 = vrot.lane.b32.xlu0 %v483, 1
        %v531 = vpop.permute.xlu0 %530
        %532 = vrot.lane.b32.xlu0 %v484, 1
        %v533 = vpop.permute.xlu0 %532
        %v540 = vsel %vm224, %v479, %v523
        %v541 = vsel %vm224, %v480, %v525
        %v542 = vsel %vm224, %v481, %v527
        %v543 = vsel %vm224, %v482, %v529
        %v544 = vsel %vm224, %v483, %v531
        %v545 = vsel %vm224, %v484, %v533
        %v546 = vsub.f32 %v540, %v225
        %v547 = vsub.f32 %v541, %v226
        %v548 = vsub.f32 %v542, %v227
        %v549 = vsub.f32 %v543, %v228
        %v550 = vsub.f32 %v544, %v229
        %v551 = vsub.f32 %v545, %v230
        %552 = vst [vmem:[#allocation3] sm:$0xff] %v546
        %553 = vst [vmem:[#allocation3 + $0x8] sm:$0xff] %v547
        %554 = vst [vmem:[#allocation3 + $0x10] sm:$0xff] %v548
        %555 = vst [vmem:[#allocation3 + $0x18] sm:$0xff] %v549
        %556 = vst [vmem:[#allocation3 + $0x20] sm:$0xff] %v550
        %557 = vst [vmem:[#allocation3 + $0x28] sm:$0xff] %v551
        %v558 = vadd.f32 %v498, %v546
        %v559 = vadd.f32 %v499, %v547
        %v560 = vadd.f32 %v500, %v548
        %v561 = vadd.f32 %v501, %v549
        %v562 = vadd.f32 %v502, %v550
        %v563 = vadd.f32 %v503, %v551
        %v564 = vmul.f32 %v546, %v546
        %v565 = vmul.f32 %v547, %v547
        %v566 = vmul.f32 %v548, %v548
        %v567 = vmul.f32 %v549, %v549
        %v568 = vmul.f32 %v550, %v550
        %v569 = vmul.f32 %v551, %v551
        %v570 = vadd.f32 %v510, %v564
        %v571 = vadd.f32 %v511, %v565
        %v572 = vadd.f32 %v512, %v566
        %v573 = vadd.f32 %v513, %v567
        %v574 = vadd.f32 %v514, %v568
        %v575 = vadd.f32 %v515, %v569
        %576 = vrot.lane.b32.xlu0 %v479, 127
        %v577 = vpop.permute.xlu0 %576
        %578 = vrot.lane.b32.xlu0 %v480, 127
        %v579 = vpop.permute.xlu0 %578
        %580 = vrot.lane.b32.xlu0 %v481, 127
        %v581 = vpop.permute.xlu0 %580
        %582 = vrot.lane.b32.xlu0 %v482, 127
        %v583 = vpop.permute.xlu0 %582
        %584 = vrot.lane.b32.xlu0 %v483, 127
        %v585 = vpop.permute.xlu0 %584
        %586 = vrot.lane.b32.xlu0 %v484, 127
        %v587 = vpop.permute.xlu0 %586
        %v594 = vsel %vm222, %v479, %v577
        %v595 = vsel %vm222, %v480, %v579
        %v596 = vsel %vm222, %v481, %v581
        %v597 = vsel %vm222, %v482, %v583
        %v598 = vsel %vm222, %v483, %v585
        %v599 = vsel %vm222, %v484, %v587
        %v600 = vsub.f32 %v594, %v225
        %v601 = vsub.f32 %v595, %v226
        %v602 = vsub.f32 %v596, %v227
        %v603 = vsub.f32 %v597, %v228
        %v604 = vsub.f32 %v598, %v229
        %v605 = vsub.f32 %v599, %v230
        %s606 = scalar_lea.vmem [#allocation3], 96
        %607 = vst [vmem:[%s606] sm:$0xff] %v600
        %608 = vst [vmem:[%s606 + $0x8] sm:$0xff] %v601
        %609 = vst [vmem:[%s606 + $0x10] sm:$0xff] %v602
        %610 = vst [vmem:[%s606 + $0x18] sm:$0xff] %v603
        %611 = vst [vmem:[%s606 + $0x20] sm:$0xff] %v604
        %612 = vst [vmem:[%s606 + $0x28] sm:$0xff] %v605
        %v613 = vadd.f32 %v558, %v600
        %v614 = vadd.f32 %v559, %v601
        %v615 = vadd.f32 %v560, %v602
        %v616 = vadd.f32 %v561, %v603
        %v617 = vadd.f32 %v562, %v604
        %v618 = vadd.f32 %v563, %v605
        %v619 = vmul.f32 %v600, %v600
        %v620 = vmul.f32 %v601, %v601
        %v621 = vmul.f32 %v602, %v602
        %v622 = vmul.f32 %v603, %v603
        %v623 = vmul.f32 %v604, %v604
        %v624 = vmul.f32 %v605, %v605
        %v625 = vadd.f32 %v570, %v619
        %v626 = vadd.f32 %v571, %v620
        %v627 = vadd.f32 %v572, %v621
        %v628 = vadd.f32 %v573, %v622
        %v629 = vadd.f32 %v574, %v623
        %v630 = vadd.f32 %v575, %v624
        %v631 = vrot.slane %v480, 7
        %v632 = vrot.slane %v482, 7
        %v633 = vrot.slane %v484, 7
        %v637 = vrot.slane %v479, 7
        %v638 = vsel %vm463, %v637, %v631
        %v639 = vrot.slane %v481, 7
        %v640 = vsel %vm463, %v639, %v632
        %v641 = vrot.slane %v483, 7
        %v642 = vsel %vm463, %v641, %v633
        %v649 = vsel %vm463, %v631, %v637
        %v650 = vsel %vm463, %v632, %v639
        %v651 = vsel %vm463, %v633, %v641
        %v652 = vsel %vm219, %v225, %v649
        %v653 = vsel %vm220, %v226, %v638
        %v654 = vsel %vm219, %v227, %v650
        %v655 = vsel %vm220, %v228, %v640
        %v656 = vsel %vm219, %v229, %v651
        %v657 = vsel %vm220, %v230, %v642
        %v658 = vsub.f32 %v652, %v225
        %v659 = vsub.f32 %v653, %v226
        %v660 = vsub.f32 %v654, %v227
        %v661 = vsub.f32 %v655, %v228
        %v662 = vsub.f32 %v656, %v229
        %v663 = vsub.f32 %v657, %v230
        %s664 = scalar_lea.vmem [#allocation3], 432
        %665 = vst [vmem:[%s664] sm:$0xff] %v658
        %666 = vst [vmem:[%s664 + $0x8] sm:$0xff] %v659
        %667 = vst [vmem:[%s664 + $0x10] sm:$0xff] %v660
        %668 = vst [vmem:[%s664 + $0x18] sm:$0xff] %v661
        %669 = vst [vmem:[%s664 + $0x20] sm:$0xff] %v662
        %670 = vst [vmem:[%s664 + $0x28] sm:$0xff] %v663
        %v671 = vadd.f32 %v613, %v658
        %v672 = vadd.f32 %v614, %v659
        %v673 = vadd.f32 %v615, %v660
        %v674 = vadd.f32 %v616, %v661
        %v675 = vadd.f32 %v617, %v662
        %v676 = vadd.f32 %v618, %v663
        %v677 = vmul.f32 %v658, %v658
        %v678 = vmul.f32 %v659, %v659
        %v679 = vmul.f32 %v660, %v660
        %v680 = vmul.f32 %v661, %v661
        %v681 = vmul.f32 %v662, %v662
        %v682 = vmul.f32 %v663, %v663
        %v683 = vadd.f32 %v625, %v677
        %v684 = vadd.f32 %v626, %v678
        %v685 = vadd.f32 %v627, %v679
        %v686 = vadd.f32 %v628, %v680
        %v687 = vadd.f32 %v629, %v681
        %v688 = vadd.f32 %v630, %v682
        %695 = vrot.lane.b32.xlu0 %v652, 1
        %v696 = vpop.permute.xlu0 %695
        %697 = vrot.lane.b32.xlu0 %v653, 1
        %v698 = vpop.permute.xlu0 %697
        %699 = vrot.lane.b32.xlu0 %v654, 1
        %v700 = vpop.permute.xlu0 %699
        %701 = vrot.lane.b32.xlu0 %v655, 1
        %v702 = vpop.permute.xlu0 %701
        %703 = vrot.lane.b32.xlu0 %v656, 1
        %v704 = vpop.permute.xlu0 %703
        %705 = vrot.lane.b32.xlu0 %v657, 1
        %v706 = vpop.permute.xlu0 %705
        %v713 = vsel %vm224, %v652, %v696
        %v714 = vsel %vm224, %v653, %v698
        %v715 = vsel %vm224, %v654, %v700
        %v716 = vsel %vm224, %v655, %v702
        %v717 = vsel %vm224, %v656, %v704
        %v718 = vsel %vm224, %v657, %v706
        %725 = vrot.lane.b32.xlu0 %v713, 1
        %v726 = vpop.permute.xlu0 %725
        %727 = vrot.lane.b32.xlu0 %v714, 1
        %v728 = vpop.permute.xlu0 %727
        %729 = vrot.lane.b32.xlu0 %v715, 1
        %v730 = vpop.permute.xlu0 %729
        %731 = vrot.lane.b32.xlu0 %v716, 1
        %v732 = vpop.permute.xlu0 %731
        %733 = vrot.lane.b32.xlu0 %v717, 1
        %v734 = vpop.permute.xlu0 %733
        %735 = vrot.lane.b32.xlu0 %v718, 1
        %v736 = vpop.permute.xlu0 %735
        %v743 = vsel %vm224, %v652, %v726
        %v744 = vsel %vm224, %v653, %v728
        %v745 = vsel %vm224, %v654, %v730
        %v746 = vsel %vm224, %v655, %v732
        %v747 = vsel %vm224, %v656, %v734
        %v748 = vsel %vm224, %v657, %v736
        %v749 = vsub.f32 %v743, %v225
        %v750 = vsub.f32 %v744, %v226
        %v751 = vsub.f32 %v745, %v227
        %v752 = vsub.f32 %v746, %v228
        %v753 = vsub.f32 %v747, %v229
        %v754 = vsub.f32 %v748, %v230
        %s755 = scalar_lea.vmem [#allocation3], 384
        %756 = vst [vmem:[%s755] sm:$0xff] %v749
        %757 = vst [vmem:[%s755 + $0x8] sm:$0xff] %v750
        %758 = vst [vmem:[%s755 + $0x10] sm:$0xff] %v751
        %759 = vst [vmem:[%s755 + $0x18] sm:$0xff] %v752
        %760 = vst [vmem:[%s755 + $0x20] sm:$0xff] %v753
        %761 = vst [vmem:[%s755 + $0x28] sm:$0xff] %v754
        %v762 = vadd.f32 %v671, %v749
        %v763 = vadd.f32 %v672, %v750
        %v764 = vadd.f32 %v673, %v751
        %v765 = vadd.f32 %v674, %v752
        %v766 = vadd.f32 %v675, %v753
        %v767 = vadd.f32 %v676, %v754
        %v768 = vmul.f32 %v749, %v749
        %v769 = vmul.f32 %v750, %v750
        %v770 = vmul.f32 %v751, %v751
        %v771 = vmul.f32 %v752, %v752
        %v772 = vmul.f32 %v753, %v753
        %v773 = vmul.f32 %v754, %v754
        %v774 = vadd.f32 %v683, %v768
        %v775 = vadd.f32 %v684, %v769
        %v776 = vadd.f32 %v685, %v770
        %v777 = vadd.f32 %v686, %v771
        %v778 = vadd.f32 %v687, %v772
        %v779 = vadd.f32 %v688, %v773
        %780 = vrot.lane.b32.xlu0 %v652, 127
        %v781 = vpop.permute.xlu0 %780
        %782 = vrot.lane.b32.xlu0 %v653, 127
        %v783 = vpop.permute.xlu0 %782
        %784 = vrot.lane.b32.xlu0 %v654, 127
        %v785 = vpop.permute.xlu0 %784
        %786 = vrot.lane.b32.xlu0 %v655, 127
        %v787 = vpop.permute.xlu0 %786
        %788 = vrot.lane.b32.xlu0 %v656, 127
        %v789 = vpop.permute.xlu0 %788
        %790 = vrot.lane.b32.xlu0 %v657, 127
        %v791 = vpop.permute.xlu0 %790
        %v798 = vsel %vm222, %v652, %v781
        %v799 = vsel %vm222, %v653, %v783
        %v800 = vsel %vm222, %v654, %v785
        %v801 = vsel %vm222, %v655, %v787
        %v802 = vsel %vm222, %v656, %v789
        %v803 = vsel %vm222, %v657, %v791
        %810 = vrot.lane.b32.xlu0 %v798, 127
        %v811 = vpop.permute.xlu0 %810
        %812 = vrot.lane.b32.xlu0 %v799, 127
        %v813 = vpop.permute.xlu0 %812
        %814 = vrot.lane.b32.xlu0 %v800, 127
        %v815 = vpop.permute.xlu0 %814
        %816 = vrot.lane.b32.xlu0 %v801, 127
        %v817 = vpop.permute.xlu0 %816
        %818 = vrot.lane.b32.xlu0 %v802, 127
        %v819 = vpop.permute.xlu0 %818
        %820 = vrot.lane.b32.xlu0 %v803, 127
        %v821 = vpop.permute.xlu0 %820
        %v828 = vsel %vm222, %v652, %v811
        %v829 = vsel %vm222, %v653, %v813
        %v830 = vsel %vm222, %v654, %v815
        %v831 = vsel %vm222, %v655, %v817
        %v832 = vsel %vm222, %v656, %v819
        %v833 = vsel %vm222, %v657, %v821
        %v834 = vsub.f32 %v828, %v225
        %v835 = vsub.f32 %v829, %v226
        %v836 = vsub.f32 %v830, %v227
        %v837 = vsub.f32 %v831, %v228
        %v838 = vsub.f32 %v832, %v229
        %v839 = vsub.f32 %v833, %v230
        %s840 = scalar_lea.vmem [#allocation3], 480
        %841 = vst [vmem:[%s840] sm:$0xff] %v834
        %842 = vst [vmem:[%s840 + $0x8] sm:$0xff] %v835
        %843 = vst [vmem:[%s840 + $0x10] sm:$0xff] %v836
        %844 = vst [vmem:[%s840 + $0x18] sm:$0xff] %v837
        %845 = vst [vmem:[%s840 + $0x20] sm:$0xff] %v838
        %846 = vst [vmem:[%s840 + $0x28] sm:$0xff] %v839
        %v847 = vadd.f32 %v762, %v834
        %v848 = vadd.f32 %v763, %v835
        %v849 = vadd.f32 %v764, %v836
        %v850 = vadd.f32 %v765, %v837
        %v851 = vadd.f32 %v766, %v838
        %v852 = vadd.f32 %v767, %v839
        %v853 = vmul.f32 %v834, %v834
        %v854 = vmul.f32 %v835, %v835
        %v855 = vmul.f32 %v836, %v836
        %v856 = vmul.f32 %v837, %v837
        %v857 = vmul.f32 %v838, %v838
        %v858 = vmul.f32 %v839, %v839
        %v859 = vadd.f32 %v774, %v853
        %v860 = vadd.f32 %v775, %v854
        %v861 = vadd.f32 %v776, %v855
        %v862 = vadd.f32 %v777, %v856
        %v863 = vadd.f32 %v778, %v857
        %v864 = vadd.f32 %v779, %v858
        %vm865 = vcmask 1046528
        %v866 = vrot.slane %v225, 1
        %v867 = vrot.slane %v226, 1
        %v868 = vsel %vm865, %v866, %v867
        %v869 = vrot.slane %v227, 1
        %v870 = vrot.slane %v228, 1
        %v871 = vsel %vm865, %v869, %v870
        %v872 = vrot.slane %v229, 1
        %v873 = vrot.slane %v230, 1
        %v874 = vsel %vm865, %v872, %v873
        %v884 = vsel %vm865, %v867, %v866
        %v885 = vsel %vm865, %v870, %v869
        %v886 = vsel %vm865, %v873, %v872
        %v887 = vsel %vm215, %v225, %v868
        %v888 = vsel %vm216, %v226, %v884
        %v889 = vsel %vm215, %v227, %v871
        %v890 = vsel %vm216, %v228, %v885
        %v891 = vsel %vm215, %v229, %v874
        %v892 = vsel %vm216, %v230, %v886
        %v893 = vsub.f32 %v887, %v225
        %v894 = vsub.f32 %v888, %v226
        %v895 = vsub.f32 %v889, %v227
        %v896 = vsub.f32 %v890, %v228
        %v897 = vsub.f32 %v891, %v229
        %v898 = vsub.f32 %v892, %v230
        %s899 = scalar_lea.vmem [#allocation3], 288
        %900 = vst [vmem:[%s899] sm:$0xff] %v893
        %901 = vst [vmem:[%s899 + $0x8] sm:$0xff] %v894
        %902 = vst [vmem:[%s899 + $0x10] sm:$0xff] %v895
        %903 = vst [vmem:[%s899 + $0x18] sm:$0xff] %v896
        %904 = vst [vmem:[%s899 + $0x20] sm:$0xff] %v897
        %905 = vst [vmem:[%s899 + $0x28] sm:$0xff] %v898
        %v906 = vadd.f32 %v847, %v893
        %v907 = vadd.f32 %v848, %v894
        %v908 = vadd.f32 %v849, %v895
        %v909 = vadd.f32 %v850, %v896
        %v910 = vadd.f32 %v851, %v897
        %v911 = vadd.f32 %v852, %v898
        %v912 = vmul.f32 %v893, %v893
        %v913 = vmul.f32 %v894, %v894
        %v914 = vmul.f32 %v895, %v895
        %v915 = vmul.f32 %v896, %v896
        %v916 = vmul.f32 %v897, %v897
        %v917 = vmul.f32 %v898, %v898
        %v918 = vadd.f32 %v859, %v912
        %v919 = vadd.f32 %v860, %v913
        %v920 = vadd.f32 %v861, %v914
        %v921 = vadd.f32 %v862, %v915
        %v922 = vadd.f32 %v863, %v916
        %v923 = vadd.f32 %v864, %v917
        %930 = vrot.lane.b32.xlu0 %v887, 1
        %v931 = vpop.permute.xlu0 %930
        %932 = vrot.lane.b32.xlu0 %v888, 1
        %v933 = vpop.permute.xlu0 %932
        %934 = vrot.lane.b32.xlu0 %v889, 1
        %v935 = vpop.permute.xlu0 %934
        %936 = vrot.lane.b32.xlu0 %v890, 1
        %v937 = vpop.permute.xlu0 %936
        %938 = vrot.lane.b32.xlu0 %v891, 1
        %v939 = vpop.permute.xlu0 %938
        %940 = vrot.lane.b32.xlu0 %v892, 1
        %v941 = vpop.permute.xlu0 %940
        %v948 = vsel %vm224, %v887, %v931
        %v949 = vsel %vm224, %v888, %v933
        %v950 = vsel %vm224, %v889, %v935
        %v951 = vsel %vm224, %v890, %v937
        %v952 = vsel %vm224, %v891, %v939
        %v953 = vsel %vm224, %v892, %v941
        %v954 = vsub.f32 %v948, %v225
        %v955 = vsub.f32 %v949, %v226
        %v956 = vsub.f32 %v950, %v227
        %v957 = vsub.f32 %v951, %v228
        %v958 = vsub.f32 %v952, %v229
        %v959 = vsub.f32 %v953, %v230
        %s960 = scalar_lea.vmem [#allocation3], 240
        %961 = vst [vmem:[%s960] sm:$0xff] %v954
        %962 = vst [vmem:[%s960 + $0x8] sm:$0xff] %v955
        %963 = vst [vmem:[%s960 + $0x10] sm:$0xff] %v956
        %964 = vst [vmem:[%s960 + $0x18] sm:$0xff] %v957
        %965 = vst [vmem:[%s960 + $0x20] sm:$0xff] %v958
        %966 = vst [vmem:[%s960 + $0x28] sm:$0xff] %v959
        %v967 = vadd.f32 %v906, %v954
        %v968 = vadd.f32 %v907, %v955
        %v969 = vadd.f32 %v908, %v956
        %v970 = vadd.f32 %v909, %v957
        %v971 = vadd.f32 %v910, %v958
        %v972 = vadd.f32 %v911, %v959
        %v973 = vmul.f32 %v954, %v954
        %v974 = vmul.f32 %v955, %v955
        %v975 = vmul.f32 %v956, %v956
        %v976 = vmul.f32 %v957, %v957
        %v977 = vmul.f32 %v958, %v958
        %v978 = vmul.f32 %v959, %v959
        %v979 = vadd.f32 %v918, %v973
        %v980 = vadd.f32 %v919, %v974
        %v981 = vadd.f32 %v920, %v975
        %v982 = vadd.f32 %v921, %v976
        %v983 = vadd.f32 %v922, %v977
        %v984 = vadd.f32 %v923, %v978
        %985 = vrot.lane.b32.xlu0 %v887, 127
        %v986 = vpop.permute.xlu0 %985
        %987 = vrot.lane.b32.xlu0 %v888, 127
        %v988 = vpop.permute.xlu0 %987
        %989 = vrot.lane.b32.xlu0 %v889, 127
        %v990 = vpop.permute.xlu0 %989
        %991 = vrot.lane.b32.xlu0 %v890, 127
        %v992 = vpop.permute.xlu0 %991
        %993 = vrot.lane.b32.xlu0 %v891, 127
        %v994 = vpop.permute.xlu0 %993
        %995 = vrot.lane.b32.xlu0 %v892, 127
        %v996 = vpop.permute.xlu0 %995
        %v1003 = vsel %vm222, %v887, %v986
        %v1004 = vsel %vm222, %v888, %v988
        %v1005 = vsel %vm222, %v889, %v990
        %v1006 = vsel %vm222, %v890, %v992
        %v1007 = vsel %vm222, %v891, %v994
        %v1008 = vsel %vm222, %v892, %v996
        %v1009 = vsub.f32 %v1003, %v225
        %v1010 = vsub.f32 %v1004, %v226
        %v1011 = vsub.f32 %v1005, %v227
        %v1012 = vsub.f32 %v1006, %v228
        %v1013 = vsub.f32 %v1007, %v229
        %v1014 = vsub.f32 %v1008, %v230
        %s1015 = scalar_lea.vmem [#allocation3], 336
        %1016 = vst [vmem:[%s1015] sm:$0xff] %v1009
        %1017 = vst [vmem:[%s1015 + $0x8] sm:$0xff] %v1010
        %1018 = vst [vmem:[%s1015 + $0x10] sm:$0xff] %v1011
        %1019 = vst [vmem:[%s1015 + $0x18] sm:$0xff] %v1012
        %1020 = vst [vmem:[%s1015 + $0x20] sm:$0xff] %v1013
        %1021 = vst [vmem:[%s1015 + $0x28] sm:$0xff] %v1014
        %v1022 = vadd.f32 %v967, %v1009
        %v1023 = vadd.f32 %v968, %v1010
        %v1024 = vadd.f32 %v969, %v1011
        %v1025 = vadd.f32 %v970, %v1012
        %v1026 = vadd.f32 %v971, %v1013
        %v1027 = vadd.f32 %v972, %v1014
        %v1028 = vmul.f32 %v1009, %v1009
        %v1029 = vmul.f32 %v1010, %v1010
        %v1030 = vmul.f32 %v1011, %v1011
        %v1031 = vmul.f32 %v1012, %v1012
        %v1032 = vmul.f32 %v1013, %v1013
        %v1033 = vmul.f32 %v1014, %v1014
        %v1034 = vadd.f32 %v979, %v1028
        %v1035 = vadd.f32 %v980, %v1029
        %v1036 = vadd.f32 %v981, %v1030
        %v1037 = vadd.f32 %v982, %v1031
        %v1038 = vadd.f32 %v983, %v1032
        %v1039 = vadd.f32 %v984, %v1033
        %v1040 = vrot.slane %v887, 1
        %v1041 = vrot.slane %v888, 1
        %v1042 = vsel %vm865, %v1040, %v1041
        %v1043 = vrot.slane %v889, 1
        %v1044 = vrot.slane %v890, 1
        %v1045 = vsel %vm865, %v1043, %v1044
        %v1046 = vrot.slane %v891, 1
        %v1047 = vrot.slane %v892, 1
        %v1048 = vsel %vm865, %v1046, %v1047
        %v1058 = vsel %vm865, %v1041, %v1040
        %v1059 = vsel %vm865, %v1044, %v1043
        %v1060 = vsel %vm865, %v1047, %v1046
        %v1061 = vsel %vm215, %v225, %v1042
        %v1062 = vsel %vm216, %v226, %v1058
        %v1063 = vsel %vm215, %v227, %v1045
        %v1064 = vsel %vm216, %v228, %v1059
        %v1065 = vsel %vm215, %v229, %v1048
        %v1066 = vsel %vm216, %v230, %v1060
        %v1067 = vsub.f32 %v1061, %v225
        %v1068 = vsub.f32 %v1062, %v226
        %v1069 = vsub.f32 %v1063, %v227
        %v1070 = vsub.f32 %v1064, %v228
        %v1071 = vsub.f32 %v1065, %v229
        %v1072 = vsub.f32 %v1066, %v230
        %s1073 = scalar_lea.vmem [#allocation3], 672
        %1074 = vst [vmem:[%s1073] sm:$0xff] %v1067
        %1075 = vst [vmem:[%s1073 + $0x8] sm:$0xff] %v1068
        %1076 = vst [vmem:[%s1073 + $0x10] sm:$0xff] %v1069
        %1077 = vst [vmem:[%s1073 + $0x18] sm:$0xff] %v1070
        %1078 = vst [vmem:[%s1073 + $0x20] sm:$0xff] %v1071
        %1079 = vst [vmem:[%s1073 + $0x28] sm:$0xff] %v1072
        %v1080 = vadd.f32 %v1022, %v1067
        %v1081 = vadd.f32 %v1023, %v1068
        %v1082 = vadd.f32 %v1024, %v1069
        %v1083 = vadd.f32 %v1025, %v1070
        %v1084 = vadd.f32 %v1026, %v1071
        %v1085 = vadd.f32 %v1027, %v1072
        %v1086 = vmul.f32 %v1067, %v1067
        %v1087 = vmul.f32 %v1068, %v1068
        %v1088 = vmul.f32 %v1069, %v1069
        %v1089 = vmul.f32 %v1070, %v1070
        %v1090 = vmul.f32 %v1071, %v1071
        %v1091 = vmul.f32 %v1072, %v1072
        %v1092 = vadd.f32 %v1034, %v1086
        %v1093 = vadd.f32 %v1035, %v1087
        %v1094 = vadd.f32 %v1036, %v1088
        %v1095 = vadd.f32 %v1037, %v1089
        %v1096 = vadd.f32 %v1038, %v1090
        %v1097 = vadd.f32 %v1039, %v1091
        %1104 = vrot.lane.b32.xlu0 %v1061, 1
        %v1105 = vpop.permute.xlu0 %1104
        %1106 = vrot.lane.b32.xlu0 %v1062, 1
        %v1107 = vpop.permute.xlu0 %1106
        %1108 = vrot.lane.b32.xlu0 %v1063, 1
        %v1109 = vpop.permute.xlu0 %1108
        %1110 = vrot.lane.b32.xlu0 %v1064, 1
        %v1111 = vpop.permute.xlu0 %1110
        %1112 = vrot.lane.b32.xlu0 %v1065, 1
        %v1113 = vpop.permute.xlu0 %1112
        %1114 = vrot.lane.b32.xlu0 %v1066, 1
        %v1115 = vpop.permute.xlu0 %1114
        %v1122 = vsel %vm224, %v1061, %v1105
        %v1123 = vsel %vm224, %v1062, %v1107
        %v1124 = vsel %vm224, %v1063, %v1109
        %v1125 = vsel %vm224, %v1064, %v1111
        %v1126 = vsel %vm224, %v1065, %v1113
        %v1127 = vsel %vm224, %v1066, %v1115
        %1134 = vrot.lane.b32.xlu0 %v1122, 1
        %v1135 = vpop.permute.xlu0 %1134
        %1136 = vrot.lane.b32.xlu0 %v1123, 1
        %v1137 = vpop.permute.xlu0 %1136
        %1138 = vrot.lane.b32.xlu0 %v1124, 1
        %v1139 = vpop.permute.xlu0 %1138
        %1140 = vrot.lane.b32.xlu0 %v1125, 1
        %v1141 = vpop.permute.xlu0 %1140
        %1142 = vrot.lane.b32.xlu0 %v1126, 1
        %v1143 = vpop.permute.xlu0 %1142
        %1144 = vrot.lane.b32.xlu0 %v1127, 1
        %v1145 = vpop.permute.xlu0 %1144
        %v1152 = vsel %vm224, %v1061, %v1135
        %v1153 = vsel %vm224, %v1062, %v1137
        %v1154 = vsel %vm224, %v1063, %v1139
        %v1155 = vsel %vm224, %v1064, %v1141
        %v1156 = vsel %vm224, %v1065, %v1143
        %v1157 = vsel %vm224, %v1066, %v1145
        %v1158 = vsub.f32 %v1152, %v225
        %v1159 = vsub.f32 %v1153, %v226
        %v1160 = vsub.f32 %v1154, %v227
        %v1161 = vsub.f32 %v1155, %v228
        %v1162 = vsub.f32 %v1156, %v229
        %v1163 = vsub.f32 %v1157, %v230
        %s1164 = scalar_lea.vmem [#allocation3], 624
        %1165 = vst [vmem:[%s1164] sm:$0xff] %v1158
        %1166 = vst [vmem:[%s1164 + $0x8] sm:$0xff] %v1159
        %1167 = vst [vmem:[%s1164 + $0x10] sm:$0xff] %v1160
        %1168 = vst [vmem:[%s1164 + $0x18] sm:$0xff] %v1161
        %1169 = vst [vmem:[%s1164 + $0x20] sm:$0xff] %v1162
        %1170 = vst [vmem:[%s1164 + $0x28] sm:$0xff] %v1163
        %v1171 = vadd.f32 %v1080, %v1158
        %v1172 = vadd.f32 %v1081, %v1159
        %v1173 = vadd.f32 %v1082, %v1160
        %v1174 = vadd.f32 %v1083, %v1161
        %v1175 = vadd.f32 %v1084, %v1162
        %v1176 = vadd.f32 %v1085, %v1163
        %v1177 = vmul.f32 %v1158, %v1158
        %v1178 = vmul.f32 %v1159, %v1159
        %v1179 = vmul.f32 %v1160, %v1160
        %v1180 = vmul.f32 %v1161, %v1161
        %v1181 = vmul.f32 %v1162, %v1162
        %v1182 = vmul.f32 %v1163, %v1163
        %v1183 = vadd.f32 %v1092, %v1177
        %v1184 = vadd.f32 %v1093, %v1178
        %v1185 = vadd.f32 %v1094, %v1179
        %v1186 = vadd.f32 %v1095, %v1180
        %v1187 = vadd.f32 %v1096, %v1181
        %v1188 = vadd.f32 %v1097, %v1182
        %1189 = vrot.lane.b32.xlu0 %v1061, 127
        %v1190 = vpop.permute.xlu0 %1189
        %1191 = vrot.lane.b32.xlu0 %v1062, 127
        %v1192 = vpop.permute.xlu0 %1191
        %1193 = vrot.lane.b32.xlu0 %v1063, 127
        %v1194 = vpop.permute.xlu0 %1193
        %1195 = vrot.lane.b32.xlu0 %v1064, 127
        %v1196 = vpop.permute.xlu0 %1195
        %1197 = vrot.lane.b32.xlu0 %v1065, 127
        %v1198 = vpop.permute.xlu0 %1197
        %1199 = vrot.lane.b32.xlu0 %v1066, 127
        %v1200 = vpop.permute.xlu0 %1199
        %v1207 = vsel %vm222, %v1061, %v1190
        %v1208 = vsel %vm222, %v1062, %v1192
        %v1209 = vsel %vm222, %v1063, %v1194
        %v1210 = vsel %vm222, %v1064, %v1196
        %v1211 = vsel %vm222, %v1065, %v1198
        %v1212 = vsel %vm222, %v1066, %v1200
        %1219 = vrot.lane.b32.xlu0 %v1207, 127
        %v1220 = vpop.permute.xlu0 %1219
        %1221 = vrot.lane.b32.xlu0 %v1208, 127
        %v1222 = vpop.permute.xlu0 %1221
        %1223 = vrot.lane.b32.xlu0 %v1209, 127
        %v1224 = vpop.permute.xlu0 %1223
        %1225 = vrot.lane.b32.xlu0 %v1210, 127
        %v1226 = vpop.permute.xlu0 %1225
        %1227 = vrot.lane.b32.xlu0 %v1211, 127
        %v1228 = vpop.permute.xlu0 %1227
        %1229 = vrot.lane.b32.xlu0 %v1212, 127
        %v1230 = vpop.permute.xlu0 %1229
        %v1237 = vsel %vm222, %v1061, %v1220
        %v1238 = vsel %vm222, %v1062, %v1222
        %v1239 = vsel %vm222, %v1063, %v1224
        %v1240 = vsel %vm222, %v1064, %v1226
        %v1241 = vsel %vm222, %v1065, %v1228
        %v1242 = vsel %vm222, %v1066, %v1230
        %v1243 = vsub.f32 %v1237, %v225
        %v1244 = vsub.f32 %v1238, %v226
        %v1245 = vsub.f32 %v1239, %v227
        %v1246 = vsub.f32 %v1240, %v228
        %v1247 = vsub.f32 %v1241, %v229
        %v1248 = vsub.f32 %v1242, %v230
        %s1249 = scalar_lea.vmem [#allocation3], 720
        %1250 = vst [vmem:[%s1249] sm:$0xff] %v1243
        %1251 = vst [vmem:[%s1249 + $0x8] sm:$0xff] %v1244
        %1252 = vst [vmem:[%s1249 + $0x10] sm:$0xff] %v1245
        %1253 = vst [vmem:[%s1249 + $0x18] sm:$0xff] %v1246
        %1254 = vst [vmem:[%s1249 + $0x20] sm:$0xff] %v1247
        %1255 = vst [vmem:[%s1249 + $0x28] sm:$0xff] %v1248
        %v1256 = vadd.f32 %v1171, %v1243
        %v1257 = vadd.f32 %v1172, %v1244
        %v1258 = vadd.f32 %v1173, %v1245
        %v1259 = vadd.f32 %v1174, %v1246
        %v1260 = vadd.f32 %v1175, %v1247
        %v1261 = vadd.f32 %v1176, %v1248
        %v1262 = vmul.f32 %v1243, %v1243
        %v1263 = vmul.f32 %v1244, %v1244
        %v1264 = vmul.f32 %v1245, %v1245
        %v1265 = vmul.f32 %v1246, %v1246
        %v1266 = vmul.f32 %v1247, %v1247
        %v1267 = vmul.f32 %v1248, %v1248
        %v1268 = vadd.f32 %v1183, %v1262
        %v1269 = vadd.f32 %v1184, %v1263
        %v1270 = vadd.f32 %v1185, %v1264
        %v1271 = vadd.f32 %v1186, %v1265
        %v1272 = vadd.f32 %v1187, %v1266
        %v1273 = vadd.f32 %v1188, %v1267
        %v1274 = vmul.f32 %v1256, %v1256
        %v1275 = vmul.f32 %v1257, %v1257
        %v1276 = vmul.f32 %v1258, %v1258
        %v1277 = vmul.f32 %v1259, %v1259
        %v1278 = vmul.f32 %v1260, %v1260
        %v1279 = vmul.f32 %v1261, %v1261
        %v1280 = vmul.f32 %v1274, 0.0625
        %v1281 = vmul.f32 %v1275, 0.0625
        %v1282 = vmul.f32 %v1276, 0.0625
        %v1283 = vmul.f32 %v1277, 0.0625
        %v1284 = vmul.f32 %v1278, 0.0625
        %v1285 = vmul.f32 %v1279, 0.0625
        %v1286 = vsub.f32 %v1268, %v1280
        %v1287 = vsub.f32 %v1269, %v1281
        %v1288 = vsub.f32 %v1270, %v1282
        %v1289 = vsub.f32 %v1271, %v1283
        %v1290 = vsub.f32 %v1272, %v1284
        %v1291 = vsub.f32 %v1273, %v1285
        %v1292 = vmax.f32 %v1286, 0.0
        %v1293 = vmax.f32 %v1287, 0.0
        %v1294 = vmax.f32 %v1288, 0.0
        %v1295 = vmax.f32 %v1289, 0.0
        %v1296 = vmax.f32 %v1290, 0.0
        %v1297 = vmax.f32 %v1291, 0.0
        %v1298 = vmul.f32 %v1292, 0.06666667
        %v1299 = vmul.f32 %v1293, 0.06666667
        %v1300 = vmul.f32 %v1294, 0.06666667
        %v1301 = vmul.f32 %v1295, 0.06666667
        %v1302 = vmul.f32 %v1296, 0.06666667
        %v1303 = vmul.f32 %v1297, 0.06666667
        %v1304 = vadd.f32 %v1298, 1e-16
        %v1305 = vadd.f32 %v1299, 1e-16
        %v1306 = vadd.f32 %v1300, 1e-16
        %v1307 = vadd.f32 %v1301, 1e-16
        %v1308 = vadd.f32 %v1302, 1e-16
        %v1309 = vadd.f32 %v1303, 1e-16
        %v1310 = vrcp.pop %v1304
        %v1311 = vrcp.pop %v1305
        %v1312 = vrcp.pop %v1306
        %v1313 = vrcp.pop %v1307
        %v1314 = vrcp.pop %v1308
        %v1315 = vrcp.pop %v1309
        %v1316 = vmul.f32 %v1310, 3.7037036
        %v1317 = vmul.f32 %v1311, 3.7037036
        %v1318 = vmul.f32 %v1312, 3.7037036
        %v1319 = vmul.f32 %v1313, 3.7037036
        %v1320 = vmul.f32 %v1314, 3.7037036
        %v1321 = vmul.f32 %v1315, 3.7037036
        %v1322 = vld [vmem:[#allocation3] sm:$0xff]
        %v1323 = vld [vmem:[#allocation3 + $0x8] sm:$0xff]
        %v1324 = vld [vmem:[#allocation3 + $0x10] sm:$0xff]
        %v1325 = vld [vmem:[#allocation3 + $0x18] sm:$0xff]
        %v1326 = vld [vmem:[#allocation3 + $0x20] sm:$0xff]
        %v1327 = vld [vmem:[#allocation3 + $0x28] sm:$0xff]
        %v1328 = vmul.f32 %v1322, %v1322
        %v1329 = vmul.f32 %v1323, %v1323
        %v1330 = vmul.f32 %v1324, %v1324
        %v1331 = vmul.f32 %v1325, %v1325
        %v1332 = vmul.f32 %v1326, %v1326
        %v1333 = vmul.f32 %v1327, %v1327
        %v1334 = vmul.f32 %v1328, %v1316
        %v1335 = vmul.f32 %v1329, %v1317
        %v1336 = vmul.f32 %v1330, %v1318
        %v1337 = vmul.f32 %v1331, %v1319
        %v1338 = vmul.f32 %v1332, %v1320
        %v1339 = vmul.f32 %v1333, %v1321
        %v1340 = vadd.f32 %v1334, %v1336
        %v1341 = vadd.f32 %v1340, %v1338
        %v1342 = vadd.f32 %v1335, %v1337
        %v1343 = vadd.f32 %v1342, %v1339
        %v1344 = vsub.f32 0.0, %v1341
        %v1345 = vsub.f32 0.0, %v1343
        %1346 = vst [vmem:[#allocation2] sm:$0xff] %v1344
        %1347 = vst [vmem:[#allocation2 + $0x8] sm:$0xff] %v1345
        %v1348 = vld [vmem:[%s491] sm:$0xff]
        %v1349 = vld [vmem:[%s491 + $0x8] sm:$0xff]
        %v1350 = vld [vmem:[%s491 + $0x10] sm:$0xff]
        %v1351 = vld [vmem:[%s491 + $0x18] sm:$0xff]
        %v1352 = vld [vmem:[%s491 + $0x20] sm:$0xff]
        %v1353 = vld [vmem:[%s491 + $0x28] sm:$0xff]
        %v1354 = vmul.f32 %v1348, %v1348
        %v1355 = vmul.f32 %v1349, %v1349
        %v1356 = vmul.f32 %v1350, %v1350
        %v1357 = vmul.f32 %v1351, %v1351
        %v1358 = vmul.f32 %v1352, %v1352
        %v1359 = vmul.f32 %v1353, %v1353
        %v1360 = vmul.f32 %v1354, %v1316
        %v1361 = vmul.f32 %v1355, %v1317
        %v1362 = vmul.f32 %v1356, %v1318
        %v1363 = vmul.f32 %v1357, %v1319
        %v1364 = vmul.f32 %v1358, %v1320
        %v1365 = vmul.f32 %v1359, %v1321
        %v1366 = vadd.f32 %v1360, %v1362
        %v1367 = vadd.f32 %v1366, %v1364
        %v1368 = vadd.f32 %v1361, %v1363
        %v1369 = vadd.f32 %v1368, %v1365
        %v1370 = vsub.f32 0.0, %v1367
        %v1371 = vsub.f32 0.0, %v1369
        %s1372 = scalar_lea.vmem [#allocation2], 16
        %1373 = vst [vmem:[%s1372] sm:$0xff] %v1370
        %1374 = vst [vmem:[%s1372 + $0x8] sm:$0xff] %v1371
        %v1375 = vld [vmem:[%s606] sm:$0xff]
        %v1376 = vld [vmem:[%s606 + $0x8] sm:$0xff]
        %v1377 = vld [vmem:[%s606 + $0x10] sm:$0xff]
        %v1378 = vld [vmem:[%s606 + $0x18] sm:$0xff]
        %v1379 = vld [vmem:[%s606 + $0x20] sm:$0xff]
        %v1380 = vld [vmem:[%s606 + $0x28] sm:$0xff]
        %v1381 = vmul.f32 %v1375, %v1375
        %v1382 = vmul.f32 %v1376, %v1376
        %v1383 = vmul.f32 %v1377, %v1377
        %v1384 = vmul.f32 %v1378, %v1378
        %v1385 = vmul.f32 %v1379, %v1379
        %v1386 = vmul.f32 %v1380, %v1380
        %v1387 = vmul.f32 %v1381, %v1316
        %v1388 = vmul.f32 %v1382, %v1317
        %v1389 = vmul.f32 %v1383, %v1318
        %v1390 = vmul.f32 %v1384, %v1319
        %v1391 = vmul.f32 %v1385, %v1320
        %v1392 = vmul.f32 %v1386, %v1321
        %v1393 = vadd.f32 %v1387, %v1389
        %v1394 = vadd.f32 %v1393, %v1391
        %v1395 = vadd.f32 %v1388, %v1390
        %v1396 = vadd.f32 %v1395, %v1392
        %v1397 = vsub.f32 0.0, %v1394
        %v1398 = vsub.f32 0.0, %v1396
        %s1399 = scalar_lea.vmem [#allocation2], 32
        %1400 = vst [vmem:[%s1399] sm:$0xff] %v1397
        %1401 = vst [vmem:[%s1399 + $0x8] sm:$0xff] %v1398
        %v1402 = vld [vmem:[%s267] sm:$0xff]
        %v1403 = vld [vmem:[%s267 + $0x8] sm:$0xff]
        %v1404 = vld [vmem:[%s267 + $0x10] sm:$0xff]
        %v1405 = vld [vmem:[%s267 + $0x18] sm:$0xff]
        %v1406 = vld [vmem:[%s267 + $0x20] sm:$0xff]
        %v1407 = vld [vmem:[%s267 + $0x28] sm:$0xff]
        %v1408 = vmul.f32 %v1402, %v1402
        %v1409 = vmul.f32 %v1403, %v1403
        %v1410 = vmul.f32 %v1404, %v1404
        %v1411 = vmul.f32 %v1405, %v1405
        %v1412 = vmul.f32 %v1406, %v1406
        %v1413 = vmul.f32 %v1407, %v1407
        %v1414 = vmul.f32 %v1408, %v1316
        %v1415 = vmul.f32 %v1409, %v1317
        %v1416 = vmul.f32 %v1410, %v1318
        %v1417 = vmul.f32 %v1411, %v1319
        %v1418 = vmul.f32 %v1412, %v1320
        %v1419 = vmul.f32 %v1413, %v1321
        %v1420 = vadd.f32 %v1414, %v1416
        %v1421 = vadd.f32 %v1420, %v1418
        %v1422 = vadd.f32 %v1415, %v1417
        %v1423 = vadd.f32 %v1422, %v1419
        %v1424 = vsub.f32 0.0, %v1421
        %v1425 = vsub.f32 0.0, %v1423
        %s1426 = scalar_lea.vmem [#allocation2], 48
        %1427 = vst [vmem:[%s1426] sm:$0xff] %v1424
        %1428 = vst [vmem:[%s1426 + $0x8] sm:$0xff] %v1425
        %v1429 = vld [vmem:[%s371] sm:$0xff]
        %v1430 = vld [vmem:[%s371 + $0x8] sm:$0xff]
        %v1431 = vld [vmem:[%s371 + $0x10] sm:$0xff]
        %v1432 = vld [vmem:[%s371 + $0x18] sm:$0xff]
        %v1433 = vld [vmem:[%s371 + $0x20] sm:$0xff]
        %v1434 = vld [vmem:[%s371 + $0x28] sm:$0xff]
        %v1435 = vmul.f32 %v1429, %v1429
        %v1436 = vmul.f32 %v1430, %v1430
        %v1437 = vmul.f32 %v1431, %v1431
        %v1438 = vmul.f32 %v1432, %v1432
        %v1439 = vmul.f32 %v1433, %v1433
        %v1440 = vmul.f32 %v1434, %v1434
        %v1441 = vmul.f32 %v1435, %v1316
        %v1442 = vmul.f32 %v1436, %v1317
        %v1443 = vmul.f32 %v1437, %v1318
        %v1444 = vmul.f32 %v1438, %v1319
        %v1445 = vmul.f32 %v1439, %v1320
        %v1446 = vmul.f32 %v1440, %v1321
        %v1447 = vadd.f32 %v1441, %v1443
        %v1448 = vadd.f32 %v1447, %v1445
        %v1449 = vadd.f32 %v1442, %v1444
        %v1450 = vadd.f32 %v1449, %v1446
        %v1451 = vsub.f32 0.0, %v1448
        %v1452 = vsub.f32 0.0, %v1450
        %s1453 = scalar_lea.vmem [#allocation2], 64
        %1454 = vst [vmem:[%s1453] sm:$0xff] %v1451
        %1455 = vst [vmem:[%s1453 + $0x8] sm:$0xff] %v1452
        %v1456 = vld [vmem:[%s960] sm:$0xff]
        %v1457 = vld [vmem:[%s960 + $0x8] sm:$0xff]
        %v1458 = vld [vmem:[%s960 + $0x10] sm:$0xff]
        %v1459 = vld [vmem:[%s960 + $0x18] sm:$0xff]
        %v1460 = vld [vmem:[%s960 + $0x20] sm:$0xff]
        %v1461 = vld [vmem:[%s960 + $0x28] sm:$0xff]
        %v1462 = vmul.f32 %v1456, %v1456
        %v1463 = vmul.f32 %v1457, %v1457
        %v1464 = vmul.f32 %v1458, %v1458
        %v1465 = vmul.f32 %v1459, %v1459
        %v1466 = vmul.f32 %v1460, %v1460
        %v1467 = vmul.f32 %v1461, %v1461
        %v1468 = vmul.f32 %v1462, %v1316
        %v1469 = vmul.f32 %v1463, %v1317
        %v1470 = vmul.f32 %v1464, %v1318
        %v1471 = vmul.f32 %v1465, %v1319
        %v1472 = vmul.f32 %v1466, %v1320
        %v1473 = vmul.f32 %v1467, %v1321
        %v1474 = vadd.f32 %v1468, %v1470
        %v1475 = vadd.f32 %v1474, %v1472
        %v1476 = vadd.f32 %v1469, %v1471
        %v1477 = vadd.f32 %v1476, %v1473
        %v1478 = vsub.f32 0.0, %v1475
        %v1479 = vsub.f32 0.0, %v1477
        %s1480 = scalar_lea.vmem [#allocation2], 80
        %1481 = vst [vmem:[%s1480] sm:$0xff] %v1478
        %1482 = vst [vmem:[%s1480 + $0x8] sm:$0xff] %v1479
        %v1483 = vld [vmem:[%s899] sm:$0xff]
        %v1484 = vld [vmem:[%s899 + $0x8] sm:$0xff]
        %v1485 = vld [vmem:[%s899 + $0x10] sm:$0xff]
        %v1486 = vld [vmem:[%s899 + $0x18] sm:$0xff]
        %v1487 = vld [vmem:[%s899 + $0x20] sm:$0xff]
        %v1488 = vld [vmem:[%s899 + $0x28] sm:$0xff]
        %v1489 = vmul.f32 %v1483, %v1483
        %v1490 = vmul.f32 %v1484, %v1484
        %v1491 = vmul.f32 %v1485, %v1485
        %v1492 = vmul.f32 %v1486, %v1486
        %v1493 = vmul.f32 %v1487, %v1487
        %v1494 = vmul.f32 %v1488, %v1488
        %v1495 = vmul.f32 %v1489, %v1316
        %v1496 = vmul.f32 %v1490, %v1317
        %v1497 = vmul.f32 %v1491, %v1318
        %v1498 = vmul.f32 %v1492, %v1319
        %v1499 = vmul.f32 %v1493, %v1320
        %v1500 = vmul.f32 %v1494, %v1321
        %v1501 = vadd.f32 %v1495, %v1497
        %v1502 = vadd.f32 %v1501, %v1499
        %v1503 = vadd.f32 %v1496, %v1498
        %v1504 = vadd.f32 %v1503, %v1500
        %v1505 = vsub.f32 0.0, %v1502
        %v1506 = vsub.f32 0.0, %v1504
        %s1507 = scalar_lea.vmem [#allocation2], 96
        %1508 = vst [vmem:[%s1507] sm:$0xff] %v1505
        %1509 = vst [vmem:[%s1507 + $0x8] sm:$0xff] %v1506
        %v1510 = vld [vmem:[%s1015] sm:$0xff]
        %v1511 = vld [vmem:[%s1015 + $0x8] sm:$0xff]
        %v1512 = vld [vmem:[%s1015 + $0x10] sm:$0xff]
        %v1513 = vld [vmem:[%s1015 + $0x18] sm:$0xff]
        %v1514 = vld [vmem:[%s1015 + $0x20] sm:$0xff]
        %v1515 = vld [vmem:[%s1015 + $0x28] sm:$0xff]
        %v1516 = vmul.f32 %v1510, %v1510
        %v1517 = vmul.f32 %v1511, %v1511
        %v1518 = vmul.f32 %v1512, %v1512
        %v1519 = vmul.f32 %v1513, %v1513
        %v1520 = vmul.f32 %v1514, %v1514
        %v1521 = vmul.f32 %v1515, %v1515
        %v1522 = vmul.f32 %v1516, %v1316
        %v1523 = vmul.f32 %v1517, %v1317
        %v1524 = vmul.f32 %v1518, %v1318
        %v1525 = vmul.f32 %v1519, %v1319
        %v1526 = vmul.f32 %v1520, %v1320
        %v1527 = vmul.f32 %v1521, %v1321
        %v1528 = vadd.f32 %v1522, %v1524
        %v1529 = vadd.f32 %v1528, %v1526
        %v1530 = vadd.f32 %v1523, %v1525
        %v1531 = vadd.f32 %v1530, %v1527
        %v1532 = vsub.f32 0.0, %v1529
        %v1533 = vsub.f32 0.0, %v1531
        %s1534 = scalar_lea.vmem [#allocation2], 112
        %1535 = vst [vmem:[%s1534] sm:$0xff] %v1532
        %1536 = vst [vmem:[%s1534 + $0x8] sm:$0xff] %v1533
        %v1537 = vld [vmem:[%s755] sm:$0xff]
        %v1538 = vld [vmem:[%s755 + $0x8] sm:$0xff]
        %v1539 = vld [vmem:[%s755 + $0x10] sm:$0xff]
        %v1540 = vld [vmem:[%s755 + $0x18] sm:$0xff]
        %v1541 = vld [vmem:[%s755 + $0x20] sm:$0xff]
        %v1542 = vld [vmem:[%s755 + $0x28] sm:$0xff]
        %v1543 = vmul.f32 %v1537, %v1537
        %v1544 = vmul.f32 %v1538, %v1538
        %v1545 = vmul.f32 %v1539, %v1539
        %v1546 = vmul.f32 %v1540, %v1540
        %v1547 = vmul.f32 %v1541, %v1541
        %v1548 = vmul.f32 %v1542, %v1542
        %v1549 = vmul.f32 %v1543, %v1316
        %v1550 = vmul.f32 %v1544, %v1317
        %v1551 = vmul.f32 %v1545, %v1318
        %v1552 = vmul.f32 %v1546, %v1319
        %v1553 = vmul.f32 %v1547, %v1320
        %v1554 = vmul.f32 %v1548, %v1321
        %v1555 = vadd.f32 %v1549, %v1551
        %v1556 = vadd.f32 %v1555, %v1553
        %v1557 = vadd.f32 %v1550, %v1552
        %v1558 = vadd.f32 %v1557, %v1554
        %v1559 = vsub.f32 0.0, %v1556
        %v1560 = vsub.f32 0.0, %v1558
        %s1561 = scalar_lea.vmem [#allocation2], 128
        %1562 = vst [vmem:[%s1561] sm:$0xff] %v1559
        %1563 = vst [vmem:[%s1561 + $0x8] sm:$0xff] %v1560
        %v1564 = vld [vmem:[%s664] sm:$0xff]
        %v1565 = vld [vmem:[%s664 + $0x8] sm:$0xff]
        %v1566 = vld [vmem:[%s664 + $0x10] sm:$0xff]
        %v1567 = vld [vmem:[%s664 + $0x18] sm:$0xff]
        %v1568 = vld [vmem:[%s664 + $0x20] sm:$0xff]
        %v1569 = vld [vmem:[%s664 + $0x28] sm:$0xff]
        %v1570 = vmul.f32 %v1564, %v1564
        %v1571 = vmul.f32 %v1565, %v1565
        %v1572 = vmul.f32 %v1566, %v1566
        %v1573 = vmul.f32 %v1567, %v1567
        %v1574 = vmul.f32 %v1568, %v1568
        %v1575 = vmul.f32 %v1569, %v1569
        %v1576 = vmul.f32 %v1570, %v1316
        %v1577 = vmul.f32 %v1571, %v1317
        %v1578 = vmul.f32 %v1572, %v1318
        %v1579 = vmul.f32 %v1573, %v1319
        %v1580 = vmul.f32 %v1574, %v1320
        %v1581 = vmul.f32 %v1575, %v1321
        %v1582 = vadd.f32 %v1576, %v1578
        %v1583 = vadd.f32 %v1582, %v1580
        %v1584 = vadd.f32 %v1577, %v1579
        %v1585 = vadd.f32 %v1584, %v1581
        %v1586 = vsub.f32 0.0, %v1583
        %v1587 = vsub.f32 0.0, %v1585
        %s1588 = scalar_lea.vmem [#allocation2], 144
        %1589 = vst [vmem:[%s1588] sm:$0xff] %v1586
        %1590 = vst [vmem:[%s1588 + $0x8] sm:$0xff] %v1587
        %v1591 = vld [vmem:[%s840] sm:$0xff]
        %v1592 = vld [vmem:[%s840 + $0x8] sm:$0xff]
        %v1593 = vld [vmem:[%s840 + $0x10] sm:$0xff]
        %v1594 = vld [vmem:[%s840 + $0x18] sm:$0xff]
        %v1595 = vld [vmem:[%s840 + $0x20] sm:$0xff]
        %v1596 = vld [vmem:[%s840 + $0x28] sm:$0xff]
        %v1597 = vmul.f32 %v1591, %v1591
        %v1598 = vmul.f32 %v1592, %v1592
        %v1599 = vmul.f32 %v1593, %v1593
        %v1600 = vmul.f32 %v1594, %v1594
        %v1601 = vmul.f32 %v1595, %v1595
        %v1602 = vmul.f32 %v1596, %v1596
        %v1603 = vmul.f32 %v1597, %v1316
        %v1604 = vmul.f32 %v1598, %v1317
        %v1605 = vmul.f32 %v1599, %v1318
        %v1606 = vmul.f32 %v1600, %v1319
        %v1607 = vmul.f32 %v1601, %v1320
        %v1608 = vmul.f32 %v1602, %v1321
        %v1609 = vadd.f32 %v1603, %v1605
        %v1610 = vadd.f32 %v1609, %v1607
        %v1611 = vadd.f32 %v1604, %v1606
        %v1612 = vadd.f32 %v1611, %v1608
        %v1613 = vsub.f32 0.0, %v1610
        %v1614 = vsub.f32 0.0, %v1612
        %s1615 = scalar_lea.vmem [#allocation2], 160
        %1616 = vst [vmem:[%s1615] sm:$0xff] %v1613
        %1617 = vst [vmem:[%s1615 + $0x8] sm:$0xff] %v1614
        %v1618 = vld [vmem:[%s316] sm:$0xff]
        %v1619 = vld [vmem:[%s316 + $0x8] sm:$0xff]
        %v1620 = vld [vmem:[%s316 + $0x10] sm:$0xff]
        %v1621 = vld [vmem:[%s316 + $0x18] sm:$0xff]
        %v1622 = vld [vmem:[%s316 + $0x20] sm:$0xff]
        %v1623 = vld [vmem:[%s316 + $0x28] sm:$0xff]
        %v1624 = vmul.f32 %v1618, %v1618
        %v1625 = vmul.f32 %v1619, %v1619
        %v1626 = vmul.f32 %v1620, %v1620
        %v1627 = vmul.f32 %v1621, %v1621
        %v1628 = vmul.f32 %v1622, %v1622
        %v1629 = vmul.f32 %v1623, %v1623
        %v1630 = vmul.f32 %v1624, %v1316
        %v1631 = vmul.f32 %v1625, %v1317
        %v1632 = vmul.f32 %v1626, %v1318
        %v1633 = vmul.f32 %v1627, %v1319
        %v1634 = vmul.f32 %v1628, %v1320
        %v1635 = vmul.f32 %v1629, %v1321
        %v1636 = vadd.f32 %v1630, %v1632
        %v1637 = vadd.f32 %v1636, %v1634
        %v1638 = vadd.f32 %v1631, %v1633
        %v1639 = vadd.f32 %v1638, %v1635
        %v1640 = vsub.f32 0.0, %v1637
        %v1641 = vsub.f32 0.0, %v1639
        %s1642 = scalar_lea.vmem [#allocation2], 176
        %1643 = vst [vmem:[%s1642] sm:$0xff] %v1640
        %1644 = vst [vmem:[%s1642 + $0x8] sm:$0xff] %v1641
        %v1645 = vld [vmem:[%s432] sm:$0xff]
        %v1646 = vld [vmem:[%s432 + $0x8] sm:$0xff]
        %v1647 = vld [vmem:[%s432 + $0x10] sm:$0xff]
        %v1648 = vld [vmem:[%s432 + $0x18] sm:$0xff]
        %v1649 = vld [vmem:[%s432 + $0x20] sm:$0xff]
        %v1650 = vld [vmem:[%s432 + $0x28] sm:$0xff]
        %v1651 = vmul.f32 %v1645, %v1645
        %v1652 = vmul.f32 %v1646, %v1646
        %v1653 = vmul.f32 %v1647, %v1647
        %v1654 = vmul.f32 %v1648, %v1648
        %v1655 = vmul.f32 %v1649, %v1649
        %v1656 = vmul.f32 %v1650, %v1650
        %v1657 = vmul.f32 %v1651, %v1316
        %v1658 = vmul.f32 %v1652, %v1317
        %v1659 = vmul.f32 %v1653, %v1318
        %v1660 = vmul.f32 %v1654, %v1319
        %v1661 = vmul.f32 %v1655, %v1320
        %v1662 = vmul.f32 %v1656, %v1321
        %v1663 = vadd.f32 %v1657, %v1659
        %v1664 = vadd.f32 %v1663, %v1661
        %v1665 = vadd.f32 %v1658, %v1660
        %v1666 = vadd.f32 %v1665, %v1662
        %v1667 = vsub.f32 0.0, %v1664
        %v1668 = vsub.f32 0.0, %v1666
        %s1669 = scalar_lea.vmem [#allocation2], 192
        %1670 = vst [vmem:[%s1669] sm:$0xff] %v1667
        %1671 = vst [vmem:[%s1669 + $0x8] sm:$0xff] %v1668
        %v1672 = vld [vmem:[%s1164] sm:$0xff]
        %v1673 = vld [vmem:[%s1164 + $0x8] sm:$0xff]
        %v1674 = vld [vmem:[%s1164 + $0x10] sm:$0xff]
        %v1675 = vld [vmem:[%s1164 + $0x18] sm:$0xff]
        %v1676 = vld [vmem:[%s1164 + $0x20] sm:$0xff]
        %v1677 = vld [vmem:[%s1164 + $0x28] sm:$0xff]
        %v1678 = vmul.f32 %v1672, %v1672
        %v1679 = vmul.f32 %v1673, %v1673
        %v1680 = vmul.f32 %v1674, %v1674
        %v1681 = vmul.f32 %v1675, %v1675
        %v1682 = vmul.f32 %v1676, %v1676
        %v1683 = vmul.f32 %v1677, %v1677
        %v1684 = vmul.f32 %v1678, %v1316
        %v1685 = vmul.f32 %v1679, %v1317
        %v1686 = vmul.f32 %v1680, %v1318
        %v1687 = vmul.f32 %v1681, %v1319
        %v1688 = vmul.f32 %v1682, %v1320
        %v1689 = vmul.f32 %v1683, %v1321
        %v1690 = vadd.f32 %v1684, %v1686
        %v1691 = vadd.f32 %v1690, %v1688
        %v1692 = vadd.f32 %v1685, %v1687
        %v1693 = vadd.f32 %v1692, %v1689
        %v1694 = vsub.f32 0.0, %v1691
        %v1695 = vsub.f32 0.0, %v1693
        %s1696 = scalar_lea.vmem [#allocation2], 208
        %1697 = vst [vmem:[%s1696] sm:$0xff] %v1694
        %1698 = vst [vmem:[%s1696 + $0x8] sm:$0xff] %v1695
        %v1699 = vld [vmem:[%s1073] sm:$0xff]
        %v1700 = vld [vmem:[%s1073 + $0x8] sm:$0xff]
        %v1701 = vld [vmem:[%s1073 + $0x10] sm:$0xff]
        %v1702 = vld [vmem:[%s1073 + $0x18] sm:$0xff]
        %v1703 = vld [vmem:[%s1073 + $0x20] sm:$0xff]
        %v1704 = vld [vmem:[%s1073 + $0x28] sm:$0xff]
        %v1705 = vmul.f32 %v1699, %v1699
        %v1706 = vmul.f32 %v1700, %v1700
        %v1707 = vmul.f32 %v1701, %v1701
        %v1708 = vmul.f32 %v1702, %v1702
        %v1709 = vmul.f32 %v1703, %v1703
        %v1710 = vmul.f32 %v1704, %v1704
        %v1711 = vmul.f32 %v1705, %v1316
        %v1712 = vmul.f32 %v1706, %v1317
        %v1713 = vmul.f32 %v1707, %v1318
        %v1714 = vmul.f32 %v1708, %v1319
        %v1715 = vmul.f32 %v1709, %v1320
        %v1716 = vmul.f32 %v1710, %v1321
        %v1717 = vadd.f32 %v1711, %v1713
        %v1718 = vadd.f32 %v1717, %v1715
        %v1719 = vadd.f32 %v1712, %v1714
        %v1720 = vadd.f32 %v1719, %v1716
        %v1721 = vsub.f32 0.0, %v1718
        %v1722 = vsub.f32 0.0, %v1720
        %s1723 = scalar_lea.vmem [#allocation2], 224
        %1724 = vst [vmem:[%s1723] sm:$0xff] %v1721
        %1725 = vst [vmem:[%s1723 + $0x8] sm:$0xff] %v1722
        %v1726 = vld [vmem:[%s1249] sm:$0xff]
        %v1727 = vld [vmem:[%s1249 + $0x8] sm:$0xff]
        %v1728 = vld [vmem:[%s1249 + $0x10] sm:$0xff]
        %v1729 = vld [vmem:[%s1249 + $0x18] sm:$0xff]
        %v1730 = vld [vmem:[%s1249 + $0x20] sm:$0xff]
        %v1731 = vld [vmem:[%s1249 + $0x28] sm:$0xff]
        %v1732 = vmul.f32 %v1726, %v1726
        %v1733 = vmul.f32 %v1727, %v1727
        %v1734 = vmul.f32 %v1728, %v1728
        %v1735 = vmul.f32 %v1729, %v1729
        %v1736 = vmul.f32 %v1730, %v1730
        %v1737 = vmul.f32 %v1731, %v1731
        %v1738 = vmul.f32 %v1732, %v1316
        %v1739 = vmul.f32 %v1733, %v1317
        %v1740 = vmul.f32 %v1734, %v1318
        %v1741 = vmul.f32 %v1735, %v1319
        %v1742 = vmul.f32 %v1736, %v1320
        %v1743 = vmul.f32 %v1737, %v1321
        %v1744 = vadd.f32 %v1738, %v1740
        %v1745 = vadd.f32 %v1744, %v1742
        %v1746 = vadd.f32 %v1739, %v1741
        %v1747 = vadd.f32 %v1746, %v1743
        %v1748 = vsub.f32 0.0, %v1745
        %v1749 = vsub.f32 0.0, %v1747
        %s1750 = scalar_lea.vmem [#allocation2], 240
        %1751 = vst [vmem:[%s1750] sm:$0xff] %v1748
        %1752 = vst [vmem:[%s1750 + $0x8] sm:$0xff] %v1749
        %v1753 = vld [vmem:[#allocation2] sm:$0xff]
        %v1754 = vld [vmem:[#allocation2 + $0x8] sm:$0xff]
        %v1755 = vld [vmem:[%s1372] sm:$0xff]
        %v1756 = vld [vmem:[%s1372 + $0x8] sm:$0xff]
        %v1757 = vmax.f32 %v1753, %v1755
        %v1758 = vmax.f32 %v1754, %v1756
        %v1759 = vld [vmem:[%s1399] sm:$0xff]
        %v1760 = vld [vmem:[%s1399 + $0x8] sm:$0xff]
        %v1761 = vmax.f32 %v1757, %v1759
        %v1762 = vmax.f32 %v1758, %v1760
        %v1763 = vld [vmem:[%s1426] sm:$0xff]
        %v1764 = vld [vmem:[%s1426 + $0x8] sm:$0xff]
        %v1765 = vmax.f32 %v1761, %v1763
        %v1766 = vmax.f32 %v1762, %v1764
        %v1767 = vld [vmem:[%s1453] sm:$0xff]
        %v1768 = vld [vmem:[%s1453 + $0x8] sm:$0xff]
        %v1769 = vmax.f32 %v1765, %v1767
        %v1770 = vmax.f32 %v1766, %v1768
        %v1771 = vld [vmem:[%s1480] sm:$0xff]
        %v1772 = vld [vmem:[%s1480 + $0x8] sm:$0xff]
        %v1773 = vmax.f32 %v1769, %v1771
        %v1774 = vmax.f32 %v1770, %v1772
        %v1775 = vld [vmem:[%s1507] sm:$0xff]
        %v1776 = vld [vmem:[%s1507 + $0x8] sm:$0xff]
        %v1777 = vmax.f32 %v1773, %v1775
        %v1778 = vmax.f32 %v1774, %v1776
        %v1779 = vld [vmem:[%s1534] sm:$0xff]
        %v1780 = vld [vmem:[%s1534 + $0x8] sm:$0xff]
        %v1781 = vmax.f32 %v1777, %v1779
        %v1782 = vmax.f32 %v1778, %v1780
        %v1783 = vld [vmem:[%s1561] sm:$0xff]
        %v1784 = vld [vmem:[%s1561 + $0x8] sm:$0xff]
        %v1785 = vmax.f32 %v1781, %v1783
        %v1786 = vmax.f32 %v1782, %v1784
        %v1787 = vld [vmem:[%s1588] sm:$0xff]
        %v1788 = vld [vmem:[%s1588 + $0x8] sm:$0xff]
        %v1789 = vmax.f32 %v1785, %v1787
        %v1790 = vmax.f32 %v1786, %v1788
        %v1791 = vld [vmem:[%s1615] sm:$0xff]
        %v1792 = vld [vmem:[%s1615 + $0x8] sm:$0xff]
        %v1793 = vmax.f32 %v1789, %v1791
        %v1794 = vmax.f32 %v1790, %v1792
        %v1795 = vld [vmem:[%s1642] sm:$0xff]
        %v1796 = vld [vmem:[%s1642 + $0x8] sm:$0xff]
        %v1797 = vmax.f32 %v1793, %v1795
        %v1798 = vmax.f32 %v1794, %v1796
        %v1799 = vld [vmem:[%s1669] sm:$0xff]
        %v1800 = vld [vmem:[%s1669 + $0x8] sm:$0xff]
        %v1801 = vmax.f32 %v1797, %v1799
        %v1802 = vmax.f32 %v1798, %v1800
        %v1803 = vld [vmem:[%s1696] sm:$0xff]
        %v1804 = vld [vmem:[%s1696 + $0x8] sm:$0xff]
        %v1805 = vmax.f32 %v1801, %v1803
        %v1806 = vmax.f32 %v1802, %v1804
        %v1807 = vld [vmem:[%s1723] sm:$0xff]
        %v1808 = vld [vmem:[%s1723 + $0x8] sm:$0xff]
        %v1809 = vmax.f32 %v1805, %v1807
        %v1810 = vmax.f32 %v1806, %v1808
        %v1811 = vld [vmem:[%s1750] sm:$0xff]
        %v1812 = vld [vmem:[%s1750 + $0x8] sm:$0xff]
        %v1813 = vmax.f32 %v1809, %v1811
        %v1814 = vmax.f32 %v1810, %v1812
        %v1815 = vsub.f32 %v1753, %v1813
        %v1816 = vsub.f32 %v1754, %v1814
        %v1817 = vmul.f32 %v1815, 1.442695
        %v1818 = vpow.pop %v1817
        %v1819 = vmul.f32 %v1816, 1.442695
        %v1820 = vpow.pop %v1819
        %v1821 = vsub.f32 %v1755, %v1813
        %v1822 = vsub.f32 %v1756, %v1814
        %v1823 = vmul.f32 %v1821, 1.442695
        %v1824 = vpow.pop %v1823
        %v1825 = vmul.f32 %v1822, 1.442695
        %v1826 = vpow.pop %v1825
        %v1827 = vadd.f32 %v1818, %v1824
        %v1828 = vadd.f32 %v1820, %v1826
        %v1829 = vsub.f32 %v1759, %v1813
        %v1830 = vsub.f32 %v1760, %v1814
        %v1831 = vmul.f32 %v1829, 1.442695
        %v1832 = vpow.pop %v1831
        %v1833 = vmul.f32 %v1830, 1.442695
        %v1834 = vpow.pop %v1833
        %v1835 = vadd.f32 %v1827, %v1832
        %v1836 = vadd.f32 %v1828, %v1834
        %v1837 = vsub.f32 %v1763, %v1813
        %v1838 = vsub.f32 %v1764, %v1814
        %v1839 = vmul.f32 %v1837, 1.442695
        %v1840 = vpow.pop %v1839
        %v1841 = vmul.f32 %v1838, 1.442695
        %v1842 = vpow.pop %v1841
        %v1843 = vadd.f32 %v1835, %v1840
        %v1844 = vadd.f32 %v1836, %v1842
        %v1845 = vsub.f32 %v1767, %v1813
        %v1846 = vsub.f32 %v1768, %v1814
        %v1847 = vmul.f32 %v1845, 1.442695
        %v1848 = vpow.pop %v1847
        %v1849 = vmul.f32 %v1846, 1.442695
        %v1850 = vpow.pop %v1849
        %v1851 = vadd.f32 %v1843, %v1848
        %v1852 = vadd.f32 %v1844, %v1850
        %v1853 = vsub.f32 %v1771, %v1813
        %v1854 = vsub.f32 %v1772, %v1814
        %v1855 = vmul.f32 %v1853, 1.442695
        %v1856 = vpow.pop %v1855
        %v1857 = vmul.f32 %v1854, 1.442695
        %v1858 = vpow.pop %v1857
        %v1859 = vadd.f32 %v1851, %v1856
        %v1860 = vadd.f32 %v1852, %v1858
        %v1861 = vsub.f32 %v1775, %v1813
        %v1862 = vsub.f32 %v1776, %v1814
        %v1863 = vmul.f32 %v1861, 1.442695
        %v1864 = vpow.pop %v1863
        %v1865 = vmul.f32 %v1862, 1.442695
        %v1866 = vpow.pop %v1865
        %v1867 = vadd.f32 %v1859, %v1864
        %v1868 = vadd.f32 %v1860, %v1866
        %v1869 = vsub.f32 %v1779, %v1813
        %v1870 = vsub.f32 %v1780, %v1814
        %v1871 = vmul.f32 %v1869, 1.442695
        %v1872 = vpow.pop %v1871
        %v1873 = vmul.f32 %v1870, 1.442695
        %v1874 = vpow.pop %v1873
        %v1875 = vadd.f32 %v1867, %v1872
        %v1876 = vadd.f32 %v1868, %v1874
        %v1877 = vsub.f32 %v1783, %v1813
        %v1878 = vsub.f32 %v1784, %v1814
        %v1879 = vmul.f32 %v1877, 1.442695
        %v1880 = vpow.pop %v1879
        %v1881 = vmul.f32 %v1878, 1.442695
        %v1882 = vpow.pop %v1881
        %v1883 = vadd.f32 %v1875, %v1880
        %v1884 = vadd.f32 %v1876, %v1882
        %v1885 = vsub.f32 %v1787, %v1813
        %v1886 = vsub.f32 %v1788, %v1814
        %v1887 = vmul.f32 %v1885, 1.442695
        %v1888 = vpow.pop %v1887
        %v1889 = vmul.f32 %v1886, 1.442695
        %v1890 = vpow.pop %v1889
        %v1891 = vadd.f32 %v1883, %v1888
        %v1892 = vadd.f32 %v1884, %v1890
        %v1893 = vsub.f32 %v1791, %v1813
        %v1894 = vsub.f32 %v1792, %v1814
        %v1895 = vmul.f32 %v1893, 1.442695
        %v1896 = vpow.pop %v1895
        %v1897 = vmul.f32 %v1894, 1.442695
        %v1898 = vpow.pop %v1897
        %v1899 = vadd.f32 %v1891, %v1896
        %v1900 = vadd.f32 %v1892, %v1898
        %v1901 = vsub.f32 %v1795, %v1813
        %v1902 = vsub.f32 %v1796, %v1814
        %v1903 = vmul.f32 %v1901, 1.442695
        %v1904 = vpow.pop %v1903
        %v1905 = vmul.f32 %v1902, 1.442695
        %v1906 = vpow.pop %v1905
        %v1907 = vadd.f32 %v1899, %v1904
        %v1908 = vadd.f32 %v1900, %v1906
        %v1909 = vsub.f32 %v1799, %v1813
        %v1910 = vsub.f32 %v1800, %v1814
        %v1911 = vmul.f32 %v1909, 1.442695
        %v1912 = vpow.pop %v1911
        %v1913 = vmul.f32 %v1910, 1.442695
        %v1914 = vpow.pop %v1913
        %v1915 = vadd.f32 %v1907, %v1912
        %v1916 = vadd.f32 %v1908, %v1914
        %v1917 = vsub.f32 %v1803, %v1813
        %v1918 = vsub.f32 %v1804, %v1814
        %v1919 = vmul.f32 %v1917, 1.442695
        %v1920 = vpow.pop %v1919
        %v1921 = vmul.f32 %v1918, 1.442695
        %v1922 = vpow.pop %v1921
        %v1923 = vadd.f32 %v1915, %v1920
        %v1924 = vadd.f32 %v1916, %v1922
        %v1925 = vsub.f32 %v1807, %v1813
        %v1926 = vsub.f32 %v1808, %v1814
        %v1927 = vmul.f32 %v1925, 1.442695
        %v1928 = vpow.pop %v1927
        %v1929 = vmul.f32 %v1926, 1.442695
        %v1930 = vpow.pop %v1929
        %v1931 = vadd.f32 %v1923, %v1928
        %v1932 = vadd.f32 %v1924, %v1930
        %v1933 = vsub.f32 %v1811, %v1813
        %v1934 = vsub.f32 %v1812, %v1814
        %v1935 = vmul.f32 %v1933, 1.442695
        %v1936 = vpow.pop %v1935
        %v1937 = vmul.f32 %v1934, 1.442695
        %v1938 = vpow.pop %v1937
        %v1939 = vadd.f32 %v1931, %v1936
        %v1940 = vadd.f32 %v1932, %v1938
        %v1941 = vlog2.pop %v1939
        %v1942 = vmul.f32 %v1941, 0.6931472
        %v1943 = vlog2.pop %v1940
        %v1944 = vmul.f32 %v1943, 0.6931472
        %v1945 = vadd.f32 %v1813, %v1942
        %v1946 = vadd.f32 %v1814, %v1944
        %v1947 = vsub.f32 %v1753, %v1945
        %v1948 = vsub.f32 %v1754, %v1946
        %v1949 = vmul.f32 %v1947, 1.442695
        %v1950 = vpow.pop %v1949
        %v1951 = vmul.f32 %v1948, 1.442695
        %v1952 = vpow.pop %v1951
        %v1953 = vadd.f32 %v1950, 6.359744e-13
        %v1954 = vadd.f32 %v1952, 6.359744e-13
        %1955 = vst [vmem:[#allocation2] sm:$0xff] %v1953
        %1956 = vst [vmem:[#allocation2 + $0x8] sm:$0xff] %v1954
        %v1957 = vld [vmem:[%s1372] sm:$0xff]
        %v1958 = vld [vmem:[%s1372 + $0x8] sm:$0xff]
        %v1959 = vsub.f32 %v1957, %v1945
        %v1960 = vsub.f32 %v1958, %v1946
        %v1961 = vmul.f32 %v1959, 1.442695
        %v1962 = vpow.pop %v1961
        %v1963 = vmul.f32 %v1960, 1.442695
        %v1964 = vpow.pop %v1963
        %v1965 = vadd.f32 %v1962, 0.0025
        %v1966 = vadd.f32 %v1964, 0.0025
        %1967 = vst [vmem:[%s1372] sm:$0xff] %v1965
        %1968 = vst [vmem:[%s1372 + $0x8] sm:$0xff] %v1966
        %v1969 = vld [vmem:[%s1399] sm:$0xff]
        %v1970 = vld [vmem:[%s1399 + $0x8] sm:$0xff]
        %v1971 = vsub.f32 %v1969, %v1945
        %v1972 = vsub.f32 %v1970, %v1946
        %v1973 = vmul.f32 %v1971, 1.442695
        %v1974 = vpow.pop %v1973
        %v1975 = vmul.f32 %v1972, 1.442695
        %v1976 = vpow.pop %v1975
        %v1977 = vadd.f32 %v1974, 6.359744e-13
        %v1978 = vadd.f32 %v1976, 6.359744e-13
        %1979 = vst [vmem:[%s1399] sm:$0xff] %v1977
        %1980 = vst [vmem:[%s1399 + $0x8] sm:$0xff] %v1978
        %v1981 = vld [vmem:[%s1426] sm:$0xff]
        %v1982 = vld [vmem:[%s1426 + $0x8] sm:$0xff]
        %v1983 = vsub.f32 %v1981, %v1945
        %v1984 = vsub.f32 %v1982, %v1946
        %v1985 = vmul.f32 %v1983, 1.442695
        %v1986 = vpow.pop %v1985
        %v1987 = vmul.f32 %v1984, 1.442695
        %v1988 = vpow.pop %v1987
        %v1989 = vadd.f32 %v1986, 0.0025
        %v1990 = vadd.f32 %v1988, 0.0025
        %1991 = vst [vmem:[%s1426] sm:$0xff] %v1989
        %1992 = vst [vmem:[%s1426 + $0x8] sm:$0xff] %v1990
        %v1993 = vld [vmem:[%s1453] sm:$0xff]
        %v1994 = vld [vmem:[%s1453 + $0x8] sm:$0xff]
        %v1995 = vsub.f32 %v1993, %v1945
        %v1996 = vsub.f32 %v1994, %v1946
        %v1997 = vmul.f32 %v1995, 1.442695
        %v1998 = vpow.pop %v1997
        %v1999 = vmul.f32 %v1996, 1.442695
        %v2000 = vpow.pop %v1999
        %v2001 = vadd.f32 %v1998, 0.0025
        %v2002 = vadd.f32 %v2000, 0.0025
        %2003 = vst [vmem:[%s1453] sm:$0xff] %v2001
        %2004 = vst [vmem:[%s1453 + $0x8] sm:$0xff] %v2002
        %v2005 = vld [vmem:[%s1480] sm:$0xff]
        %v2006 = vld [vmem:[%s1480 + $0x8] sm:$0xff]
        %v2007 = vsub.f32 %v2005, %v1945
        %v2008 = vsub.f32 %v2006, %v1946
        %v2009 = vmul.f32 %v2007, 1.442695
        %v2010 = vpow.pop %v2009
        %v2011 = vmul.f32 %v2008, 1.442695
        %v2012 = vpow.pop %v2011
        %v2013 = vadd.f32 %v2010, 6.359744e-13
        %v2014 = vadd.f32 %v2012, 6.359744e-13
        %2015 = vst [vmem:[%s1480] sm:$0xff] %v2013
        %2016 = vst [vmem:[%s1480 + $0x8] sm:$0xff] %v2014
        %v2017 = vld [vmem:[%s1507] sm:$0xff]
        %v2018 = vld [vmem:[%s1507 + $0x8] sm:$0xff]
        %v2019 = vsub.f32 %v2017, %v1945
        %v2020 = vsub.f32 %v2018, %v1946
        %v2021 = vmul.f32 %v2019, 1.442695
        %v2022 = vpow.pop %v2021
        %v2023 = vmul.f32 %v2020, 1.442695
        %v2024 = vpow.pop %v2023
        %v2025 = vadd.f32 %v2022, 0.0025
        %v2026 = vadd.f32 %v2024, 0.0025
        %2027 = vst [vmem:[%s1507] sm:$0xff] %v2025
        %2028 = vst [vmem:[%s1507 + $0x8] sm:$0xff] %v2026
        %v2029 = vld [vmem:[%s1534] sm:$0xff]
        %v2030 = vld [vmem:[%s1534 + $0x8] sm:$0xff]
        %v2031 = vsub.f32 %v2029, %v1945
        %v2032 = vsub.f32 %v2030, %v1946
        %v2033 = vmul.f32 %v2031, 1.442695
        %v2034 = vpow.pop %v2033
        %v2035 = vmul.f32 %v2032, 1.442695
        %v2036 = vpow.pop %v2035
        %v2037 = vadd.f32 %v2034, 6.359744e-13
        %v2038 = vadd.f32 %v2036, 6.359744e-13
        %2039 = vst [vmem:[%s1534] sm:$0xff] %v2037
        %2040 = vst [vmem:[%s1534 + $0x8] sm:$0xff] %v2038
        %v2041 = vld [vmem:[%s1561] sm:$0xff]
        %v2042 = vld [vmem:[%s1561 + $0x8] sm:$0xff]
        %v2043 = vsub.f32 %v2041, %v1945
        %v2044 = vsub.f32 %v2042, %v1946
        %v2045 = vmul.f32 %v2043, 1.442695
        %v2046 = vpow.pop %v2045
        %v2047 = vmul.f32 %v2044, 1.442695
        %v2048 = vpow.pop %v2047
        %v2049 = vadd.f32 %v2046, 0.0
        %v2050 = vadd.f32 %v2048, 0.0
        %2051 = vst [vmem:[%s1561] sm:$0xff] %v2049
        %2052 = vst [vmem:[%s1561 + $0x8] sm:$0xff] %v2050
        %v2053 = vld [vmem:[%s1588] sm:$0xff]
        %v2054 = vld [vmem:[%s1588 + $0x8] sm:$0xff]
        %v2055 = vsub.f32 %v2053, %v1945
        %v2056 = vsub.f32 %v2054, %v1946
        %v2057 = vmul.f32 %v2055, 1.442695
        %v2058 = vpow.pop %v2057
        %v2059 = vmul.f32 %v2056, 1.442695
        %v2060 = vpow.pop %v2059
        %v2061 = vadd.f32 %v2058, 4.1156617e-32
        %v2062 = vadd.f32 %v2060, 4.1156617e-32
        %2063 = vst [vmem:[%s1588] sm:$0xff] %v2061
        %2064 = vst [vmem:[%s1588 + $0x8] sm:$0xff] %v2062
        %v2065 = vld [vmem:[%s1615] sm:$0xff]
        %v2066 = vld [vmem:[%s1615 + $0x8] sm:$0xff]
        %v2067 = vsub.f32 %v2065, %v1945
        %v2068 = vsub.f32 %v2066, %v1946
        %v2069 = vmul.f32 %v2067, 1.442695
        %v2070 = vpow.pop %v2069
        %v2071 = vmul.f32 %v2068, 1.442695
        %v2072 = vpow.pop %v2071
        %v2073 = vadd.f32 %v2070, 0.0
        %v2074 = vadd.f32 %v2072, 0.0
        %2075 = vst [vmem:[%s1615] sm:$0xff] %v2073
        %2076 = vst [vmem:[%s1615 + $0x8] sm:$0xff] %v2074
        %v2077 = vld [vmem:[%s1642] sm:$0xff]
        %v2078 = vld [vmem:[%s1642 + $0x8] sm:$0xff]
        %v2079 = vsub.f32 %v2077, %v1945
        %v2080 = vsub.f32 %v2078, %v1946
        %v2081 = vmul.f32 %v2079, 1.442695
        %v2082 = vpow.pop %v2081
        %v2083 = vmul.f32 %v2080, 1.442695
        %v2084 = vpow.pop %v2083
        %v2085 = vadd.f32 %v2082, 4.1156617e-32
        %v2086 = vadd.f32 %v2084, 4.1156617e-32
        %2087 = vst [vmem:[%s1642] sm:$0xff] %v2085
        %2088 = vst [vmem:[%s1642 + $0x8] sm:$0xff] %v2086
        %v2089 = vld [vmem:[%s1669] sm:$0xff]
        %v2090 = vld [vmem:[%s1669 + $0x8] sm:$0xff]
        %v2091 = vsub.f32 %v2089, %v1945
        %v2092 = vsub.f32 %v2090, %v1946
        %v2093 = vmul.f32 %v2091, 1.442695
        %v2094 = vpow.pop %v2093
        %v2095 = vmul.f32 %v2092, 1.442695
        %v2096 = vpow.pop %v2095
        %v2097 = vadd.f32 %v2094, 4.1156617e-32
        %v2098 = vadd.f32 %v2096, 4.1156617e-32
        %2099 = vst [vmem:[%s1669] sm:$0xff] %v2097
        %2100 = vst [vmem:[%s1669 + $0x8] sm:$0xff] %v2098
        %v2101 = vld [vmem:[%s1696] sm:$0xff]
        %v2102 = vld [vmem:[%s1696 + $0x8] sm:$0xff]
        %v2103 = vsub.f32 %v2101, %v1945
        %v2104 = vsub.f32 %v2102, %v1946
        %v2105 = vmul.f32 %v2103, 1.442695
        %v2106 = vpow.pop %v2105
        %v2107 = vmul.f32 %v2104, 1.442695
        %v2108 = vpow.pop %v2107
        %v2109 = vadd.f32 %v2106, 0.0
        %v2110 = vadd.f32 %v2108, 0.0
        %2111 = vst [vmem:[%s1696] sm:$0xff] %v2109
        %2112 = vst [vmem:[%s1696 + $0x8] sm:$0xff] %v2110
        %v2113 = vld [vmem:[%s1723] sm:$0xff]
        %v2114 = vld [vmem:[%s1723 + $0x8] sm:$0xff]
        %v2115 = vsub.f32 %v2113, %v1945
        %v2116 = vsub.f32 %v2114, %v1946
        %v2117 = vmul.f32 %v2115, 1.442695
        %v2118 = vpow.pop %v2117
        %v2119 = vmul.f32 %v2116, 1.442695
        %v2120 = vpow.pop %v2119
        %v2121 = vadd.f32 %v2118, 4.1156617e-32
        %v2122 = vadd.f32 %v2120, 4.1156617e-32
        %2123 = vst [vmem:[%s1723] sm:$0xff] %v2121
        %2124 = vst [vmem:[%s1723 + $0x8] sm:$0xff] %v2122
        %v2125 = vld [vmem:[%s1750] sm:$0xff]
        %v2126 = vld [vmem:[%s1750 + $0x8] sm:$0xff]
        %v2127 = vsub.f32 %v2125, %v1945
        %v2128 = vsub.f32 %v2126, %v1946
        %v2129 = vmul.f32 %v2127, 1.442695
        %v2130 = vpow.pop %v2129
        %v2131 = vmul.f32 %v2128, 1.442695
        %v2132 = vpow.pop %v2131
        %v2133 = vadd.f32 %v2130, 0.0
        %v2134 = vadd.f32 %v2132, 0.0
        %2135 = vst [vmem:[%s1750] sm:$0xff] %v2133
        %2136 = vst [vmem:[%s1750 + $0x8] sm:$0xff] %v2134
        %v2137 = vld [vmem:[%s176] sm:$0xff]
        %v2138 = vld [vmem:[%s176 + $0x8] sm:$0xff]
        %v2139 = vld [vmem:[%s176 + $0x10] sm:$0xff]
        %v2140 = vld [vmem:[%s176 + $0x18] sm:$0xff]
        %v2141 = vld [vmem:[%s176 + $0x20] sm:$0xff]
        %v2142 = vld [vmem:[%s176 + $0x28] sm:$0xff]
        %v2143 = vld [vmem:[%s176 + $0x30] sm:$0xff]
        %v2144 = vld [vmem:[%s176 + $0x38] sm:$0xff]
        %2153 = vrot.lane.b32.xlu0 %v2137, 1
        %v2154 = vpop.permute.xlu0 %2153
        %2155 = vrot.lane.b32.xlu0 %v2138, 1
        %v2156 = vpop.permute.xlu0 %2155
        %2157 = vrot.lane.b32.xlu0 %v2139, 1
        %v2158 = vpop.permute.xlu0 %2157
        %2159 = vrot.lane.b32.xlu0 %v2140, 1
        %v2160 = vpop.permute.xlu0 %2159
        %2161 = vrot.lane.b32.xlu0 %v2141, 1
        %v2162 = vpop.permute.xlu0 %2161
        %2163 = vrot.lane.b32.xlu0 %v2142, 1
        %v2164 = vpop.permute.xlu0 %2163
        %2165 = vrot.lane.b32.xlu0 %v2143, 1
        %v2166 = vpop.permute.xlu0 %2165
        %2167 = vrot.lane.b32.xlu0 %v2144, 1
        %v2168 = vpop.permute.xlu0 %2167
        %v2177 = vsel %vm224, %v2137, %v2154
        %v2178 = vsel %vm224, %v2138, %v2156
        %v2179 = vsel %vm224, %v2139, %v2158
        %v2180 = vsel %vm224, %v2140, %v2160
        %v2181 = vsel %vm224, %v2141, %v2162
        %v2182 = vsel %vm224, %v2142, %v2164
        %v2183 = vsel %vm224, %v2143, %v2166
        %v2184 = vsel %vm224, %v2144, %v2168
        %v2185 = vld [vmem:[%s1426] sm:$0xff]
        %v2186 = vld [vmem:[%s1426 + $0x8] sm:$0xff]
        %v2187 = vmul.f32 %v2177, %v2185
        %v2188 = vmul.f32 %v2178, %v2186
        %v2189 = vmul.f32 %v2179, %v2185
        %v2190 = vmul.f32 %v2180, %v2186
        %v2191 = vmul.f32 %v2181, %v2185
        %v2192 = vmul.f32 %v2182, %v2186
        %v2193 = vmul.f32 %v2183, %v2185
        %v2194 = vmul.f32 %v2184, %v2186
        %2203 = vrot.lane.b32.xlu0 %v2177, 1
        %v2204 = vpop.permute.xlu0 %2203
        %2205 = vrot.lane.b32.xlu0 %v2178, 1
        %v2206 = vpop.permute.xlu0 %2205
        %2207 = vrot.lane.b32.xlu0 %v2179, 1
        %v2208 = vpop.permute.xlu0 %2207
        %2209 = vrot.lane.b32.xlu0 %v2180, 1
        %v2210 = vpop.permute.xlu0 %2209
        %2211 = vrot.lane.b32.xlu0 %v2181, 1
        %v2212 = vpop.permute.xlu0 %2211
        %2213 = vrot.lane.b32.xlu0 %v2182, 1
        %v2214 = vpop.permute.xlu0 %2213
        %2215 = vrot.lane.b32.xlu0 %v2183, 1
        %v2216 = vpop.permute.xlu0 %2215
        %2217 = vrot.lane.b32.xlu0 %v2184, 1
        %v2218 = vpop.permute.xlu0 %2217
        %v2227 = vsel %vm224, %v2137, %v2204
        %v2228 = vsel %vm224, %v2138, %v2206
        %v2229 = vsel %vm224, %v2139, %v2208
        %v2230 = vsel %vm224, %v2140, %v2210
        %v2231 = vsel %vm224, %v2141, %v2212
        %v2232 = vsel %vm224, %v2142, %v2214
        %v2233 = vsel %vm224, %v2143, %v2216
        %v2234 = vsel %vm224, %v2144, %v2218
        %v2235 = vld [vmem:[%s1642] sm:$0xff]
        %v2236 = vld [vmem:[%s1642 + $0x8] sm:$0xff]
        %v2237 = vmul.f32 %v2227, %v2235
        %v2238 = vmul.f32 %v2228, %v2236
        %v2239 = vmul.f32 %v2229, %v2235
        %v2240 = vmul.f32 %v2230, %v2236
        %v2241 = vmul.f32 %v2231, %v2235
        %v2242 = vmul.f32 %v2232, %v2236
        %v2243 = vmul.f32 %v2233, %v2235
        %v2244 = vmul.f32 %v2234, %v2236
        %v2245 = vadd.f32 %v2187, %v2237
        %v2246 = vadd.f32 %v2188, %v2238
        %v2247 = vadd.f32 %v2189, %v2239
        %v2248 = vadd.f32 %v2190, %v2240
        %v2249 = vadd.f32 %v2191, %v2241
        %v2250 = vadd.f32 %v2192, %v2242
        %v2251 = vadd.f32 %v2193, %v2243
        %v2252 = vadd.f32 %v2194, %v2244
        %2253 = vrot.lane.b32.xlu0 %v2137, 127
        %v2254 = vpop.permute.xlu0 %2253
        %2255 = vrot.lane.b32.xlu0 %v2138, 127
        %v2256 = vpop.permute.xlu0 %2255
        %2257 = vrot.lane.b32.xlu0 %v2139, 127
        %v2258 = vpop.permute.xlu0 %2257
        %2259 = vrot.lane.b32.xlu0 %v2140, 127
        %v2260 = vpop.permute.xlu0 %2259
        %2261 = vrot.lane.b32.xlu0 %v2141, 127
        %v2262 = vpop.permute.xlu0 %2261
        %2263 = vrot.lane.b32.xlu0 %v2142, 127
        %v2264 = vpop.permute.xlu0 %2263
        %2265 = vrot.lane.b32.xlu0 %v2143, 127
        %v2266 = vpop.permute.xlu0 %2265
        %2267 = vrot.lane.b32.xlu0 %v2144, 127
        %v2268 = vpop.permute.xlu0 %2267
        %v2277 = vsel %vm222, %v2137, %v2254
        %v2278 = vsel %vm222, %v2138, %v2256
        %v2279 = vsel %vm222, %v2139, %v2258
        %v2280 = vsel %vm222, %v2140, %v2260
        %v2281 = vsel %vm222, %v2141, %v2262
        %v2282 = vsel %vm222, %v2142, %v2264
        %v2283 = vsel %vm222, %v2143, %v2266
        %v2284 = vsel %vm222, %v2144, %v2268
        %v2285 = vld [vmem:[%s1453] sm:$0xff]
        %v2286 = vld [vmem:[%s1453 + $0x8] sm:$0xff]
        %v2287 = vmul.f32 %v2277, %v2285
        %v2288 = vmul.f32 %v2278, %v2286
        %v2289 = vmul.f32 %v2279, %v2285
        %v2290 = vmul.f32 %v2280, %v2286
        %v2291 = vmul.f32 %v2281, %v2285
        %v2292 = vmul.f32 %v2282, %v2286
        %v2293 = vmul.f32 %v2283, %v2285
        %v2294 = vmul.f32 %v2284, %v2286
        %v2295 = vadd.f32 %v2245, %v2287
        %v2296 = vadd.f32 %v2246, %v2288
        %v2297 = vadd.f32 %v2247, %v2289
        %v2298 = vadd.f32 %v2248, %v2290
        %v2299 = vadd.f32 %v2249, %v2291
        %v2300 = vadd.f32 %v2250, %v2292
        %v2301 = vadd.f32 %v2251, %v2293
        %v2302 = vadd.f32 %v2252, %v2294
        %2311 = vrot.lane.b32.xlu0 %v2277, 127
        %v2312 = vpop.permute.xlu0 %2311
        %2313 = vrot.lane.b32.xlu0 %v2278, 127
        %v2314 = vpop.permute.xlu0 %2313
        %2315 = vrot.lane.b32.xlu0 %v2279, 127
        %v2316 = vpop.permute.xlu0 %2315
        %2317 = vrot.lane.b32.xlu0 %v2280, 127
        %v2318 = vpop.permute.xlu0 %2317
        %2319 = vrot.lane.b32.xlu0 %v2281, 127
        %v2320 = vpop.permute.xlu0 %2319
        %2321 = vrot.lane.b32.xlu0 %v2282, 127
        %v2322 = vpop.permute.xlu0 %2321
        %2323 = vrot.lane.b32.xlu0 %v2283, 127
        %v2324 = vpop.permute.xlu0 %2323
        %2325 = vrot.lane.b32.xlu0 %v2284, 127
        %v2326 = vpop.permute.xlu0 %2325
        %v2335 = vsel %vm222, %v2137, %v2312
        %v2336 = vsel %vm222, %v2138, %v2314
        %v2337 = vsel %vm222, %v2139, %v2316
        %v2338 = vsel %vm222, %v2140, %v2318
        %v2339 = vsel %vm222, %v2141, %v2320
        %v2340 = vsel %vm222, %v2142, %v2322
        %v2341 = vsel %vm222, %v2143, %v2324
        %v2342 = vsel %vm222, %v2144, %v2326
        %v2343 = vld [vmem:[%s1669] sm:$0xff]
        %v2344 = vld [vmem:[%s1669 + $0x8] sm:$0xff]
        %v2345 = vmul.f32 %v2335, %v2343
        %v2346 = vmul.f32 %v2336, %v2344
        %v2347 = vmul.f32 %v2337, %v2343
        %v2348 = vmul.f32 %v2338, %v2344
        %v2349 = vmul.f32 %v2339, %v2343
        %v2350 = vmul.f32 %v2340, %v2344
        %v2351 = vmul.f32 %v2341, %v2343
        %v2352 = vmul.f32 %v2342, %v2344
        %v2353 = vadd.f32 %v2295, %v2345
        %v2354 = vadd.f32 %v2296, %v2346
        %v2355 = vadd.f32 %v2297, %v2347
        %v2356 = vadd.f32 %v2298, %v2348
        %v2357 = vadd.f32 %v2299, %v2349
        %v2358 = vadd.f32 %v2300, %v2350
        %v2359 = vadd.f32 %v2301, %v2351
        %v2360 = vadd.f32 %v2302, %v2352
        %v2361 = vrot.slane %v2138, 7
        %v2362 = vrot.slane %v2140, 7
        %v2363 = vrot.slane %v2142, 7
        %v2364 = vrot.slane %v2144, 7
        %v2369 = vrot.slane %v2137, 7
        %v2370 = vsel %vm463, %v2369, %v2361
        %v2371 = vrot.slane %v2139, 7
        %v2372 = vsel %vm463, %v2371, %v2362
        %v2373 = vrot.slane %v2141, 7
        %v2374 = vsel %vm463, %v2373, %v2363
        %v2375 = vrot.slane %v2143, 7
        %v2376 = vsel %vm463, %v2375, %v2364
        %v2385 = vsel %vm463, %v2361, %v2369
        %v2386 = vsel %vm463, %v2362, %v2371
        %v2387 = vsel %vm463, %v2363, %v2373
        %v2388 = vsel %vm463, %v2364, %v2375
        %v2389 = vsel %vm219, %v2137, %v2385
        %v2390 = vsel %vm220, %v2138, %v2370
        %v2391 = vsel %vm219, %v2139, %v2386
        %v2392 = vsel %vm220, %v2140, %v2372
        %v2393 = vsel %vm219, %v2141, %v2387
        %v2394 = vsel %vm220, %v2142, %v2374
        %v2395 = vsel %vm219, %v2143, %v2388
        %v2396 = vsel %vm220, %v2144, %v2376
        %v2397 = vld [vmem:[%s1372] sm:$0xff]
        %v2398 = vld [vmem:[%s1372 + $0x8] sm:$0xff]
        %v2399 = vmul.f32 %v2389, %v2397
        %v2400 = vmul.f32 %v2390, %v2398
        %v2401 = vmul.f32 %v2391, %v2397
        %v2402 = vmul.f32 %v2392, %v2398
        %v2403 = vmul.f32 %v2393, %v2397
        %v2404 = vmul.f32 %v2394, %v2398
        %v2405 = vmul.f32 %v2395, %v2397
        %v2406 = vmul.f32 %v2396, %v2398
        %v2407 = vadd.f32 %v2353, %v2399
        %v2408 = vadd.f32 %v2354, %v2400
        %v2409 = vadd.f32 %v2355, %v2401
        %v2410 = vadd.f32 %v2356, %v2402
        %v2411 = vadd.f32 %v2357, %v2403
        %v2412 = vadd.f32 %v2358, %v2404
        %v2413 = vadd.f32 %v2359, %v2405
        %v2414 = vadd.f32 %v2360, %v2406
        %2423 = vrot.lane.b32.xlu0 %v2389, 1
        %v2424 = vpop.permute.xlu0 %2423
        %2425 = vrot.lane.b32.xlu0 %v2390, 1
        %v2426 = vpop.permute.xlu0 %2425
        %2427 = vrot.lane.b32.xlu0 %v2391, 1
        %v2428 = vpop.permute.xlu0 %2427
        %2429 = vrot.lane.b32.xlu0 %v2392, 1
        %v2430 = vpop.permute.xlu0 %2429
        %2431 = vrot.lane.b32.xlu0 %v2393, 1
        %v2432 = vpop.permute.xlu0 %2431
        %2433 = vrot.lane.b32.xlu0 %v2394, 1
        %v2434 = vpop.permute.xlu0 %2433
        %2435 = vrot.lane.b32.xlu0 %v2395, 1
        %v2436 = vpop.permute.xlu0 %2435
        %2437 = vrot.lane.b32.xlu0 %v2396, 1
        %v2438 = vpop.permute.xlu0 %2437
        %v2447 = vsel %vm224, %v2389, %v2424
        %v2448 = vsel %vm224, %v2390, %v2426
        %v2449 = vsel %vm224, %v2391, %v2428
        %v2450 = vsel %vm224, %v2392, %v2430
        %v2451 = vsel %vm224, %v2393, %v2432
        %v2452 = vsel %vm224, %v2394, %v2434
        %v2453 = vsel %vm224, %v2395, %v2436
        %v2454 = vsel %vm224, %v2396, %v2438
        %v2455 = vld [vmem:[#allocation2] sm:$0xff]
        %v2456 = vld [vmem:[#allocation2 + $0x8] sm:$0xff]
        %v2457 = vmul.f32 %v2447, %v2455
        %v2458 = vmul.f32 %v2448, %v2456
        %v2459 = vmul.f32 %v2449, %v2455
        %v2460 = vmul.f32 %v2450, %v2456
        %v2461 = vmul.f32 %v2451, %v2455
        %v2462 = vmul.f32 %v2452, %v2456
        %v2463 = vmul.f32 %v2453, %v2455
        %v2464 = vmul.f32 %v2454, %v2456
        %v2465 = vadd.f32 %v2407, %v2457
        %v2466 = vadd.f32 %v2408, %v2458
        %v2467 = vadd.f32 %v2409, %v2459
        %v2468 = vadd.f32 %v2410, %v2460
        %v2469 = vadd.f32 %v2411, %v2461
        %v2470 = vadd.f32 %v2412, %v2462
        %v2471 = vadd.f32 %v2413, %v2463
        %v2472 = vadd.f32 %v2414, %v2464
        %2473 = vrot.lane.b32.xlu0 %v2389, 127
        %v2474 = vpop.permute.xlu0 %2473
        %2475 = vrot.lane.b32.xlu0 %v2390, 127
        %v2476 = vpop.permute.xlu0 %2475
        %2477 = vrot.lane.b32.xlu0 %v2391, 127
        %v2478 = vpop.permute.xlu0 %2477
        %2479 = vrot.lane.b32.xlu0 %v2392, 127
        %v2480 = vpop.permute.xlu0 %2479
        %2481 = vrot.lane.b32.xlu0 %v2393, 127
        %v2482 = vpop.permute.xlu0 %2481
        %2483 = vrot.lane.b32.xlu0 %v2394, 127
        %v2484 = vpop.permute.xlu0 %2483
        %2485 = vrot.lane.b32.xlu0 %v2395, 127
        %v2486 = vpop.permute.xlu0 %2485
        %2487 = vrot.lane.b32.xlu0 %v2396, 127
        %v2488 = vpop.permute.xlu0 %2487
        %v2497 = vsel %vm222, %v2389, %v2474
        %v2498 = vsel %vm222, %v2390, %v2476
        %v2499 = vsel %vm222, %v2391, %v2478
        %v2500 = vsel %vm222, %v2392, %v2480
        %v2501 = vsel %vm222, %v2393, %v2482
        %v2502 = vsel %vm222, %v2394, %v2484
        %v2503 = vsel %vm222, %v2395, %v2486
        %v2504 = vsel %vm222, %v2396, %v2488
        %v2505 = vld [vmem:[%s1399] sm:$0xff]
        %v2506 = vld [vmem:[%s1399 + $0x8] sm:$0xff]
        %v2507 = vmul.f32 %v2497, %v2505
        %v2508 = vmul.f32 %v2498, %v2506
        %v2509 = vmul.f32 %v2499, %v2505
        %v2510 = vmul.f32 %v2500, %v2506
        %v2511 = vmul.f32 %v2501, %v2505
        %v2512 = vmul.f32 %v2502, %v2506
        %v2513 = vmul.f32 %v2503, %v2505
        %v2514 = vmul.f32 %v2504, %v2506
        %v2515 = vadd.f32 %v2465, %v2507
        %v2516 = vadd.f32 %v2466, %v2508
        %v2517 = vadd.f32 %v2467, %v2509
        %v2518 = vadd.f32 %v2468, %v2510
        %v2519 = vadd.f32 %v2469, %v2511
        %v2520 = vadd.f32 %v2470, %v2512
        %v2521 = vadd.f32 %v2471, %v2513
        %v2522 = vadd.f32 %v2472, %v2514
        %v2523 = vrot.slane %v2390, 7
        %v2524 = vrot.slane %v2392, 7
        %v2525 = vrot.slane %v2394, 7
        %v2526 = vrot.slane %v2396, 7
        %v2531 = vrot.slane %v2389, 7
        %v2532 = vsel %vm463, %v2531, %v2523
        %v2533 = vrot.slane %v2391, 7
        %v2534 = vsel %vm463, %v2533, %v2524
        %v2535 = vrot.slane %v2393, 7
        %v2536 = vsel %vm463, %v2535, %v2525
        %v2537 = vrot.slane %v2395, 7
        %v2538 = vsel %vm463, %v2537, %v2526
        %v2547 = vsel %vm463, %v2523, %v2531
        %v2548 = vsel %vm463, %v2524, %v2533
        %v2549 = vsel %vm463, %v2525, %v2535
        %v2550 = vsel %vm463, %v2526, %v2537
        %v2551 = vsel %vm219, %v2137, %v2547
        %v2552 = vsel %vm220, %v2138, %v2532
        %v2553 = vsel %vm219, %v2139, %v2548
        %v2554 = vsel %vm220, %v2140, %v2534
        %v2555 = vsel %vm219, %v2141, %v2549
        %v2556 = vsel %vm220, %v2142, %v2536
        %v2557 = vsel %vm219, %v2143, %v2550
        %v2558 = vsel %vm220, %v2144, %v2538
        %v2559 = vld [vmem:[%s1588] sm:$0xff]
        %v2560 = vld [vmem:[%s1588 + $0x8] sm:$0xff]
        %v2561 = vmul.f32 %v2551, %v2559
        %v2562 = vmul.f32 %v2552, %v2560
        %v2563 = vmul.f32 %v2553, %v2559
        %v2564 = vmul.f32 %v2554, %v2560
        %v2565 = vmul.f32 %v2555, %v2559
        %v2566 = vmul.f32 %v2556, %v2560
        %v2567 = vmul.f32 %v2557, %v2559
        %v2568 = vmul.f32 %v2558, %v2560
        %v2569 = vadd.f32 %v2515, %v2561
        %v2570 = vadd.f32 %v2516, %v2562
        %v2571 = vadd.f32 %v2517, %v2563
        %v2572 = vadd.f32 %v2518, %v2564
        %v2573 = vadd.f32 %v2519, %v2565
        %v2574 = vadd.f32 %v2520, %v2566
        %v2575 = vadd.f32 %v2521, %v2567
        %v2576 = vadd.f32 %v2522, %v2568
        %2585 = vrot.lane.b32.xlu0 %v2551, 1
        %v2586 = vpop.permute.xlu0 %2585
        %2587 = vrot.lane.b32.xlu0 %v2552, 1
        %v2588 = vpop.permute.xlu0 %2587
        %2589 = vrot.lane.b32.xlu0 %v2553, 1
        %v2590 = vpop.permute.xlu0 %2589
        %2591 = vrot.lane.b32.xlu0 %v2554, 1
        %v2592 = vpop.permute.xlu0 %2591
        %2593 = vrot.lane.b32.xlu0 %v2555, 1
        %v2594 = vpop.permute.xlu0 %2593
        %2595 = vrot.lane.b32.xlu0 %v2556, 1
        %v2596 = vpop.permute.xlu0 %2595
        %2597 = vrot.lane.b32.xlu0 %v2557, 1
        %v2598 = vpop.permute.xlu0 %2597
        %2599 = vrot.lane.b32.xlu0 %v2558, 1
        %v2600 = vpop.permute.xlu0 %2599
        %v2609 = vsel %vm224, %v2551, %v2586
        %v2610 = vsel %vm224, %v2552, %v2588
        %v2611 = vsel %vm224, %v2553, %v2590
        %v2612 = vsel %vm224, %v2554, %v2592
        %v2613 = vsel %vm224, %v2555, %v2594
        %v2614 = vsel %vm224, %v2556, %v2596
        %v2615 = vsel %vm224, %v2557, %v2598
        %v2616 = vsel %vm224, %v2558, %v2600
        %2625 = vrot.lane.b32.xlu0 %v2609, 1
        %v2626 = vpop.permute.xlu0 %2625
        %2627 = vrot.lane.b32.xlu0 %v2610, 1
        %v2628 = vpop.permute.xlu0 %2627
        %2629 = vrot.lane.b32.xlu0 %v2611, 1
        %v2630 = vpop.permute.xlu0 %2629
        %2631 = vrot.lane.b32.xlu0 %v2612, 1
        %v2632 = vpop.permute.xlu0 %2631
        %2633 = vrot.lane.b32.xlu0 %v2613, 1
        %v2634 = vpop.permute.xlu0 %2633
        %2635 = vrot.lane.b32.xlu0 %v2614, 1
        %v2636 = vpop.permute.xlu0 %2635
        %2637 = vrot.lane.b32.xlu0 %v2615, 1
        %v2638 = vpop.permute.xlu0 %2637
        %2639 = vrot.lane.b32.xlu0 %v2616, 1
        %v2640 = vpop.permute.xlu0 %2639
        %v2649 = vsel %vm224, %v2551, %v2626
        %v2650 = vsel %vm224, %v2552, %v2628
        %v2651 = vsel %vm224, %v2553, %v2630
        %v2652 = vsel %vm224, %v2554, %v2632
        %v2653 = vsel %vm224, %v2555, %v2634
        %v2654 = vsel %vm224, %v2556, %v2636
        %v2655 = vsel %vm224, %v2557, %v2638
        %v2656 = vsel %vm224, %v2558, %v2640
        %v2657 = vld [vmem:[%s1561] sm:$0xff]
        %v2658 = vld [vmem:[%s1561 + $0x8] sm:$0xff]
        %v2659 = vmul.f32 %v2649, %v2657
        %v2660 = vmul.f32 %v2650, %v2658
        %v2661 = vmul.f32 %v2651, %v2657
        %v2662 = vmul.f32 %v2652, %v2658
        %v2663 = vmul.f32 %v2653, %v2657
        %v2664 = vmul.f32 %v2654, %v2658
        %v2665 = vmul.f32 %v2655, %v2657
        %v2666 = vmul.f32 %v2656, %v2658
        %v2667 = vadd.f32 %v2569, %v2659
        %v2668 = vadd.f32 %v2570, %v2660
        %v2669 = vadd.f32 %v2571, %v2661
        %v2670 = vadd.f32 %v2572, %v2662
        %v2671 = vadd.f32 %v2573, %v2663
        %v2672 = vadd.f32 %v2574, %v2664
        %v2673 = vadd.f32 %v2575, %v2665
        %v2674 = vadd.f32 %v2576, %v2666
        %2675 = vrot.lane.b32.xlu0 %v2551, 127
        %v2676 = vpop.permute.xlu0 %2675
        %2677 = vrot.lane.b32.xlu0 %v2552, 127
        %v2678 = vpop.permute.xlu0 %2677
        %2679 = vrot.lane.b32.xlu0 %v2553, 127
        %v2680 = vpop.permute.xlu0 %2679
        %2681 = vrot.lane.b32.xlu0 %v2554, 127
        %v2682 = vpop.permute.xlu0 %2681
        %2683 = vrot.lane.b32.xlu0 %v2555, 127
        %v2684 = vpop.permute.xlu0 %2683
        %2685 = vrot.lane.b32.xlu0 %v2556, 127
        %v2686 = vpop.permute.xlu0 %2685
        %2687 = vrot.lane.b32.xlu0 %v2557, 127
        %v2688 = vpop.permute.xlu0 %2687
        %2689 = vrot.lane.b32.xlu0 %v2558, 127
        %v2690 = vpop.permute.xlu0 %2689
        %v2699 = vsel %vm222, %v2551, %v2676
        %v2700 = vsel %vm222, %v2552, %v2678
        %v2701 = vsel %vm222, %v2553, %v2680
        %v2702 = vsel %vm222, %v2554, %v2682
        %v2703 = vsel %vm222, %v2555, %v2684
        %v2704 = vsel %vm222, %v2556, %v2686
        %v2705 = vsel %vm222, %v2557, %v2688
        %v2706 = vsel %vm222, %v2558, %v2690
        %2715 = vrot.lane.b32.xlu0 %v2699, 127
        %v2716 = vpop.permute.xlu0 %2715
        %2717 = vrot.lane.b32.xlu0 %v2700, 127
        %v2718 = vpop.permute.xlu0 %2717
        %2719 = vrot.lane.b32.xlu0 %v2701, 127
        %v2720 = vpop.permute.xlu0 %2719
        %2721 = vrot.lane.b32.xlu0 %v2702, 127
        %v2722 = vpop.permute.xlu0 %2721
        %2723 = vrot.lane.b32.xlu0 %v2703, 127
        %v2724 = vpop.permute.xlu0 %2723
        %2725 = vrot.lane.b32.xlu0 %v2704, 127
        %v2726 = vpop.permute.xlu0 %2725
        %2727 = vrot.lane.b32.xlu0 %v2705, 127
        %v2728 = vpop.permute.xlu0 %2727
        %2729 = vrot.lane.b32.xlu0 %v2706, 127
        %v2730 = vpop.permute.xlu0 %2729
        %v2739 = vsel %vm222, %v2551, %v2716
        %v2740 = vsel %vm222, %v2552, %v2718
        %v2741 = vsel %vm222, %v2553, %v2720
        %v2742 = vsel %vm222, %v2554, %v2722
        %v2743 = vsel %vm222, %v2555, %v2724
        %v2744 = vsel %vm222, %v2556, %v2726
        %v2745 = vsel %vm222, %v2557, %v2728
        %v2746 = vsel %vm222, %v2558, %v2730
        %v2747 = vld [vmem:[%s1615] sm:$0xff]
        %v2748 = vld [vmem:[%s1615 + $0x8] sm:$0xff]
        %v2749 = vmul.f32 %v2739, %v2747
        %v2750 = vmul.f32 %v2740, %v2748
        %v2751 = vmul.f32 %v2741, %v2747
        %v2752 = vmul.f32 %v2742, %v2748
        %v2753 = vmul.f32 %v2743, %v2747
        %v2754 = vmul.f32 %v2744, %v2748
        %v2755 = vmul.f32 %v2745, %v2747
        %v2756 = vmul.f32 %v2746, %v2748
        %v2757 = vadd.f32 %v2667, %v2749
        %v2758 = vadd.f32 %v2668, %v2750
        %v2759 = vadd.f32 %v2669, %v2751
        %v2760 = vadd.f32 %v2670, %v2752
        %v2761 = vadd.f32 %v2671, %v2753
        %v2762 = vadd.f32 %v2672, %v2754
        %v2763 = vadd.f32 %v2673, %v2755
        %v2764 = vadd.f32 %v2674, %v2756
        %v2765 = vrot.slane %v2137, 1
        %v2766 = vrot.slane %v2138, 1
        %v2767 = vsel %vm865, %v2765, %v2766
        %v2768 = vrot.slane %v2139, 1
        %v2769 = vrot.slane %v2140, 1
        %v2770 = vsel %vm865, %v2768, %v2769
        %v2771 = vrot.slane %v2141, 1
        %v2772 = vrot.slane %v2142, 1
        %v2773 = vsel %vm865, %v2771, %v2772
        %v2774 = vrot.slane %v2143, 1
        %v2775 = vrot.slane %v2144, 1
        %v2776 = vsel %vm865, %v2774, %v2775
        %v2789 = vsel %vm865, %v2766, %v2765
        %v2790 = vsel %vm865, %v2769, %v2768
        %v2791 = vsel %vm865, %v2772, %v2771
        %v2792 = vsel %vm865, %v2775, %v2774
        %v2793 = vsel %vm215, %v2137, %v2767
        %v2794 = vsel %vm216, %v2138, %v2789
        %v2795 = vsel %vm215, %v2139, %v2770
        %v2796 = vsel %vm216, %v2140, %v2790
        %v2797 = vsel %vm215, %v2141, %v2773
        %v2798 = vsel %vm216, %v2142, %v2791
        %v2799 = vsel %vm215, %v2143, %v2776
        %v2800 = vsel %vm216, %v2144, %v2792
        %v2801 = vld [vmem:[%s1507] sm:$0xff]
        %v2802 = vld [vmem:[%s1507 + $0x8] sm:$0xff]
        %v2803 = vmul.f32 %v2793, %v2801
        %v2804 = vmul.f32 %v2794, %v2802
        %v2805 = vmul.f32 %v2795, %v2801
        %v2806 = vmul.f32 %v2796, %v2802
        %v2807 = vmul.f32 %v2797, %v2801
        %v2808 = vmul.f32 %v2798, %v2802
        %v2809 = vmul.f32 %v2799, %v2801
        %v2810 = vmul.f32 %v2800, %v2802
        %v2811 = vadd.f32 %v2757, %v2803
        %v2812 = vadd.f32 %v2758, %v2804
        %v2813 = vadd.f32 %v2759, %v2805
        %v2814 = vadd.f32 %v2760, %v2806
        %v2815 = vadd.f32 %v2761, %v2807
        %v2816 = vadd.f32 %v2762, %v2808
        %v2817 = vadd.f32 %v2763, %v2809
        %v2818 = vadd.f32 %v2764, %v2810
        %2827 = vrot.lane.b32.xlu0 %v2793, 1
        %v2828 = vpop.permute.xlu0 %2827
        %2829 = vrot.lane.b32.xlu0 %v2794, 1
        %v2830 = vpop.permute.xlu0 %2829
        %2831 = vrot.lane.b32.xlu0 %v2795, 1
        %v2832 = vpop.permute.xlu0 %2831
        %2833 = vrot.lane.b32.xlu0 %v2796, 1
        %v2834 = vpop.permute.xlu0 %2833
        %2835 = vrot.lane.b32.xlu0 %v2797, 1
        %v2836 = vpop.permute.xlu0 %2835
        %2837 = vrot.lane.b32.xlu0 %v2798, 1
        %v2838 = vpop.permute.xlu0 %2837
        %2839 = vrot.lane.b32.xlu0 %v2799, 1
        %v2840 = vpop.permute.xlu0 %2839
        %2841 = vrot.lane.b32.xlu0 %v2800, 1
        %v2842 = vpop.permute.xlu0 %2841
        %v2851 = vsel %vm224, %v2793, %v2828
        %v2852 = vsel %vm224, %v2794, %v2830
        %v2853 = vsel %vm224, %v2795, %v2832
        %v2854 = vsel %vm224, %v2796, %v2834
        %v2855 = vsel %vm224, %v2797, %v2836
        %v2856 = vsel %vm224, %v2798, %v2838
        %v2857 = vsel %vm224, %v2799, %v2840
        %v2858 = vsel %vm224, %v2800, %v2842
        %v2859 = vld [vmem:[%s1480] sm:$0xff]
        %v2860 = vld [vmem:[%s1480 + $0x8] sm:$0xff]
        %v2861 = vmul.f32 %v2851, %v2859
        %v2862 = vmul.f32 %v2852, %v2860
        %v2863 = vmul.f32 %v2853, %v2859
        %v2864 = vmul.f32 %v2854, %v2860
        %v2865 = vmul.f32 %v2855, %v2859
        %v2866 = vmul.f32 %v2856, %v2860
        %v2867 = vmul.f32 %v2857, %v2859
        %v2868 = vmul.f32 %v2858, %v2860
        %v2869 = vadd.f32 %v2811, %v2861
        %v2870 = vadd.f32 %v2812, %v2862
        %v2871 = vadd.f32 %v2813, %v2863
        %v2872 = vadd.f32 %v2814, %v2864
        %v2873 = vadd.f32 %v2815, %v2865
        %v2874 = vadd.f32 %v2816, %v2866
        %v2875 = vadd.f32 %v2817, %v2867
        %v2876 = vadd.f32 %v2818, %v2868
        %2877 = vrot.lane.b32.xlu0 %v2793, 127
        %v2878 = vpop.permute.xlu0 %2877
        %2879 = vrot.lane.b32.xlu0 %v2794, 127
        %v2880 = vpop.permute.xlu0 %2879
        %2881 = vrot.lane.b32.xlu0 %v2795, 127
        %v2882 = vpop.permute.xlu0 %2881
        %2883 = vrot.lane.b32.xlu0 %v2796, 127
        %v2884 = vpop.permute.xlu0 %2883
        %2885 = vrot.lane.b32.xlu0 %v2797, 127
        %v2886 = vpop.permute.xlu0 %2885
        %2887 = vrot.lane.b32.xlu0 %v2798, 127
        %v2888 = vpop.permute.xlu0 %2887
        %2889 = vrot.lane.b32.xlu0 %v2799, 127
        %v2890 = vpop.permute.xlu0 %2889
        %2891 = vrot.lane.b32.xlu0 %v2800, 127
        %v2892 = vpop.permute.xlu0 %2891
        %v2901 = vsel %vm222, %v2793, %v2878
        %v2902 = vsel %vm222, %v2794, %v2880
        %v2903 = vsel %vm222, %v2795, %v2882
        %v2904 = vsel %vm222, %v2796, %v2884
        %v2905 = vsel %vm222, %v2797, %v2886
        %v2906 = vsel %vm222, %v2798, %v2888
        %v2907 = vsel %vm222, %v2799, %v2890
        %v2908 = vsel %vm222, %v2800, %v2892
        %v2909 = vld [vmem:[%s1534] sm:$0xff]
        %v2910 = vld [vmem:[%s1534 + $0x8] sm:$0xff]
        %v2911 = vmul.f32 %v2901, %v2909
        %v2912 = vmul.f32 %v2902, %v2910
        %v2913 = vmul.f32 %v2903, %v2909
        %v2914 = vmul.f32 %v2904, %v2910
        %v2915 = vmul.f32 %v2905, %v2909
        %v2916 = vmul.f32 %v2906, %v2910
        %v2917 = vmul.f32 %v2907, %v2909
        %v2918 = vmul.f32 %v2908, %v2910
        %v2919 = vadd.f32 %v2869, %v2911
        %v2920 = vadd.f32 %v2870, %v2912
        %v2921 = vadd.f32 %v2871, %v2913
        %v2922 = vadd.f32 %v2872, %v2914
        %v2923 = vadd.f32 %v2873, %v2915
        %v2924 = vadd.f32 %v2874, %v2916
        %v2925 = vadd.f32 %v2875, %v2917
        %v2926 = vadd.f32 %v2876, %v2918
        %v2927 = vrot.slane %v2793, 1
        %v2928 = vrot.slane %v2794, 1
        %v2929 = vsel %vm865, %v2927, %v2928
        %v2930 = vrot.slane %v2795, 1
        %v2931 = vrot.slane %v2796, 1
        %v2932 = vsel %vm865, %v2930, %v2931
        %v2933 = vrot.slane %v2797, 1
        %v2934 = vrot.slane %v2798, 1
        %v2935 = vsel %vm865, %v2933, %v2934
        %v2936 = vrot.slane %v2799, 1
        %v2937 = vrot.slane %v2800, 1
        %v2938 = vsel %vm865, %v2936, %v2937
        %v2951 = vsel %vm865, %v2928, %v2927
        %v2952 = vsel %vm865, %v2931, %v2930
        %v2953 = vsel %vm865, %v2934, %v2933
        %v2954 = vsel %vm865, %v2937, %v2936
        %v2955 = vsel %vm215, %v2137, %v2929
        %v2956 = vsel %vm216, %v2138, %v2951
        %v2957 = vsel %vm215, %v2139, %v2932
        %v2958 = vsel %vm216, %v2140, %v2952
        %v2959 = vsel %vm215, %v2141, %v2935
        %v2960 = vsel %vm216, %v2142, %v2953
        %v2961 = vsel %vm215, %v2143, %v2938
        %v2962 = vsel %vm216, %v2144, %v2954
        %v2963 = vld [vmem:[%s1723] sm:$0xff]
        %v2964 = vld [vmem:[%s1723 + $0x8] sm:$0xff]
        %v2965 = vmul.f32 %v2955, %v2963
        %v2966 = vmul.f32 %v2956, %v2964
        %v2967 = vmul.f32 %v2957, %v2963
        %v2968 = vmul.f32 %v2958, %v2964
        %v2969 = vmul.f32 %v2959, %v2963
        %v2970 = vmul.f32 %v2960, %v2964
        %v2971 = vmul.f32 %v2961, %v2963
        %v2972 = vmul.f32 %v2962, %v2964
        %v2973 = vadd.f32 %v2919, %v2965
        %v2974 = vadd.f32 %v2920, %v2966
        %v2975 = vadd.f32 %v2921, %v2967
        %v2976 = vadd.f32 %v2922, %v2968
        %v2977 = vadd.f32 %v2923, %v2969
        %v2978 = vadd.f32 %v2924, %v2970
        %v2979 = vadd.f32 %v2925, %v2971
        %v2980 = vadd.f32 %v2926, %v2972
        %2989 = vrot.lane.b32.xlu0 %v2955, 1
        %v2990 = vpop.permute.xlu0 %2989
        %2991 = vrot.lane.b32.xlu0 %v2956, 1
        %v2992 = vpop.permute.xlu0 %2991
        %2993 = vrot.lane.b32.xlu0 %v2957, 1
        %v2994 = vpop.permute.xlu0 %2993
        %2995 = vrot.lane.b32.xlu0 %v2958, 1
        %v2996 = vpop.permute.xlu0 %2995
        %2997 = vrot.lane.b32.xlu0 %v2959, 1
        %v2998 = vpop.permute.xlu0 %2997
        %2999 = vrot.lane.b32.xlu0 %v2960, 1
        %v3000 = vpop.permute.xlu0 %2999
        %3001 = vrot.lane.b32.xlu0 %v2961, 1
        %v3002 = vpop.permute.xlu0 %3001
        %3003 = vrot.lane.b32.xlu0 %v2962, 1
        %v3004 = vpop.permute.xlu0 %3003
        %v3013 = vsel %vm224, %v2955, %v2990
        %v3014 = vsel %vm224, %v2956, %v2992
        %v3015 = vsel %vm224, %v2957, %v2994
        %v3016 = vsel %vm224, %v2958, %v2996
        %v3017 = vsel %vm224, %v2959, %v2998
        %v3018 = vsel %vm224, %v2960, %v3000
        %v3019 = vsel %vm224, %v2961, %v3002
        %v3020 = vsel %vm224, %v2962, %v3004
        %3029 = vrot.lane.b32.xlu0 %v3013, 1
        %v3030 = vpop.permute.xlu0 %3029
        %3031 = vrot.lane.b32.xlu0 %v3014, 1
        %v3032 = vpop.permute.xlu0 %3031
        %3033 = vrot.lane.b32.xlu0 %v3015, 1
        %v3034 = vpop.permute.xlu0 %3033
        %3035 = vrot.lane.b32.xlu0 %v3016, 1
        %v3036 = vpop.permute.xlu0 %3035
        %3037 = vrot.lane.b32.xlu0 %v3017, 1
        %v3038 = vpop.permute.xlu0 %3037
        %3039 = vrot.lane.b32.xlu0 %v3018, 1
        %v3040 = vpop.permute.xlu0 %3039
        %3041 = vrot.lane.b32.xlu0 %v3019, 1
        %v3042 = vpop.permute.xlu0 %3041
        %3043 = vrot.lane.b32.xlu0 %v3020, 1
        %v3044 = vpop.permute.xlu0 %3043
        %v3053 = vsel %vm224, %v2955, %v3030
        %v3054 = vsel %vm224, %v2956, %v3032
        %v3055 = vsel %vm224, %v2957, %v3034
        %v3056 = vsel %vm224, %v2958, %v3036
        %v3057 = vsel %vm224, %v2959, %v3038
        %v3058 = vsel %vm224, %v2960, %v3040
        %v3059 = vsel %vm224, %v2961, %v3042
        %v3060 = vsel %vm224, %v2962, %v3044
        %v3061 = vld [vmem:[%s1696] sm:$0xff]
        %v3062 = vld [vmem:[%s1696 + $0x8] sm:$0xff]
        %v3063 = vmul.f32 %v3053, %v3061
        %v3064 = vmul.f32 %v3054, %v3062
        %v3065 = vmul.f32 %v3055, %v3061
        %v3066 = vmul.f32 %v3056, %v3062
        %v3067 = vmul.f32 %v3057, %v3061
        %v3068 = vmul.f32 %v3058, %v3062
        %v3069 = vmul.f32 %v3059, %v3061
        %v3070 = vmul.f32 %v3060, %v3062
        %v3071 = vadd.f32 %v2973, %v3063
        %v3072 = vadd.f32 %v2974, %v3064
        %v3073 = vadd.f32 %v2975, %v3065
        %v3074 = vadd.f32 %v2976, %v3066
        %v3075 = vadd.f32 %v2977, %v3067
        %v3076 = vadd.f32 %v2978, %v3068
        %v3077 = vadd.f32 %v2979, %v3069
        %v3078 = vadd.f32 %v2980, %v3070
        %3079 = vrot.lane.b32.xlu0 %v2955, 127
        %v3080 = vpop.permute.xlu0 %3079
        %3081 = vrot.lane.b32.xlu0 %v2956, 127
        %v3082 = vpop.permute.xlu0 %3081
        %3083 = vrot.lane.b32.xlu0 %v2957, 127
        %v3084 = vpop.permute.xlu0 %3083
        %3085 = vrot.lane.b32.xlu0 %v2958, 127
        %v3086 = vpop.permute.xlu0 %3085
        %3087 = vrot.lane.b32.xlu0 %v2959, 127
        %v3088 = vpop.permute.xlu0 %3087
        %3089 = vrot.lane.b32.xlu0 %v2960, 127
        %v3090 = vpop.permute.xlu0 %3089
        %3091 = vrot.lane.b32.xlu0 %v2961, 127
        %v3092 = vpop.permute.xlu0 %3091
        %3093 = vrot.lane.b32.xlu0 %v2962, 127
        %v3094 = vpop.permute.xlu0 %3093
        %v3103 = vsel %vm222, %v2955, %v3080
        %v3104 = vsel %vm222, %v2956, %v3082
        %v3105 = vsel %vm222, %v2957, %v3084
        %v3106 = vsel %vm222, %v2958, %v3086
        %v3107 = vsel %vm222, %v2959, %v3088
        %v3108 = vsel %vm222, %v2960, %v3090
        %v3109 = vsel %vm222, %v2961, %v3092
        %v3110 = vsel %vm222, %v2962, %v3094
        %3119 = vrot.lane.b32.xlu0 %v3103, 127
        %v3120 = vpop.permute.xlu0 %3119
        %3121 = vrot.lane.b32.xlu0 %v3104, 127
        %v3122 = vpop.permute.xlu0 %3121
        %3123 = vrot.lane.b32.xlu0 %v3105, 127
        %v3124 = vpop.permute.xlu0 %3123
        %3125 = vrot.lane.b32.xlu0 %v3106, 127
        %v3126 = vpop.permute.xlu0 %3125
        %3127 = vrot.lane.b32.xlu0 %v3107, 127
        %v3128 = vpop.permute.xlu0 %3127
        %3129 = vrot.lane.b32.xlu0 %v3108, 127
        %v3130 = vpop.permute.xlu0 %3129
        %3131 = vrot.lane.b32.xlu0 %v3109, 127
        %v3132 = vpop.permute.xlu0 %3131
        %3133 = vrot.lane.b32.xlu0 %v3110, 127
        %v3134 = vpop.permute.xlu0 %3133
        %v3143 = vsel %vm222, %v2955, %v3120
        %v3144 = vsel %vm222, %v2956, %v3122
        %v3145 = vsel %vm222, %v2957, %v3124
        %v3146 = vsel %vm222, %v2958, %v3126
        %v3147 = vsel %vm222, %v2959, %v3128
        %v3148 = vsel %vm222, %v2960, %v3130
        %v3149 = vsel %vm222, %v2961, %v3132
        %v3150 = vsel %vm222, %v2962, %v3134
        %v3151 = vld [vmem:[%s1750] sm:$0xff]
        %v3152 = vld [vmem:[%s1750 + $0x8] sm:$0xff]
        %v3153 = vmul.f32 %v3143, %v3151
        %v3154 = vmul.f32 %v3144, %v3152
        %v3155 = vmul.f32 %v3145, %v3151
        %v3156 = vmul.f32 %v3146, %v3152
        %v3157 = vmul.f32 %v3147, %v3151
        %v3158 = vmul.f32 %v3148, %v3152
        %v3159 = vmul.f32 %v3149, %v3151
        %v3160 = vmul.f32 %v3150, %v3152
        %v3161 = vadd.f32 %v3071, %v3153
        %v3162 = vadd.f32 %v3072, %v3154
        %v3163 = vadd.f32 %v3073, %v3155
        %v3164 = vadd.f32 %v3074, %v3156
        %v3165 = vadd.f32 %v3075, %v3157
        %v3166 = vadd.f32 %v3076, %v3158
        %v3167 = vadd.f32 %v3077, %v3159
        %v3168 = vadd.f32 %v3078, %v3160
        %3177 = vrot.lane.b32.xlu0 %v3161, 1
        %v3178 = vpop.permute.xlu0 %3177
        %3179 = vrot.lane.b32.xlu0 %v3162, 1
        %v3180 = vpop.permute.xlu0 %3179
        %3181 = vrot.lane.b32.xlu0 %v3163, 1
        %v3182 = vpop.permute.xlu0 %3181
        %3183 = vrot.lane.b32.xlu0 %v3164, 1
        %v3184 = vpop.permute.xlu0 %3183
        %3185 = vrot.lane.b32.xlu0 %v3165, 1
        %v3186 = vpop.permute.xlu0 %3185
        %3187 = vrot.lane.b32.xlu0 %v3166, 1
        %v3188 = vpop.permute.xlu0 %3187
        %3189 = vrot.lane.b32.xlu0 %v3167, 1
        %v3190 = vpop.permute.xlu0 %3189
        %3191 = vrot.lane.b32.xlu0 %v3168, 1
        %v3192 = vpop.permute.xlu0 %3191
        %v3201 = vsel %vm224, %v3161, %v3178
        %v3202 = vsel %vm224, %v3162, %v3180
        %v3203 = vsel %vm224, %v3163, %v3182
        %v3204 = vsel %vm224, %v3164, %v3184
        %v3205 = vsel %vm224, %v3165, %v3186
        %v3206 = vsel %vm224, %v3166, %v3188
        %v3207 = vsel %vm224, %v3167, %v3190
        %v3208 = vsel %vm224, %v3168, %v3192
        %v3209 = vmul.f32 %v3201, %v2185
        %v3210 = vmul.f32 %v3202, %v2186
        %v3211 = vmul.f32 %v3203, %v2185
        %v3212 = vmul.f32 %v3204, %v2186
        %v3213 = vmul.f32 %v3205, %v2185
        %v3214 = vmul.f32 %v3206, %v2186
        %v3215 = vmul.f32 %v3207, %v2185
        %v3216 = vmul.f32 %v3208, %v2186
        %3225 = vrot.lane.b32.xlu0 %v3201, 1
        %v3226 = vpop.permute.xlu0 %3225
        %3227 = vrot.lane.b32.xlu0 %v3202, 1
        %v3228 = vpop.permute.xlu0 %3227
        %3229 = vrot.lane.b32.xlu0 %v3203, 1
        %v3230 = vpop.permute.xlu0 %3229
        %3231 = vrot.lane.b32.xlu0 %v3204, 1
        %v3232 = vpop.permute.xlu0 %3231
        %3233 = vrot.lane.b32.xlu0 %v3205, 1
        %v3234 = vpop.permute.xlu0 %3233
        %3235 = vrot.lane.b32.xlu0 %v3206, 1
        %v3236 = vpop.permute.xlu0 %3235
        %3237 = vrot.lane.b32.xlu0 %v3207, 1
        %v3238 = vpop.permute.xlu0 %3237
        %3239 = vrot.lane.b32.xlu0 %v3208, 1
        %v3240 = vpop.permute.xlu0 %3239
        %v3249 = vsel %vm224, %v3161, %v3226
        %v3250 = vsel %vm224, %v3162, %v3228
        %v3251 = vsel %vm224, %v3163, %v3230
        %v3252 = vsel %vm224, %v3164, %v3232
        %v3253 = vsel %vm224, %v3165, %v3234
        %v3254 = vsel %vm224, %v3166, %v3236
        %v3255 = vsel %vm224, %v3167, %v3238
        %v3256 = vsel %vm224, %v3168, %v3240
        %v3257 = vmul.f32 %v3249, %v2235
        %v3258 = vmul.f32 %v3250, %v2236
        %v3259 = vmul.f32 %v3251, %v2235
        %v3260 = vmul.f32 %v3252, %v2236
        %v3261 = vmul.f32 %v3253, %v2235
        %v3262 = vmul.f32 %v3254, %v2236
        %v3263 = vmul.f32 %v3255, %v2235
        %v3264 = vmul.f32 %v3256, %v2236
        %v3265 = vadd.f32 %v3209, %v3257
        %v3266 = vadd.f32 %v3210, %v3258
        %v3267 = vadd.f32 %v3211, %v3259
        %v3268 = vadd.f32 %v3212, %v3260
        %v3269 = vadd.f32 %v3213, %v3261
        %v3270 = vadd.f32 %v3214, %v3262
        %v3271 = vadd.f32 %v3215, %v3263
        %v3272 = vadd.f32 %v3216, %v3264
        %3273 = vrot.lane.b32.xlu0 %v3161, 127
        %v3274 = vpop.permute.xlu0 %3273
        %3275 = vrot.lane.b32.xlu0 %v3162, 127
        %v3276 = vpop.permute.xlu0 %3275
        %3277 = vrot.lane.b32.xlu0 %v3163, 127
        %v3278 = vpop.permute.xlu0 %3277
        %3279 = vrot.lane.b32.xlu0 %v3164, 127
        %v3280 = vpop.permute.xlu0 %3279
        %3281 = vrot.lane.b32.xlu0 %v3165, 127
        %v3282 = vpop.permute.xlu0 %3281
        %3283 = vrot.lane.b32.xlu0 %v3166, 127
        %v3284 = vpop.permute.xlu0 %3283
        %3285 = vrot.lane.b32.xlu0 %v3167, 127
        %v3286 = vpop.permute.xlu0 %3285
        %3287 = vrot.lane.b32.xlu0 %v3168, 127
        %v3288 = vpop.permute.xlu0 %3287
        %v3297 = vsel %vm222, %v3161, %v3274
        %v3298 = vsel %vm222, %v3162, %v3276
        %v3299 = vsel %vm222, %v3163, %v3278
        %v3300 = vsel %vm222, %v3164, %v3280
        %v3301 = vsel %vm222, %v3165, %v3282
        %v3302 = vsel %vm222, %v3166, %v3284
        %v3303 = vsel %vm222, %v3167, %v3286
        %v3304 = vsel %vm222, %v3168, %v3288
        %v3305 = vmul.f32 %v3297, %v2285
        %v3306 = vmul.f32 %v3298, %v2286
        %v3307 = vmul.f32 %v3299, %v2285
        %v3308 = vmul.f32 %v3300, %v2286
        %v3309 = vmul.f32 %v3301, %v2285
        %v3310 = vmul.f32 %v3302, %v2286
        %v3311 = vmul.f32 %v3303, %v2285
        %v3312 = vmul.f32 %v3304, %v2286
        %v3313 = vadd.f32 %v3265, %v3305
        %v3314 = vadd.f32 %v3266, %v3306
        %v3315 = vadd.f32 %v3267, %v3307
        %v3316 = vadd.f32 %v3268, %v3308
        %v3317 = vadd.f32 %v3269, %v3309
        %v3318 = vadd.f32 %v3270, %v3310
        %v3319 = vadd.f32 %v3271, %v3311
        %v3320 = vadd.f32 %v3272, %v3312
        %3329 = vrot.lane.b32.xlu0 %v3297, 127
        %v3330 = vpop.permute.xlu0 %3329
        %3331 = vrot.lane.b32.xlu0 %v3298, 127
        %v3332 = vpop.permute.xlu0 %3331
        %3333 = vrot.lane.b32.xlu0 %v3299, 127
        %v3334 = vpop.permute.xlu0 %3333
        %3335 = vrot.lane.b32.xlu0 %v3300, 127
        %v3336 = vpop.permute.xlu0 %3335
        %3337 = vrot.lane.b32.xlu0 %v3301, 127
        %v3338 = vpop.permute.xlu0 %3337
        %3339 = vrot.lane.b32.xlu0 %v3302, 127
        %v3340 = vpop.permute.xlu0 %3339
        %3341 = vrot.lane.b32.xlu0 %v3303, 127
        %v3342 = vpop.permute.xlu0 %3341
        %3343 = vrot.lane.b32.xlu0 %v3304, 127
        %v3344 = vpop.permute.xlu0 %3343
        %v3353 = vsel %vm222, %v3161, %v3330
        %v3354 = vsel %vm222, %v3162, %v3332
        %v3355 = vsel %vm222, %v3163, %v3334
        %v3356 = vsel %vm222, %v3164, %v3336
        %v3357 = vsel %vm222, %v3165, %v3338
        %v3358 = vsel %vm222, %v3166, %v3340
        %v3359 = vsel %vm222, %v3167, %v3342
        %v3360 = vsel %vm222, %v3168, %v3344
        %v3361 = vmul.f32 %v3353, %v2343
        %v3362 = vmul.f32 %v3354, %v2344
        %v3363 = vmul.f32 %v3355, %v2343
        %v3364 = vmul.f32 %v3356, %v2344
        %v3365 = vmul.f32 %v3357, %v2343
        %v3366 = vmul.f32 %v3358, %v2344
        %v3367 = vmul.f32 %v3359, %v2343
        %v3368 = vmul.f32 %v3360, %v2344
        %v3369 = vadd.f32 %v3313, %v3361
        %v3370 = vadd.f32 %v3314, %v3362
        %v3371 = vadd.f32 %v3315, %v3363
        %v3372 = vadd.f32 %v3316, %v3364
        %v3373 = vadd.f32 %v3317, %v3365
        %v3374 = vadd.f32 %v3318, %v3366
        %v3375 = vadd.f32 %v3319, %v3367
        %v3376 = vadd.f32 %v3320, %v3368
        %v3377 = vrot.slane %v3162, 7
        %v3378 = vrot.slane %v3164, 7
        %v3379 = vrot.slane %v3166, 7
        %v3380 = vrot.slane %v3168, 7
        %v3385 = vrot.slane %v3161, 7
        %v3386 = vsel %vm463, %v3385, %v3377
        %v3387 = vrot.slane %v3163, 7
        %v3388 = vsel %vm463, %v3387, %v3378
        %v3389 = vrot.slane %v3165, 7
        %v3390 = vsel %vm463, %v3389, %v3379
        %v3391 = vrot.slane %v3167, 7
        %v3392 = vsel %vm463, %v3391, %v3380
        %v3401 = vsel %vm463, %v3377, %v3385
        %v3402 = vsel %vm463, %v3378, %v3387
        %v3403 = vsel %vm463, %v3379, %v3389
        %v3404 = vsel %vm463, %v3380, %v3391
        %v3405 = vsel %vm219, %v3161, %v3401
        %v3406 = vsel %vm220, %v3162, %v3386
        %v3407 = vsel %vm219, %v3163, %v3402
        %v3408 = vsel %vm220, %v3164, %v3388
        %v3409 = vsel %vm219, %v3165, %v3403
        %v3410 = vsel %vm220, %v3166, %v3390
        %v3411 = vsel %vm219, %v3167, %v3404
        %v3412 = vsel %vm220, %v3168, %v3392
        %v3413 = vmul.f32 %v3405, %v2397
        %v3414 = vmul.f32 %v3406, %v2398
        %v3415 = vmul.f32 %v3407, %v2397
        %v3416 = vmul.f32 %v3408, %v2398
        %v3417 = vmul.f32 %v3409, %v2397
        %v3418 = vmul.f32 %v3410, %v2398
        %v3419 = vmul.f32 %v3411, %v2397
        %v3420 = vmul.f32 %v3412, %v2398
        %v3421 = vadd.f32 %v3369, %v3413
        %v3422 = vadd.f32 %v3370, %v3414
        %v3423 = vadd.f32 %v3371, %v3415
        %v3424 = vadd.f32 %v3372, %v3416
        %v3425 = vadd.f32 %v3373, %v3417
        %v3426 = vadd.f32 %v3374, %v3418
        %v3427 = vadd.f32 %v3375, %v3419
        %v3428 = vadd.f32 %v3376, %v3420
        %3437 = vrot.lane.b32.xlu0 %v3405, 1
        %v3438 = vpop.permute.xlu0 %3437
        %3439 = vrot.lane.b32.xlu0 %v3406, 1
        %v3440 = vpop.permute.xlu0 %3439
        %3441 = vrot.lane.b32.xlu0 %v3407, 1
        %v3442 = vpop.permute.xlu0 %3441
        %3443 = vrot.lane.b32.xlu0 %v3408, 1
        %v3444 = vpop.permute.xlu0 %3443
        %3445 = vrot.lane.b32.xlu0 %v3409, 1
        %v3446 = vpop.permute.xlu0 %3445
        %3447 = vrot.lane.b32.xlu0 %v3410, 1
        %v3448 = vpop.permute.xlu0 %3447
        %3449 = vrot.lane.b32.xlu0 %v3411, 1
        %v3450 = vpop.permute.xlu0 %3449
        %3451 = vrot.lane.b32.xlu0 %v3412, 1
        %v3452 = vpop.permute.xlu0 %3451
        %v3461 = vsel %vm224, %v3405, %v3438
        %v3462 = vsel %vm224, %v3406, %v3440
        %v3463 = vsel %vm224, %v3407, %v3442
        %v3464 = vsel %vm224, %v3408, %v3444
        %v3465 = vsel %vm224, %v3409, %v3446
        %v3466 = vsel %vm224, %v3410, %v3448
        %v3467 = vsel %vm224, %v3411, %v3450
        %v3468 = vsel %vm224, %v3412, %v3452
        %v3469 = vmul.f32 %v3461, %v2455
        %v3470 = vmul.f32 %v3462, %v2456
        %v3471 = vmul.f32 %v3463, %v2455
        %v3472 = vmul.f32 %v3464, %v2456
        %v3473 = vmul.f32 %v3465, %v2455
        %v3474 = vmul.f32 %v3466, %v2456
        %v3475 = vmul.f32 %v3467, %v2455
        %v3476 = vmul.f32 %v3468, %v2456
        %v3477 = vadd.f32 %v3421, %v3469
        %v3478 = vadd.f32 %v3422, %v3470
        %v3479 = vadd.f32 %v3423, %v3471
        %v3480 = vadd.f32 %v3424, %v3472
        %v3481 = vadd.f32 %v3425, %v3473
        %v3482 = vadd.f32 %v3426, %v3474
        %v3483 = vadd.f32 %v3427, %v3475
        %v3484 = vadd.f32 %v3428, %v3476
        %3485 = vrot.lane.b32.xlu0 %v3405, 127
        %v3486 = vpop.permute.xlu0 %3485
        %3487 = vrot.lane.b32.xlu0 %v3406, 127
        %v3488 = vpop.permute.xlu0 %3487
        %3489 = vrot.lane.b32.xlu0 %v3407, 127
        %v3490 = vpop.permute.xlu0 %3489
        %3491 = vrot.lane.b32.xlu0 %v3408, 127
        %v3492 = vpop.permute.xlu0 %3491
        %3493 = vrot.lane.b32.xlu0 %v3409, 127
        %v3494 = vpop.permute.xlu0 %3493
        %3495 = vrot.lane.b32.xlu0 %v3410, 127
        %v3496 = vpop.permute.xlu0 %3495
        %3497 = vrot.lane.b32.xlu0 %v3411, 127
        %v3498 = vpop.permute.xlu0 %3497
        %3499 = vrot.lane.b32.xlu0 %v3412, 127
        %v3500 = vpop.permute.xlu0 %3499
        %v3509 = vsel %vm222, %v3405, %v3486
        %v3510 = vsel %vm222, %v3406, %v3488
        %v3511 = vsel %vm222, %v3407, %v3490
        %v3512 = vsel %vm222, %v3408, %v3492
        %v3513 = vsel %vm222, %v3409, %v3494
        %v3514 = vsel %vm222, %v3410, %v3496
        %v3515 = vsel %vm222, %v3411, %v3498
        %v3516 = vsel %vm222, %v3412, %v3500
        %v3517 = vmul.f32 %v3509, %v2505
        %v3518 = vmul.f32 %v3510, %v2506
        %v3519 = vmul.f32 %v3511, %v2505
        %v3520 = vmul.f32 %v3512, %v2506
        %v3521 = vmul.f32 %v3513, %v2505
        %v3522 = vmul.f32 %v3514, %v2506
        %v3523 = vmul.f32 %v3515, %v2505
        %v3524 = vmul.f32 %v3516, %v2506
        %v3525 = vadd.f32 %v3477, %v3517
        %v3526 = vadd.f32 %v3478, %v3518
        %v3527 = vadd.f32 %v3479, %v3519
        %v3528 = vadd.f32 %v3480, %v3520
        %v3529 = vadd.f32 %v3481, %v3521
        %v3530 = vadd.f32 %v3482, %v3522
        %v3531 = vadd.f32 %v3483, %v3523
        %v3532 = vadd.f32 %v3484, %v3524
        %v3533 = vrot.slane %v3406, 7
        %v3534 = vrot.slane %v3408, 7
        %v3535 = vrot.slane %v3410, 7
        %v3536 = vrot.slane %v3412, 7
        %v3541 = vrot.slane %v3405, 7
        %v3542 = vsel %vm463, %v3541, %v3533
        %v3543 = vrot.slane %v3407, 7
        %v3544 = vsel %vm463, %v3543, %v3534
        %v3545 = vrot.slane %v3409, 7
        %v3546 = vsel %vm463, %v3545, %v3535
        %v3547 = vrot.slane %v3411, 7
        %v3548 = vsel %vm463, %v3547, %v3536
        %v3557 = vsel %vm463, %v3533, %v3541
        %v3558 = vsel %vm463, %v3534, %v3543
        %v3559 = vsel %vm463, %v3535, %v3545
        %v3560 = vsel %vm463, %v3536, %v3547
        %v3561 = vsel %vm219, %v3161, %v3557
        %v3562 = vsel %vm220, %v3162, %v3542
        %v3563 = vsel %vm219, %v3163, %v3558
        %v3564 = vsel %vm220, %v3164, %v3544
        %v3565 = vsel %vm219, %v3165, %v3559
        %v3566 = vsel %vm220, %v3166, %v3546
        %v3567 = vsel %vm219, %v3167, %v3560
        %v3568 = vsel %vm220, %v3168, %v3548
        %v3569 = vmul.f32 %v3561, %v2559
        %v3570 = vmul.f32 %v3562, %v2560
        %v3571 = vmul.f32 %v3563, %v2559
        %v3572 = vmul.f32 %v3564, %v2560
        %v3573 = vmul.f32 %v3565, %v2559
        %v3574 = vmul.f32 %v3566, %v2560
        %v3575 = vmul.f32 %v3567, %v2559
        %v3576 = vmul.f32 %v3568, %v2560
        %v3577 = vadd.f32 %v3525, %v3569
        %v3578 = vadd.f32 %v3526, %v3570
        %v3579 = vadd.f32 %v3527, %v3571
        %v3580 = vadd.f32 %v3528, %v3572
        %v3581 = vadd.f32 %v3529, %v3573
        %v3582 = vadd.f32 %v3530, %v3574
        %v3583 = vadd.f32 %v3531, %v3575
        %v3584 = vadd.f32 %v3532, %v3576
        %3593 = vrot.lane.b32.xlu0 %v3561, 1
        %v3594 = vpop.permute.xlu0 %3593
        %3595 = vrot.lane.b32.xlu0 %v3562, 1
        %v3596 = vpop.permute.xlu0 %3595
        %3597 = vrot.lane.b32.xlu0 %v3563, 1
        %v3598 = vpop.permute.xlu0 %3597
        %3599 = vrot.lane.b32.xlu0 %v3564, 1
        %v3600 = vpop.permute.xlu0 %3599
        %3601 = vrot.lane.b32.xlu0 %v3565, 1
        %v3602 = vpop.permute.xlu0 %3601
        %3603 = vrot.lane.b32.xlu0 %v3566, 1
        %v3604 = vpop.permute.xlu0 %3603
        %3605 = vrot.lane.b32.xlu0 %v3567, 1
        %v3606 = vpop.permute.xlu0 %3605
        %3607 = vrot.lane.b32.xlu0 %v3568, 1
        %v3608 = vpop.permute.xlu0 %3607
        %v3617 = vsel %vm224, %v3561, %v3594
        %v3618 = vsel %vm224, %v3562, %v3596
        %v3619 = vsel %vm224, %v3563, %v3598
        %v3620 = vsel %vm224, %v3564, %v3600
        %v3621 = vsel %vm224, %v3565, %v3602
        %v3622 = vsel %vm224, %v3566, %v3604
        %v3623 = vsel %vm224, %v3567, %v3606
        %v3624 = vsel %vm224, %v3568, %v3608
        %3633 = vrot.lane.b32.xlu0 %v3617, 1
        %v3634 = vpop.permute.xlu0 %3633
        %3635 = vrot.lane.b32.xlu0 %v3618, 1
        %v3636 = vpop.permute.xlu0 %3635
        %3637 = vrot.lane.b32.xlu0 %v3619, 1
        %v3638 = vpop.permute.xlu0 %3637
        %3639 = vrot.lane.b32.xlu0 %v3620, 1
        %v3640 = vpop.permute.xlu0 %3639
        %3641 = vrot.lane.b32.xlu0 %v3621, 1
        %v3642 = vpop.permute.xlu0 %3641
        %3643 = vrot.lane.b32.xlu0 %v3622, 1
        %v3644 = vpop.permute.xlu0 %3643
        %3645 = vrot.lane.b32.xlu0 %v3623, 1
        %v3646 = vpop.permute.xlu0 %3645
        %3647 = vrot.lane.b32.xlu0 %v3624, 1
        %v3648 = vpop.permute.xlu0 %3647
        %v3657 = vsel %vm224, %v3561, %v3634
        %v3658 = vsel %vm224, %v3562, %v3636
        %v3659 = vsel %vm224, %v3563, %v3638
        %v3660 = vsel %vm224, %v3564, %v3640
        %v3661 = vsel %vm224, %v3565, %v3642
        %v3662 = vsel %vm224, %v3566, %v3644
        %v3663 = vsel %vm224, %v3567, %v3646
        %v3664 = vsel %vm224, %v3568, %v3648
        %v3665 = vmul.f32 %v3657, %v2657
        %v3666 = vmul.f32 %v3658, %v2658
        %v3667 = vmul.f32 %v3659, %v2657
        %v3668 = vmul.f32 %v3660, %v2658
        %v3669 = vmul.f32 %v3661, %v2657
        %v3670 = vmul.f32 %v3662, %v2658
        %v3671 = vmul.f32 %v3663, %v2657
        %v3672 = vmul.f32 %v3664, %v2658
        %v3673 = vadd.f32 %v3577, %v3665
        %v3674 = vadd.f32 %v3578, %v3666
        %v3675 = vadd.f32 %v3579, %v3667
        %v3676 = vadd.f32 %v3580, %v3668
        %v3677 = vadd.f32 %v3581, %v3669
        %v3678 = vadd.f32 %v3582, %v3670
        %v3679 = vadd.f32 %v3583, %v3671
        %v3680 = vadd.f32 %v3584, %v3672
        %3681 = vrot.lane.b32.xlu0 %v3561, 127
        %v3682 = vpop.permute.xlu0 %3681
        %3683 = vrot.lane.b32.xlu0 %v3562, 127
        %v3684 = vpop.permute.xlu0 %3683
        %3685 = vrot.lane.b32.xlu0 %v3563, 127
        %v3686 = vpop.permute.xlu0 %3685
        %3687 = vrot.lane.b32.xlu0 %v3564, 127
        %v3688 = vpop.permute.xlu0 %3687
        %3689 = vrot.lane.b32.xlu0 %v3565, 127
        %v3690 = vpop.permute.xlu0 %3689
        %3691 = vrot.lane.b32.xlu0 %v3566, 127
        %v3692 = vpop.permute.xlu0 %3691
        %3693 = vrot.lane.b32.xlu0 %v3567, 127
        %v3694 = vpop.permute.xlu0 %3693
        %3695 = vrot.lane.b32.xlu0 %v3568, 127
        %v3696 = vpop.permute.xlu0 %3695
        %v3705 = vsel %vm222, %v3561, %v3682
        %v3706 = vsel %vm222, %v3562, %v3684
        %v3707 = vsel %vm222, %v3563, %v3686
        %v3708 = vsel %vm222, %v3564, %v3688
        %v3709 = vsel %vm222, %v3565, %v3690
        %v3710 = vsel %vm222, %v3566, %v3692
        %v3711 = vsel %vm222, %v3567, %v3694
        %v3712 = vsel %vm222, %v3568, %v3696
        %3721 = vrot.lane.b32.xlu0 %v3705, 127
        %v3722 = vpop.permute.xlu0 %3721
        %3723 = vrot.lane.b32.xlu0 %v3706, 127
        %v3724 = vpop.permute.xlu0 %3723
        %3725 = vrot.lane.b32.xlu0 %v3707, 127
        %v3726 = vpop.permute.xlu0 %3725
        %3727 = vrot.lane.b32.xlu0 %v3708, 127
        %v3728 = vpop.permute.xlu0 %3727
        %3729 = vrot.lane.b32.xlu0 %v3709, 127
        %v3730 = vpop.permute.xlu0 %3729
        %3731 = vrot.lane.b32.xlu0 %v3710, 127
        %v3732 = vpop.permute.xlu0 %3731
        %3733 = vrot.lane.b32.xlu0 %v3711, 127
        %v3734 = vpop.permute.xlu0 %3733
        %3735 = vrot.lane.b32.xlu0 %v3712, 127
        %v3736 = vpop.permute.xlu0 %3735
        %v3745 = vsel %vm222, %v3561, %v3722
        %v3746 = vsel %vm222, %v3562, %v3724
        %v3747 = vsel %vm222, %v3563, %v3726
        %v3748 = vsel %vm222, %v3564, %v3728
        %v3749 = vsel %vm222, %v3565, %v3730
        %v3750 = vsel %vm222, %v3566, %v3732
        %v3751 = vsel %vm222, %v3567, %v3734
        %v3752 = vsel %vm222, %v3568, %v3736
        %v3753 = vmul.f32 %v3745, %v2747
        %v3754 = vmul.f32 %v3746, %v2748
        %v3755 = vmul.f32 %v3747, %v2747
        %v3756 = vmul.f32 %v3748, %v2748
        %v3757 = vmul.f32 %v3749, %v2747
        %v3758 = vmul.f32 %v3750, %v2748
        %v3759 = vmul.f32 %v3751, %v2747
        %v3760 = vmul.f32 %v3752, %v2748
        %v3761 = vadd.f32 %v3673, %v3753
        %v3762 = vadd.f32 %v3674, %v3754
        %v3763 = vadd.f32 %v3675, %v3755
        %v3764 = vadd.f32 %v3676, %v3756
        %v3765 = vadd.f32 %v3677, %v3757
        %v3766 = vadd.f32 %v3678, %v3758
        %v3767 = vadd.f32 %v3679, %v3759
        %v3768 = vadd.f32 %v3680, %v3760
        %v3769 = vrot.slane %v3161, 1
        %v3770 = vrot.slane %v3162, 1
        %v3771 = vsel %vm865, %v3769, %v3770
        %v3772 = vrot.slane %v3163, 1
        %v3773 = vrot.slane %v3164, 1
        %v3774 = vsel %vm865, %v3772, %v3773
        %v3775 = vrot.slane %v3165, 1
        %v3776 = vrot.slane %v3166, 1
        %v3777 = vsel %vm865, %v3775, %v3776
        %v3778 = vrot.slane %v3167, 1
        %v3779 = vrot.slane %v3168, 1
        %v3780 = vsel %vm865, %v3778, %v3779
        %v3793 = vsel %vm865, %v3770, %v3769
        %v3794 = vsel %vm865, %v3773, %v3772
        %v3795 = vsel %vm865, %v3776, %v3775
        %v3796 = vsel %vm865, %v3779, %v3778
        %v3797 = vsel %vm215, %v3161, %v3771
        %v3798 = vsel %vm216, %v3162, %v3793
        %v3799 = vsel %vm215, %v3163, %v3774
        %v3800 = vsel %vm216, %v3164, %v3794
        %v3801 = vsel %vm215, %v3165, %v3777
        %v3802 = vsel %vm216, %v3166, %v3795
        %v3803 = vsel %vm215, %v3167, %v3780
        %v3804 = vsel %vm216, %v3168, %v3796
        %v3805 = vmul.f32 %v3797, %v2801
        %v3806 = vmul.f32 %v3798, %v2802
        %v3807 = vmul.f32 %v3799, %v2801
        %v3808 = vmul.f32 %v3800, %v2802
        %v3809 = vmul.f32 %v3801, %v2801
        %v3810 = vmul.f32 %v3802, %v2802
        %v3811 = vmul.f32 %v3803, %v2801
        %v3812 = vmul.f32 %v3804, %v2802
        %v3813 = vadd.f32 %v3761, %v3805
        %v3814 = vadd.f32 %v3762, %v3806
        %v3815 = vadd.f32 %v3763, %v3807
        %v3816 = vadd.f32 %v3764, %v3808
        %v3817 = vadd.f32 %v3765, %v3809
        %v3818 = vadd.f32 %v3766, %v3810
        %v3819 = vadd.f32 %v3767, %v3811
        %v3820 = vadd.f32 %v3768, %v3812
        %3829 = vrot.lane.b32.xlu0 %v3797, 1
        %v3830 = vpop.permute.xlu0 %3829
        %3831 = vrot.lane.b32.xlu0 %v3798, 1
        %v3832 = vpop.permute.xlu0 %3831
        %3833 = vrot.lane.b32.xlu0 %v3799, 1
        %v3834 = vpop.permute.xlu0 %3833
        %3835 = vrot.lane.b32.xlu0 %v3800, 1
        %v3836 = vpop.permute.xlu0 %3835
        %3837 = vrot.lane.b32.xlu0 %v3801, 1
        %v3838 = vpop.permute.xlu0 %3837
        %3839 = vrot.lane.b32.xlu0 %v3802, 1
        %v3840 = vpop.permute.xlu0 %3839
        %3841 = vrot.lane.b32.xlu0 %v3803, 1
        %v3842 = vpop.permute.xlu0 %3841
        %3843 = vrot.lane.b32.xlu0 %v3804, 1
        %v3844 = vpop.permute.xlu0 %3843
        %v3853 = vsel %vm224, %v3797, %v3830
        %v3854 = vsel %vm224, %v3798, %v3832
        %v3855 = vsel %vm224, %v3799, %v3834
        %v3856 = vsel %vm224, %v3800, %v3836
        %v3857 = vsel %vm224, %v3801, %v3838
        %v3858 = vsel %vm224, %v3802, %v3840
        %v3859 = vsel %vm224, %v3803, %v3842
        %v3860 = vsel %vm224, %v3804, %v3844
        %v3861 = vmul.f32 %v3853, %v2859
        %v3862 = vmul.f32 %v3854, %v2860
        %v3863 = vmul.f32 %v3855, %v2859
        %v3864 = vmul.f32 %v3856, %v2860
        %v3865 = vmul.f32 %v3857, %v2859
        %v3866 = vmul.f32 %v3858, %v2860
        %v3867 = vmul.f32 %v3859, %v2859
        %v3868 = vmul.f32 %v3860, %v2860
        %v3869 = vadd.f32 %v3813, %v3861
        %v3870 = vadd.f32 %v3814, %v3862
        %v3871 = vadd.f32 %v3815, %v3863
        %v3872 = vadd.f32 %v3816, %v3864
        %v3873 = vadd.f32 %v3817, %v3865
        %v3874 = vadd.f32 %v3818, %v3866
        %v3875 = vadd.f32 %v3819, %v3867
        %v3876 = vadd.f32 %v3820, %v3868
        %3877 = vrot.lane.b32.xlu0 %v3797, 127
        %v3878 = vpop.permute.xlu0 %3877
        %3879 = vrot.lane.b32.xlu0 %v3798, 127
        %v3880 = vpop.permute.xlu0 %3879
        %3881 = vrot.lane.b32.xlu0 %v3799, 127
        %v3882 = vpop.permute.xlu0 %3881
        %3883 = vrot.lane.b32.xlu0 %v3800, 127
        %v3884 = vpop.permute.xlu0 %3883
        %3885 = vrot.lane.b32.xlu0 %v3801, 127
        %v3886 = vpop.permute.xlu0 %3885
        %3887 = vrot.lane.b32.xlu0 %v3802, 127
        %v3888 = vpop.permute.xlu0 %3887
        %3889 = vrot.lane.b32.xlu0 %v3803, 127
        %v3890 = vpop.permute.xlu0 %3889
        %3891 = vrot.lane.b32.xlu0 %v3804, 127
        %v3892 = vpop.permute.xlu0 %3891
        %v3901 = vsel %vm222, %v3797, %v3878
        %v3902 = vsel %vm222, %v3798, %v3880
        %v3903 = vsel %vm222, %v3799, %v3882
        %v3904 = vsel %vm222, %v3800, %v3884
        %v3905 = vsel %vm222, %v3801, %v3886
        %v3906 = vsel %vm222, %v3802, %v3888
        %v3907 = vsel %vm222, %v3803, %v3890
        %v3908 = vsel %vm222, %v3804, %v3892
        %v3909 = vmul.f32 %v3901, %v2909
        %v3910 = vmul.f32 %v3902, %v2910
        %v3911 = vmul.f32 %v3903, %v2909
        %v3912 = vmul.f32 %v3904, %v2910
        %v3913 = vmul.f32 %v3905, %v2909
        %v3914 = vmul.f32 %v3906, %v2910
        %v3915 = vmul.f32 %v3907, %v2909
        %v3916 = vmul.f32 %v3908, %v2910
        %v3917 = vadd.f32 %v3869, %v3909
        %v3918 = vadd.f32 %v3870, %v3910
        %v3919 = vadd.f32 %v3871, %v3911
        %v3920 = vadd.f32 %v3872, %v3912
        %v3921 = vadd.f32 %v3873, %v3913
        %v3922 = vadd.f32 %v3874, %v3914
        %v3923 = vadd.f32 %v3875, %v3915
        %v3924 = vadd.f32 %v3876, %v3916
        %v3925 = vrot.slane %v3797, 1
        %v3926 = vrot.slane %v3798, 1
        %v3927 = vsel %vm865, %v3925, %v3926
        %v3928 = vrot.slane %v3799, 1
        %v3929 = vrot.slane %v3800, 1
        %v3930 = vsel %vm865, %v3928, %v3929
        %v3931 = vrot.slane %v3801, 1
        %v3932 = vrot.slane %v3802, 1
        %v3933 = vsel %vm865, %v3931, %v3932
        %v3934 = vrot.slane %v3803, 1
        %v3935 = vrot.slane %v3804, 1
        %v3936 = vsel %vm865, %v3934, %v3935
        %v3949 = vsel %vm865, %v3926, %v3925
        %v3950 = vsel %vm865, %v3929, %v3928
        %v3951 = vsel %vm865, %v3932, %v3931
        %v3952 = vsel %vm865, %v3935, %v3934
        %v3953 = vsel %vm215, %v3161, %v3927
        %v3954 = vsel %vm216, %v3162, %v3949
        %v3955 = vsel %vm215, %v3163, %v3930
        %v3956 = vsel %vm216, %v3164, %v3950
        %v3957 = vsel %vm215, %v3165, %v3933
        %v3958 = vsel %vm216, %v3166, %v3951
        %v3959 = vsel %vm215, %v3167, %v3936
        %v3960 = vsel %vm216, %v3168, %v3952
        %v3961 = vmul.f32 %v3953, %v2963
        %v3962 = vmul.f32 %v3954, %v2964
        %v3963 = vmul.f32 %v3955, %v2963
        %v3964 = vmul.f32 %v3956, %v2964
        %v3965 = vmul.f32 %v3957, %v2963
        %v3966 = vmul.f32 %v3958, %v2964
        %v3967 = vmul.f32 %v3959, %v2963
        %v3968 = vmul.f32 %v3960, %v2964
        %v3969 = vadd.f32 %v3917, %v3961
        %v3970 = vadd.f32 %v3918, %v3962
        %v3971 = vadd.f32 %v3919, %v3963
        %v3972 = vadd.f32 %v3920, %v3964
        %v3973 = vadd.f32 %v3921, %v3965
        %v3974 = vadd.f32 %v3922, %v3966
        %v3975 = vadd.f32 %v3923, %v3967
        %v3976 = vadd.f32 %v3924, %v3968
        %3985 = vrot.lane.b32.xlu0 %v3953, 1
        %v3986 = vpop.permute.xlu0 %3985
        %3987 = vrot.lane.b32.xlu0 %v3954, 1
        %v3988 = vpop.permute.xlu0 %3987
        %3989 = vrot.lane.b32.xlu0 %v3955, 1
        %v3990 = vpop.permute.xlu0 %3989
        %3991 = vrot.lane.b32.xlu0 %v3956, 1
        %v3992 = vpop.permute.xlu0 %3991
        %3993 = vrot.lane.b32.xlu0 %v3957, 1
        %v3994 = vpop.permute.xlu0 %3993
        %3995 = vrot.lane.b32.xlu0 %v3958, 1
        %v3996 = vpop.permute.xlu0 %3995
        %3997 = vrot.lane.b32.xlu0 %v3959, 1
        %v3998 = vpop.permute.xlu0 %3997
        %3999 = vrot.lane.b32.xlu0 %v3960, 1
        %v4000 = vpop.permute.xlu0 %3999
        %v4009 = vsel %vm224, %v3953, %v3986
        %v4010 = vsel %vm224, %v3954, %v3988
        %v4011 = vsel %vm224, %v3955, %v3990
        %v4012 = vsel %vm224, %v3956, %v3992
        %v4013 = vsel %vm224, %v3957, %v3994
        %v4014 = vsel %vm224, %v3958, %v3996
        %v4015 = vsel %vm224, %v3959, %v3998
        %v4016 = vsel %vm224, %v3960, %v4000
        %4025 = vrot.lane.b32.xlu0 %v4009, 1
        %v4026 = vpop.permute.xlu0 %4025
        %4027 = vrot.lane.b32.xlu0 %v4010, 1
        %v4028 = vpop.permute.xlu0 %4027
        %4029 = vrot.lane.b32.xlu0 %v4011, 1
        %v4030 = vpop.permute.xlu0 %4029
        %4031 = vrot.lane.b32.xlu0 %v4012, 1
        %v4032 = vpop.permute.xlu0 %4031
        %4033 = vrot.lane.b32.xlu0 %v4013, 1
        %v4034 = vpop.permute.xlu0 %4033
        %4035 = vrot.lane.b32.xlu0 %v4014, 1
        %v4036 = vpop.permute.xlu0 %4035
        %4037 = vrot.lane.b32.xlu0 %v4015, 1
        %v4038 = vpop.permute.xlu0 %4037
        %4039 = vrot.lane.b32.xlu0 %v4016, 1
        %v4040 = vpop.permute.xlu0 %4039
        %v4049 = vsel %vm224, %v3953, %v4026
        %v4050 = vsel %vm224, %v3954, %v4028
        %v4051 = vsel %vm224, %v3955, %v4030
        %v4052 = vsel %vm224, %v3956, %v4032
        %v4053 = vsel %vm224, %v3957, %v4034
        %v4054 = vsel %vm224, %v3958, %v4036
        %v4055 = vsel %vm224, %v3959, %v4038
        %v4056 = vsel %vm224, %v3960, %v4040
        %v4057 = vmul.f32 %v4049, %v3061
        %v4058 = vmul.f32 %v4050, %v3062
        %v4059 = vmul.f32 %v4051, %v3061
        %v4060 = vmul.f32 %v4052, %v3062
        %v4061 = vmul.f32 %v4053, %v3061
        %v4062 = vmul.f32 %v4054, %v3062
        %v4063 = vmul.f32 %v4055, %v3061
        %v4064 = vmul.f32 %v4056, %v3062
        %v4065 = vadd.f32 %v3969, %v4057
        %v4066 = vadd.f32 %v3970, %v4058
        %v4067 = vadd.f32 %v3971, %v4059
        %v4068 = vadd.f32 %v3972, %v4060
        %v4069 = vadd.f32 %v3973, %v4061
        %v4070 = vadd.f32 %v3974, %v4062
        %v4071 = vadd.f32 %v3975, %v4063
        %v4072 = vadd.f32 %v3976, %v4064
        %4073 = vrot.lane.b32.xlu0 %v3953, 127
        %v4074 = vpop.permute.xlu0 %4073
        %4075 = vrot.lane.b32.xlu0 %v3954, 127
        %v4076 = vpop.permute.xlu0 %4075
        %4077 = vrot.lane.b32.xlu0 %v3955, 127
        %v4078 = vpop.permute.xlu0 %4077
        %4079 = vrot.lane.b32.xlu0 %v3956, 127
        %v4080 = vpop.permute.xlu0 %4079
        %4081 = vrot.lane.b32.xlu0 %v3957, 127
        %v4082 = vpop.permute.xlu0 %4081
        %4083 = vrot.lane.b32.xlu0 %v3958, 127
        %v4084 = vpop.permute.xlu0 %4083
        %4085 = vrot.lane.b32.xlu0 %v3959, 127
        %v4086 = vpop.permute.xlu0 %4085
        %4087 = vrot.lane.b32.xlu0 %v3960, 127
        %v4088 = vpop.permute.xlu0 %4087
        %v4097 = vsel %vm222, %v3953, %v4074
        %v4098 = vsel %vm222, %v3954, %v4076
        %v4099 = vsel %vm222, %v3955, %v4078
        %v4100 = vsel %vm222, %v3956, %v4080
        %v4101 = vsel %vm222, %v3957, %v4082
        %v4102 = vsel %vm222, %v3958, %v4084
        %v4103 = vsel %vm222, %v3959, %v4086
        %v4104 = vsel %vm222, %v3960, %v4088
        %4113 = vrot.lane.b32.xlu0 %v4097, 127
        %v4114 = vpop.permute.xlu0 %4113
        %4115 = vrot.lane.b32.xlu0 %v4098, 127
        %v4116 = vpop.permute.xlu0 %4115
        %4117 = vrot.lane.b32.xlu0 %v4099, 127
        %v4118 = vpop.permute.xlu0 %4117
        %4119 = vrot.lane.b32.xlu0 %v4100, 127
        %v4120 = vpop.permute.xlu0 %4119
        %4121 = vrot.lane.b32.xlu0 %v4101, 127
        %v4122 = vpop.permute.xlu0 %4121
        %4123 = vrot.lane.b32.xlu0 %v4102, 127
        %v4124 = vpop.permute.xlu0 %4123
        %4125 = vrot.lane.b32.xlu0 %v4103, 127
        %v4126 = vpop.permute.xlu0 %4125
        %4127 = vrot.lane.b32.xlu0 %v4104, 127
        %v4128 = vpop.permute.xlu0 %4127
        %v4137 = vsel %vm222, %v3953, %v4114
        %v4138 = vsel %vm222, %v3954, %v4116
        %v4139 = vsel %vm222, %v3955, %v4118
        %v4140 = vsel %vm222, %v3956, %v4120
        %v4141 = vsel %vm222, %v3957, %v4122
        %v4142 = vsel %vm222, %v3958, %v4124
        %v4143 = vsel %vm222, %v3959, %v4126
        %v4144 = vsel %vm222, %v3960, %v4128
        %v4145 = vmul.f32 %v4137, %v3151
        %v4146 = vmul.f32 %v4138, %v3152
        %v4147 = vmul.f32 %v4139, %v3151
        %v4148 = vmul.f32 %v4140, %v3152
        %v4149 = vmul.f32 %v4141, %v3151
        %v4150 = vmul.f32 %v4142, %v3152
        %v4151 = vmul.f32 %v4143, %v3151
        %v4152 = vmul.f32 %v4144, %v3152
        %v4153 = vadd.f32 %v4065, %v4145
        %v4154 = vadd.f32 %v4066, %v4146
        %v4155 = vadd.f32 %v4067, %v4147
        %v4156 = vadd.f32 %v4068, %v4148
        %v4157 = vadd.f32 %v4069, %v4149
        %v4158 = vadd.f32 %v4070, %v4150
        %v4159 = vadd.f32 %v4071, %v4151
        %v4160 = vadd.f32 %v4072, %v4152
        %4161 = vst [vmem:[%s201] sm:$0xff] %v4153
        %4162 = vst [vmem:[%s201 + $0x8] sm:$0xff] %v4154
        %4163 = vst [vmem:[%s201 + $0x10] sm:$0xff] %v4155
        %4164 = vst [vmem:[%s201 + $0x18] sm:$0xff] %v4156
        %4165 = vst [vmem:[%s201 + $0x20] sm:$0xff] %v4157
        %4166 = vst [vmem:[%s201 + $0x28] sm:$0xff] %v4158
        %4167 = vst [vmem:[%s201 + $0x30] sm:$0xff] %v4159
        %4168 = vst [vmem:[%s201 + $0x38] sm:$0xff] %v4160
        %s4169 = sand.u32 %s82, 1
        %s4170 = scalar_lea.sflag [#allocation6], %s4169
        %s4171 = sand.u32 %s82, 1
        %s4172 = smul.addr %s4171, 64
        %s4173 = scalar_lea.vmem [#allocation9], %s4172
        // Predicated region
        $region37: #{tpu_custom_call.1} parent=27 // pred_check
          %p4174 = pneg %p92
        $region38: #{tpu_custom_call.1} parent=27 // pred_check_branch
          %4176 = sbr.rel (%p4174) target = $region40
        $region39: #{tpu_custom_call.1} parent=27 // pred_region
          %s4178 = ssub.s32 1024, 1024
          %4179 = vsyncadd %s4170, %s4178
          %s4180 = smul.addr %s22, 8
          %s4181 = smul.addr %s4180, 128
          %s4182 = scalar_lea.hbm %s2, %s4181
          %s4183 = sshll.u32 %s4173, 4
          %s4184 = int_to_ptr.vmem [resolvable:$true] %s4183
          %4189 = dma.vmem_to_hbm [thread:$0]  %s4184, 1024, %s4182, %s4170, 128, 128, 8
        $region40: #{tpu_custom_call.1} parent=27 // pred_fallthru
          _
      $region28: #{tpu_custom_call.1} parent=5 // pred_fallthru
        _
      %p4190 = scmp.le.s32.totalorder 2, %s17
      // Predicated region
      $region41: #{tpu_custom_call.1} parent=5 // pred_check
        %p4191 = pneg %p4190
      $region42: #{tpu_custom_call.1} parent=5 // pred_check_branch
        %4193 = sbr.rel (%p4191) target = $region44
      $region43: #{tpu_custom_call.1} parent=5 // pred_region
        %s4194 = ssub.s32 %s17, 2
        // Predicated region
        $region45: #{tpu_custom_call.1} parent=43 // pred_check
          %p4195 = pneg %p98
        $region46: #{tpu_custom_call.1} parent=43 // pred_check_branch
          %4197 = sbr.rel (%p4195) target = $region48
        $region47: #{tpu_custom_call.1} parent=43 // pred_region
          %s4198 = sand.u32 %s83, 1
          %s4199 = scalar_lea.sflag [#allocation6], %s4198
          %s4200 = sand.u32 %s83, 1
          %s4201 = smul.addr %s4200, 64
          %s4202 = scalar_lea.vmem [#allocation9], %s4201
          %4203 = dma.done %s4199, 1024
        $region48: #{tpu_custom_call.1} parent=43 // pred_fallthru
          _
      $region44: #{tpu_custom_call.1} parent=5 // pred_fallthru
        _
    $region6: #{tpu_custom_call.1} parent=1 // loop_footer
      %s21 = sadd.s32 1, %s17
    $region7: #{tpu_custom_call.1} parent=1 // loop_footer_branch
      %16 = sbr.rel target = $region3
    $region8: #{tpu_custom_call.1} parent=1 // loop_exit
      _
    %4204 = vsyncpa [#allocation5], 1
    %s4205 = scalar_lea.sflag [#allocation5], 1
    %4206 = vsyncpa %s4205, 1
    %4207 = vsyncpa [#allocation8], 1
    %s4208 = scalar_lea.sflag [#allocation8], 1
    %4209 = vsyncpa %s4208, 1
    %4210 = vsyncpa [#allocation6], 1
    %s4211 = scalar_lea.sflag [#allocation6], 1
    %4212 = vsyncpa %s4211, 1

</llo_original>
